<compile_context>
chip_gen: v7x
topology: tpu7x:2x2x1
jax: 0.10.0
libtpu: 0.0.40
codegen_flags: <defaults>
</compile_context>

<pallas_src>
import functools

import jax
import jax.numpy as jnp
from jax.experimental import pallas as pl
from jax.experimental.pallas import tpu as pltpu

LOW_K, MIDDLE_K, HIGH_K = 3, 6, 12
KW = 8                      # conv kernel width (consumes the W axis down to W-7)
BN_EPS = 1e-5

# (name, kernel_height, maxpool_height)
BRANCHES = (("low", LOW_K, 6), ("middle", MIDDLE_K, 2), ("high", HIGH_K, 1))
NUM_TAPS = sum(p for _, _, p in BRANCHES)          # 9 = total (branch, pool-offset) matmuls
ROW_STRIDE = 6                                     # = pool * stride for every branch


def _branch_hparams(k):
    # exactly what the torch __init__ computes
    stride = int(k / 2)
    pad = round(k / 4 + 0.5)
    return stride, pad


def _band_geometry():
    """Input-row band (relative to ROW_STRIDE*h_q) covering all branches / pool offsets."""
    lo, hi = 0, 0
    for _, kh, pool in BRANCHES:
        stride, pad = _branch_hparams(kh)
        assert pool * stride == ROW_STRIDE, "branches must share the pooled row stride"
        lo = min(lo, -pad)
        hi = max(hi, (pool - 1) * stride - pad + kh)
    return lo, hi - lo          # (band_lo, band_h) -> (-4, 12) for this module


def _round_up(a, b):
    return -(-a // b) * b


def _vmem_capacity_bytes():
    try:
        return int(pltpu.get_tpu_info().vmem_capacity_bytes)
    except Exception:
        return 64 << 20         # v7x per-TensorCore capacity: the conservative fallback


def _choose_tile_g(g, per_group_bytes, vmem_cap):
    """Pooled row-groups per grid step (multiple of 8 for sublane alignment)."""
    budget = max(vmem_cap // 4, 4 << 20)             # share of VMEM for the streamed tiles
    cap = max(8, (budget // (2 * max(per_group_bytes, 1))) // 8 * 8)
    cap = min(cap, 4096)
    # >= 4 grid steps (>= 2 per TensorCore under v7x megacore) whenever g allows it.
    want = max(8, _round_up(-(-g // 4), 8))
    return min(cap, want)


# ----------------------------- Pallas kernel ------------------------------ #

def _special_block_kernel(band_ref, w_ref, s_ref, out_ref, *, pools):
    """band (TILE_G, K) bf16; w (NUM_TAPS, K, out_ch*W_out) bf16; s (3, 1, out_ch*W_out) f32;
    out (3, TILE_G, out_ch*W_out) f32.

    conv + MaxPool  -> one banded MXU matmul per (branch, pool offset) sharing the band LHS,
                       running max over the pool offsets
    BN shift + ReLU -> applied once per branch after the max (monotone in the matmul result,
                       so identical to the torch conv -> BN -> ReLU -> MaxPool ordering)
    """
    band = band_ref[...]                                 # (TILE_G, K) bf16
    tap = 0
    for b, pool in enumerate(pools):
        acc = jnp.dot(band, w_ref[tap], preferred_element_type=jnp.float32)
        for p in range(1, pool):                         # static unroll (pool <= 6)
            acc = jnp.maximum(
                acc, jnp.dot(band, w_ref[tap + p], preferred_element_type=jnp.float32))
        out_ref[b] = jnp.maximum(acc + s_ref[b], 0.0).astype(out_ref.dtype)
        tap += pool


# ------------------------------ JAX wrapper -------------------------------- #

@functools.partial(jax.jit, static_argnums=(2,))
def special_block_a(x, params, out_ch):
    """Forward pass of SpecialBlockA.  x: (N, C_in, H, W) NCHW float32."""
    n, c_in, h, w = x.shape
    assert w >= KW, "input width must be >= conv kernel width"
    w_out = w - KW + 1

    hps = []
    for _, kh, pool in BRANCHES:
        stride, pad = _branch_hparams(kh)
        hps.append(((h + 2 * pad - kh) // stride + 1) // pool)
    assert len(set(hps)) == 1, "branch output heights must match for torch.cat"
    hp = hps[0]

    band_lo, band_h = _band_geometry()

    # ---- shared bf16 input row band: one (C*band_h*W) row per pooled output row group ------
    top = -band_lo
    bot = max(0, ROW_STRIDE * (hp - 1) + band_lo + band_h - h)
    xb = jnp.pad(x.astype(jnp.bfloat16), ((0, 0), (0, 0), (top, bot), (0, 0)))
    ridx = (ROW_STRIDE * jnp.arange(hp))[:, None] + jnp.arange(band_h)[None, :]  # (hp, band_h)
    band = xb[:, :, ridx, :]                                   # (N, C, hp, band_h, W)
    band = band.transpose(0, 2, 1, 3, 4).reshape(n * hp, c_in * band_h * w)
    k_dim = c_in * band_h * w                                  # = 768 at the demo sizes

    # ---- block-banded weights: kh/KW windows + BN scale folded in, one RHS per pool offset -
    nw = out_ch * w_out
    j = jnp.arange(w)[:, None] - jnp.arange(w_out)[None, :]    # w_in - w_out
    valid_j = (j >= 0) & (j < KW)
    j_c = jnp.clip(j, 0, KW - 1)

    big_ws, shifts = [], []
    for name, kh, pool in BRANCHES:
        stride, pad = _branch_hparams(kh)
        pv = params[name]
        # TODO(synk): BatchNorm is eval-mode only (running statistics folded into the weights
        # and a per-channel shift); training-mode batch statistics are not computed.
        scale = pv["gamma"] / jnp.sqrt(pv["var"] + BN_EPS)
        shift = pv["beta"] - pv["mean"] * scale
        wf = pv["w"] * scale[:, None, None, None]              # (O, C, kh, KW) f32, BN folded
        for p in range(pool):
            rowoff = p * stride - pad - band_lo                # band row of kernel row i = 0
            i_idx = jnp.arange(band_h) - rowoff
            valid_r = (i_idx >= 0) & (i_idx < kh)
            wr = jnp.where(valid_r[None, None, :, None],
                           wf[:, :, jnp.clip(i_idx, 0, kh - 1), :], 0.0)   # (O,C,band_h,KW)
            ww = jnp.where(valid_j[None, None, None, :, :],
                           wr[:, :, :, j_c], 0.0)                          # (O,C,band_h,W,W_out)
            big_ws.append(ww.transpose(1, 2, 3, 0, 4)
                          .reshape(k_dim, nw).astype(jnp.bfloat16))
        shifts.append(jnp.repeat(shift, w_out))                # (out_ch*W_out,), (o, w_out) order
    w_all = jnp.stack(big_ws, axis=0)                          # (NUM_TAPS, K, nw) bf16
    s_all = jnp.stack(shifts, axis=0)[:, None, :].astype(jnp.float32)   # (3, 1, nw)

    # ---- grid / VMEM sizing ----------------------------------------------------------------
    g = n * hp
    nw_vmem = _round_up(nw, 128)                               # lane-padded f32 output tile
    per_group = k_dim * 2 + 3 * nw_vmem * 4
    vmem_cap = _vmem_capacity_bytes()
    tile_g = _choose_tile_g(g, per_group, vmem_cap)
    g_pad = _round_up(g, tile_g)
    band = jnp.pad(band, ((0, g_pad - g), (0, 0)))

    w_bytes = NUM_TAPS * k_dim * nw * 2 + 3 * nw_vmem * 4
    vmem_limit = 2 * tile_g * per_group + 2 * w_bytes + (4 << 20)
    vmem_limit = min(max(vmem_limit, 8 << 20), max(int(0.6 * vmem_cap), 8 << 20))

    kernel = functools.partial(_special_block_kernel,
                               pools=tuple(p for _, _, p in BRANCHES))
    out3 = pl.pallas_call(
        kernel,
        out_shape=jax.ShapeDtypeStruct((len(BRANCHES), g_pad, nw), jnp.float32),
        grid=(g_pad // tile_g,),
        in_specs=[
            pl.BlockSpec((tile_g, k_dim), lambda i: (i, 0)),
            pl.BlockSpec((NUM_TAPS, k_dim, nw), lambda i: (0, 0, 0)),    # grid-resident
            pl.BlockSpec((len(BRANCHES), 1, nw), lambda i: (0, 0, 0)),   # grid-resident
        ],
        out_specs=pl.BlockSpec((len(BRANCHES), tile_g, nw), lambda i: (0, i, 0)),
        compiler_params=pltpu.CompilerParams(
            dimension_semantics=("parallel",),   # row tiles are independent -> megacore on v7x
            vmem_limit_bytes=int(vmem_limit),
        ),
    )(band, w_all, s_all)

    # rows are (n, h_q); lanes are (o, w_out); branch order [low | middle | high] = torch.cat
    out = out3[:, :g, :].reshape(len(BRANCHES), n, hp, out_ch, w_out)
    out = out.transpose(1, 0, 3, 2, 4).reshape(n, len(BRANCHES) * out_ch, hp, w_out)
    return out


# ------------------------- deterministic parameters ------------------------ #

def init_params(key, in_ch, out_ch):
    params = {}
    for name, kk, _ in BRANCHES:
        key, k_w, k_g, k_b, k_m, k_v = jax.random.split(key, 6)
        params[name] = dict(
            w=jax.random.normal(k_w, (out_ch, in_ch, kk, KW), jnp.float32) * 0.1,
            gamma=jax.random.uniform(k_g, (out_ch,), jnp.float32, 0.5, 1.5),
            beta=jax.random.normal(k_b, (out_ch,), jnp.float32) * 0.1,
            mean=jax.random.normal(k_m, (out_ch,), jnp.float32) * 0.1,
            var=jax.random.uniform(k_v, (out_ch,), jnp.float32, 0.5, 1.5),
        )
    return params


# ------------------------------ references --------------------------------- #

def reference_f32(x, params, out_ch):
    """Exact f32 semantics of the torch module (conv -> BN(eval) -> ReLU -> MaxPool, concat)."""
    outs = []
    for name, kk, pool in BRANCHES:
        stride, pad = _branch_hparams(kk)
        pv = params[name]
        y = jax.lax.conv_general_dilated(
            x, pv["w"], window_strides=(stride, 1),
            padding=((pad, pad), (0, 0)),
            dimension_numbers=("NCHW", "OIHW", "NCHW"),
            precision=jax.lax.Precision.HIGHEST)
        scale = (pv["gamma"] / jnp.sqrt(pv["var"] + BN_EPS)).reshape(1, out_ch, 1, 1)
        shift = pv["beta"].reshape(1, out_ch, 1, 1) - pv["mean"].reshape(1, out_ch, 1, 1) * scale
        y = jnp.maximum(y * scale + shift, 0.0)
        n_, c_, ho, wo = y.shape
        hp = ho // pool
        y = y[:, :, : hp * pool].reshape(n_, c_, hp, pool, wo).max(axis=3)
        outs.append(y)
    return jnp.concatenate(outs, axis=1)


def reference_bf16(x, params, out_ch):
    """Same math at the kernel's precision: bf16 inputs/weights (BN scale folded), f32 accum."""
    outs = []
    for name, kk, pool in BRANCHES:
        stride, pad = _branch_hparams(kk)
        pv = params[name]
        scale = pv["gamma"] / jnp.sqrt(pv["var"] + BN_EPS)
        shift = (pv["beta"] - pv["mean"] * scale).reshape(1, out_ch, 1, 1)
        w_folded = (pv["w"] * scale[:, None, None, None]).astype(jnp.bfloat16)
        y = jax.lax.conv_general_dilated(
            x.astype(jnp.bfloat16), w_folded, window_strides=(stride, 1),
            padding=((pad, pad), (0, 0)),
            dimension_numbers=("NCHW", "OIHW", "NCHW"),
            preferred_element_type=jnp.float32)
        y = jnp.maximum(y + shift, 0.0)
        n_, c_, ho, wo = y.shape
        hp = ho // pool
        y = y[:, :, : hp * pool].reshape(n_, c_, hp, pool, wo).max(axis=3)
        outs.append(y)
    return jnp.concatenate(outs, axis=1)


if __name__ == "__main__":
    key = jax.random.PRNGKey(0)
    k_x, k_p = jax.random.split(key)

    in_ch, out_ch = 4, 8
    n, h, w = 8, 24, 16       # H=24 -> every branch pools down to Hp=4; 4 grid steps
    x = jax.random.normal(k_x, (n, in_ch, h, w), jnp.float32)
    params = init_params(k_p, in_ch, out_ch)

    out = jax.block_until_ready(special_block_a(x, params, out_ch))

    expected_shape = (n, 3 * out_ch, 4, w - KW + 1)
    assert out.shape == expected_shape, (out.shape, expected_shape)

    # Tight check vs a numerics-matched reference (bf16 operands, f32 accumulation).
    ref_m = reference_bf16(x, params, out_ch)
    if not jnp.allclose(out, ref_m, rtol=1e-3, atol=1e-3):
        raise AssertionError(
            f"kernel vs bf16 reference mismatch, max abs err = {float(jnp.max(jnp.abs(out - ref_m)))}")

    # Loose check vs the exact f32 module semantics (difference = bf16 quantization only).
    ref_f = reference_f32(x, params, out_ch)
    if not jnp.allclose(out, ref_f, rtol=5e-2, atol=5e-2):
        raise AssertionError(
            f"kernel vs f32 reference mismatch, max abs err = {float(jnp.max(jnp.abs(out - ref_f)))}")

    print("KERNEL_OK")
</pallas_src>

<mosaic_0001>
module attributes {stable_mosaic.version = 11 : i64} {
  func.func @_special_block_kernel(%arg0: i32, %arg1: memref<8x768xbf16, #tpu.memory_space<vmem>>, %arg2: memref<9x768x72xbf16, #tpu.memory_space<vmem>>, %arg3: memref<3x1x72xf32, #tpu.memory_space<vmem>>, %arg4: memref<3x8x72xf32, #tpu.memory_space<vmem>>) attributes {dimension_semantics = [#tpu.dimension_semantics<parallel>], iteration_bounds = array<i64: 4>, scalar_prefetch = 0 : i64, scratch_operands = 0 : i64, tpu.core_type = #tpu.core_type<tc>, window_params = [{transform_indices = @transform_0, window_bounds = array<i64: 8, 768>}, {pipeline_mode = #tpu.pipeline_mode<synchronous>, transform_indices = @transform_1, window_bounds = array<i64: 9, 768, 72>}, {pipeline_mode = #tpu.pipeline_mode<synchronous>, transform_indices = @transform_2, window_bounds = array<i64: 3, 1, 72>}, {transform_indices = @transform_3, window_bounds = array<i64: 3, 8, 72>}]} {
    %c0 = arith.constant 0 : index
    %c0_0 = arith.constant 0 : index
    %0 = vector.load %arg1[%c0, %c0_0] : memref<8x768xbf16, #tpu.memory_space<vmem>>, vector<8x768xbf16>
    %c0_1 = arith.constant 0 : index
    %c0_2 = arith.constant 0 : index
    %c0_3 = arith.constant 0 : index
    %1 = vector.load %arg2[%c0_1, %c0_2, %c0_3] : memref<9x768x72xbf16, #tpu.memory_space<vmem>>, vector<1x768x72xbf16>
    %2 = vector.shape_cast %1 : vector<1x768x72xbf16> to vector<768x72xbf16>
    %cst = arith.constant dense<0.000000e+00> : vector<8x72xf32>
    %3 = tpu.matmul %0, %2, %cst {dimension_numbers = #tpu.dot_dimension_numbers<[1], [0], [0], [1], [0, 0, 1, 1], [], []>} : vector<8x768xbf16>, vector<768x72xbf16>, vector<8x72xf32> -> vector<8x72xf32>
    %c1 = arith.constant 1 : index
    %c0_4 = arith.constant 0 : index
    %c0_5 = arith.constant 0 : index
    %4 = vector.load %arg2[%c1, %c0_4, %c0_5] : memref<9x768x72xbf16, #tpu.memory_space<vmem>>, vector<1x768x72xbf16>
    %5 = vector.shape_cast %4 : vector<1x768x72xbf16> to vector<768x72xbf16>
    %cst_6 = arith.constant dense<0.000000e+00> : vector<8x72xf32>
    %6 = tpu.matmul %0, %5, %cst_6 {dimension_numbers = #tpu.dot_dimension_numbers<[1], [0], [0], [1], [0, 0, 1, 1], [], []>} : vector<8x768xbf16>, vector<768x72xbf16>, vector<8x72xf32> -> vector<8x72xf32>
    %7 = arith.maximumf %3, %6 : vector<8x72xf32>
    %c2 = arith.constant 2 : index
    %c0_7 = arith.constant 0 : index
    %c0_8 = arith.constant 0 : index
    %8 = vector.load %arg2[%c2, %c0_7, %c0_8] : memref<9x768x72xbf16, #tpu.memory_space<vmem>>, vector<1x768x72xbf16>
    %9 = vector.shape_cast %8 : vector<1x768x72xbf16> to vector<768x72xbf16>
    %cst_9 = arith.constant dense<0.000000e+00> : vector<8x72xf32>
    %10 = tpu.matmul %0, %9, %cst_9 {dimension_numbers = #tpu.dot_dimension_numbers<[1], [0], [0], [1], [0, 0, 1, 1], [], []>} : vector<8x768xbf16>, vector<768x72xbf16>, vector<8x72xf32> -> vector<8x72xf32>
    %11 = arith.maximumf %7, %10 : vector<8x72xf32>
    %c3 = arith.constant 3 : index
    %c0_10 = arith.constant 0 : index
    %c0_11 = arith.constant 0 : index
    %12 = vector.load %arg2[%c3, %c0_10, %c0_11] : memref<9x768x72xbf16, #tpu.memory_space<vmem>>, vector<1x768x72xbf16>
    %13 = vector.shape_cast %12 : vector<1x768x72xbf16> to vector<768x72xbf16>
    %cst_12 = arith.constant dense<0.000000e+00> : vector<8x72xf32>
    %14 = tpu.matmul %0, %13, %cst_12 {dimension_numbers = #tpu.dot_dimension_numbers<[1], [0], [0], [1], [0, 0, 1, 1], [], []>} : vector<8x768xbf16>, vector<768x72xbf16>, vector<8x72xf32> -> vector<8x72xf32>
    %15 = arith.maximumf %11, %14 : vector<8x72xf32>
    %c4 = arith.constant 4 : index
    %c0_13 = arith.constant 0 : index
    %c0_14 = arith.constant 0 : index
    %16 = vector.load %arg2[%c4, %c0_13, %c0_14] : memref<9x768x72xbf16, #tpu.memory_space<vmem>>, vector<1x768x72xbf16>
    %17 = vector.shape_cast %16 : vector<1x768x72xbf16> to vector<768x72xbf16>
    %cst_15 = arith.constant dense<0.000000e+00> : vector<8x72xf32>
    %18 = tpu.matmul %0, %17, %cst_15 {dimension_numbers = #tpu.dot_dimension_numbers<[1], [0], [0], [1], [0, 0, 1, 1], [], []>} : vector<8x768xbf16>, vector<768x72xbf16>, vector<8x72xf32> -> vector<8x72xf32>
    %19 = arith.maximumf %15, %18 : vector<8x72xf32>
    %c5 = arith.constant 5 : index
    %c0_16 = arith.constant 0 : index
    %c0_17 = arith.constant 0 : index
    %20 = vector.load %arg2[%c5, %c0_16, %c0_17] : memref<9x768x72xbf16, #tpu.memory_space<vmem>>, vector<1x768x72xbf16>
    %21 = vector.shape_cast %20 : vector<1x768x72xbf16> to vector<768x72xbf16>
    %cst_18 = arith.constant dense<0.000000e+00> : vector<8x72xf32>
    %22 = tpu.matmul %0, %21, %cst_18 {dimension_numbers = #tpu.dot_dimension_numbers<[1], [0], [0], [1], [0, 0, 1, 1], [], []>} : vector<8x768xbf16>, vector<768x72xbf16>, vector<8x72xf32> -> vector<8x72xf32>
    %23 = arith.maximumf %19, %22 : vector<8x72xf32>
    %c0_19 = arith.constant 0 : index
    %c0_20 = arith.constant 0 : index
    %c0_21 = arith.constant 0 : index
    %24 = vector.load %arg3[%c0_19, %c0_20, %c0_21] : memref<3x1x72xf32, #tpu.memory_space<vmem>>, vector<1x1x72xf32>
    %25 = vector.shape_cast %24 : vector<1x1x72xf32> to vector<1x72xf32>
    %26 = vector.broadcast %25 : vector<1x72xf32> to vector<8x72xf32>
    %27 = arith.addf %23, %26 : vector<8x72xf32>
    %cst_22 = arith.constant 0.000000e+00 : f32
    %28 = vector.broadcast %cst_22 : f32 to vector<8x72xf32>
    %29 = arith.maximumf %27, %28 : vector<8x72xf32>
    %c0_23 = arith.constant 0 : index
    %c0_24 = arith.constant 0 : index
    %c0_25 = arith.constant 0 : index
    %30 = vector.load %arg4[%c0_23, %c0_24, %c0_25] : memref<3x8x72xf32, #tpu.memory_space<vmem>>, vector<1x8x72xf32>
    %31 = vector.shape_cast %30 : vector<1x8x72xf32> to vector<8x72xf32>
    %32 = vector.shape_cast %29 : vector<8x72xf32> to vector<1x8x72xf32>
    tpu.vector_store %arg4[%c0_23, %c0_24, %c0_25], %32 {strides = array<i32>} : memref<3x8x72xf32, #tpu.memory_space<vmem>>, vector<1x8x72xf32>,
    %c6 = arith.constant 6 : index
    %c0_26 = arith.constant 0 : index
    %c0_27 = arith.constant 0 : index
    %33 = vector.load %arg2[%c6, %c0_26, %c0_27] : memref<9x768x72xbf16, #tpu.memory_space<vmem>>, vector<1x768x72xbf16>
    %34 = vector.shape_cast %33 : vector<1x768x72xbf16> to vector<768x72xbf16>
    %cst_28 = arith.constant dense<0.000000e+00> : vector<8x72xf32>
    %35 = tpu.matmul %0, %34, %cst_28 {dimension_numbers = #tpu.dot_dimension_numbers<[1], [0], [0], [1], [0, 0, 1, 1], [], []>} : vector<8x768xbf16>, vector<768x72xbf16>, vector<8x72xf32> -> vector<8x72xf32>
    %c7 = arith.constant 7 : index
    %c0_29 = arith.constant 0 : index
    %c0_30 = arith.constant 0 : index
    %36 = vector.load %arg2[%c7, %c0_29, %c0_30] : memref<9x768x72xbf16, #tpu.memory_space<vmem>>, vector<1x768x72xbf16>
    %37 = vector.shape_cast %36 : vector<1x768x72xbf16> to vector<768x72xbf16>
    %cst_31 = arith.constant dense<0.000000e+00> : vector<8x72xf32>
    %38 = tpu.matmul %0, %37, %cst_31 {dimension_numbers = #tpu.dot_dimension_numbers<[1], [0], [0], [1], [0, 0, 1, 1], [], []>} : vector<8x768xbf16>, vector<768x72xbf16>, vector<8x72xf32> -> vector<8x72xf32>
    %39 = arith.maximumf %35, %38 : vector<8x72xf32>
    %c1_32 = arith.constant 1 : index
    %c0_33 = arith.constant 0 : index
    %c0_34 = arith.constant 0 : index
    %40 = vector.load %arg3[%c1_32, %c0_33, %c0_34] : memref<3x1x72xf32, #tpu.memory_space<vmem>>, vector<1x1x72xf32>
    %41 = vector.shape_cast %40 : vector<1x1x72xf32> to vector<1x72xf32>
    %42 = vector.broadcast %41 : vector<1x72xf32> to vector<8x72xf32>
    %43 = arith.addf %39, %42 : vector<8x72xf32>
    %cst_35 = arith.constant 0.000000e+00 : f32
    %44 = vector.broadcast %cst_35 : f32 to vector<8x72xf32>
    %45 = arith.maximumf %43, %44 : vector<8x72xf32>
    %c1_36 = arith.constant 1 : index
    %c0_37 = arith.constant 0 : index
    %c0_38 = arith.constant 0 : index
    %46 = vector.load %arg4[%c1_36, %c0_37, %c0_38] : memref<3x8x72xf32, #tpu.memory_space<vmem>>, vector<1x8x72xf32>
    %47 = vector.shape_cast %46 : vector<1x8x72xf32> to vector<8x72xf32>
    %48 = vector.shape_cast %45 : vector<8x72xf32> to vector<1x8x72xf32>
    tpu.vector_store %arg4[%c1_36, %c0_37, %c0_38], %48 {strides = array<i32>} : memref<3x8x72xf32, #tpu.memory_space<vmem>>, vector<1x8x72xf32>,
    %c8 = arith.constant 8 : index
    %c0_39 = arith.constant 0 : index
    %c0_40 = arith.constant 0 : index
    %49 = vector.load %arg2[%c8, %c0_39, %c0_40] : memref<9x768x72xbf16, #tpu.memory_space<vmem>>, vector<1x768x72xbf16>
    %50 = vector.shape_cast %49 : vector<1x768x72xbf16> to vector<768x72xbf16>
    %cst_41 = arith.constant dense<0.000000e+00> : vector<8x72xf32>
    %51 = tpu.matmul %0, %50, %cst_41 {dimension_numbers = #tpu.dot_dimension_numbers<[1], [0], [0], [1], [0, 0, 1, 1], [], []>} : vector<8x768xbf16>, vector<768x72xbf16>, vector<8x72xf32> -> vector<8x72xf32>
    %c2_42 = arith.constant 2 : index
    %c0_43 = arith.constant 0 : index
    %c0_44 = arith.constant 0 : index
    %52 = vector.load %arg3[%c2_42, %c0_43, %c0_44] : memref<3x1x72xf32, #tpu.memory_space<vmem>>, vector<1x1x72xf32>
    %53 = vector.shape_cast %52 : vector<1x1x72xf32> to vector<1x72xf32>
    %54 = vector.broadcast %53 : vector<1x72xf32> to vector<8x72xf32>
    %55 = arith.addf %51, %54 : vector<8x72xf32>
    %cst_45 = arith.constant 0.000000e+00 : f32
    %56 = vector.broadcast %cst_45 : f32 to vector<8x72xf32>
    %57 = arith.maximumf %55, %56 : vector<8x72xf32>
    %c2_46 = arith.constant 2 : index
    %c0_47 = arith.constant 0 : index
    %c0_48 = arith.constant 0 : index
    %58 = vector.load %arg4[%c2_46, %c0_47, %c0_48] : memref<3x8x72xf32, #tpu.memory_space<vmem>>, vector<1x8x72xf32>
    %59 = vector.shape_cast %58 : vector<1x8x72xf32> to vector<8x72xf32>
    %60 = vector.shape_cast %57 : vector<8x72xf32> to vector<1x8x72xf32>
    tpu.vector_store %arg4[%c2_46, %c0_47, %c0_48], %60 {strides = array<i32>} : memref<3x8x72xf32, #tpu.memory_space<vmem>>, vector<1x8x72xf32>,
    return
  }
  func.func @transform_0(%arg0: i32) -> (i32, i32) {
    %c0_i32 = arith.constant 0 : i32
    %c0_i32_0 = arith.constant 0 : i32
    return %arg0, %c0_i32 : i32, i32
  }
  func.func @transform_1(%arg0: i32) -> (i32, i32, i32) {
    %c0_i32 = arith.constant 0 : i32
    %c0_i32_0 = arith.constant 0 : i32
    %c0_i32_1 = arith.constant 0 : i32
    %c0_i32_2 = arith.constant 0 : i32
    return %c0_i32, %c0_i32_0, %c0_i32_1 : i32, i32, i32
  }
  func.func @transform_2(%arg0: i32) -> (i32, i32, i32) {
    %c0_i32 = arith.constant 0 : i32
    %c0_i32_0 = arith.constant 0 : i32
    %c0_i32_1 = arith.constant 0 : i32
    %c0_i32_2 = arith.constant 0 : i32
    return %c0_i32, %c0_i32_0, %c0_i32_1 : i32, i32, i32
  }
  func.func @transform_3(%arg0: i32) -> (i32, i32, i32) {
    %c0_i32 = arith.constant 0 : i32
    %c0_i32_0 = arith.constant 0 : i32
    %c0_i32_1 = arith.constant 0 : i32
    return %c0_i32, %arg0, %c0_i32_0 : i32, i32, i32
  }
}

</mosaic_0001>

<llo_original>
// kernel: special_block_a.1
$region0: #{special_block_a.1}
  #allocation0 [shape = 'u32[]', space=smem, size = 0x4, offset = 0x4, fixed_abs, tag = 'smem constant byte address 0x4 - core index']
  #allocation1 [shape = 'u32[144,128]{1,0:T(1,128)}', space=vmem, size = 0x12000, scoped, tag = 'internal scratch']
  %s0 = inlined_call_operand.vmem [shape: bf16[32,768], index: 0, kind: input, shape index: {}]
  %s1 = inlined_call_operand.vmem [shape: bf16[9,768,72], index: 1, kind: input, shape index: {}]
  %s2 = inlined_call_operand.vmem [shape: f32[3,1,72], index: 2, kind: input, shape index: {}]
  %s3 = inlined_call_operand.vmem [shape: f32[3,32,72], index: 3, kind: output, shape index: {}]
  %s4 = sld [smem:[#allocation0]]
  $region79: #{special_block_a.1} parent=0
    _
  %s6 = ssub.s32 1, %s4
  %s7 = scalar_select 0, %s6, %s4
  $region1: #{special_block_a.1} parent=0
    #allocation2 [shape = 'u8[24576]{0}', space=vmem, size = 0x6000, scoped, tag = 'output window, operand 0']
    loop: start=0, step=1, limit=6
    $region2: #{special_block_a.1} parent=1 // loop_pre_header
      _
    $region3: #{special_block_a.1} parent=1 // loop_header
      %s9 = sphi 0, %s13
      %p10 = scmp.ge.s32.totalorder %s9, 6
      %s19 = sphi 0, %s21
      %s22 = sphi 0, %s19
      %s23 = sphi 0, %s22
      %s39 = sphi 0, %s23
      %s43 = sphi 0, %s43
      %s45 = sphi 0, %s43
      %s46 = sphi 0, %s45
      %s60 = sphi 0, %s46
      %s64 = sphi 0, %s64
      %s66 = sphi 0, %s64
      %s67 = sphi 0, %s66
      %s81 = sphi 0, %s67
      %s87 = sphi 0, %s89
      %s90 = sphi 0, %s87
      %s91 = sphi 0, %s90
      %s107 = sphi 0, %s91
    $region4: #{special_block_a.1} parent=1 // loop_header_branch
      %12 = sbr.rel (%p10) target = $region8
    $region5: #{special_block_a.1} parent=1 // loop_body
      %s14 = ssub.s32 %s9, 1
      %s15 = ssub.s32 %s9, 2
      %s16 = sadd.s32 %s9, 1
      %s17 = ssub.s32 %s9, %s16
      %p18 = scmp.eq.s32.totalorder %s17, 0
      %s20 = sadd.s32 %s19, 1
      %s21 = scalar_select %p18, %s19, %s20
      %p24 = pneg %p18
      %p25 = scmp.eq.s32.totalorder %s9, 3
      %p26 = por %p24, %p25
      %p27 = scmp.ne.s32.totalorder %s19, %s22
      %p28 = scmp.eq.s32.totalorder %s9, 0
      %p29 = por %p27, %p28
      %p30 = scmp.ne.s32.totalorder %s19, %s22
      %p31 = scmp.eq.s32.totalorder %s14, 3
      %p32 = por %p30, %p31
      %p33 = scmp.ne.s32.totalorder %s22, %s23
      %p34 = scmp.eq.s32.totalorder %s14, 0
      %p35 = por %p33, %p34
      %p36 = scmp.ne.s32.totalorder %s22, %s23
      %p37 = scmp.eq.s32.totalorder %s15, 3
      %p38 = por %p36, %p37
      %p40 = scmp.ne.s32.totalorder %s23, %s39
      %p41 = scmp.eq.s32.totalorder %s15, 0
      %p42 = por %p40, %p41
      %s44 = sadd.s32 %s43, 1
      %p47 = scmp.eq.s32.totalorder %s9, 3
      %p48 = scmp.ne.s32.totalorder %s43, %s45
      %p49 = scmp.eq.s32.totalorder %s9, 0
      %p50 = por %p48, %p49
      %p51 = scmp.ne.s32.totalorder %s43, %s45
      %p52 = scmp.eq.s32.totalorder %s14, 3
      %p53 = por %p51, %p52
      %p54 = scmp.ne.s32.totalorder %s45, %s46
      %p55 = scmp.eq.s32.totalorder %s14, 0
      %p56 = por %p54, %p55
      %p57 = scmp.ne.s32.totalorder %s45, %s46
      %p58 = scmp.eq.s32.totalorder %s15, 3
      %p59 = por %p57, %p58
      %p61 = scmp.ne.s32.totalorder %s46, %s60
      %p62 = scmp.eq.s32.totalorder %s15, 0
      %p63 = por %p61, %p62
      %s65 = sadd.s32 %s64, 1
      %p68 = scmp.eq.s32.totalorder %s9, 3
      %p69 = scmp.ne.s32.totalorder %s64, %s66
      %p70 = scmp.eq.s32.totalorder %s9, 0
      %p71 = por %p69, %p70
      %p72 = scmp.ne.s32.totalorder %s64, %s66
      %p73 = scmp.eq.s32.totalorder %s14, 3
      %p74 = por %p72, %p73
      %p75 = scmp.ne.s32.totalorder %s66, %s67
      %p76 = scmp.eq.s32.totalorder %s14, 0
      %p77 = por %p75, %p76
      %p78 = scmp.ne.s32.totalorder %s66, %s67
      %p79 = scmp.eq.s32.totalorder %s15, 3
      %p80 = por %p78, %p79
      %p82 = scmp.ne.s32.totalorder %s67, %s81
      %p83 = scmp.eq.s32.totalorder %s15, 0
      %p84 = por %p82, %p83
      %s85 = ssub.s32 %s9, %s16
      %p86 = scmp.eq.s32.totalorder %s85, 0
      %s88 = sadd.s32 %s87, 1
      %s89 = scalar_select %p86, %s87, %s88
      %p92 = pneg %p86
      %p93 = scmp.eq.s32.totalorder %s9, 3
      %p94 = por %p92, %p93
      %p95 = scmp.ne.s32.totalorder %s87, %s90
      %p96 = scmp.eq.s32.totalorder %s9, 0
      %p97 = por %p95, %p96
      %p98 = scmp.ne.s32.totalorder %s87, %s90
      %p99 = scmp.eq.s32.totalorder %s14, 3
      %p100 = por %p98, %p99
      %p101 = scmp.ne.s32.totalorder %s90, %s91
      %p102 = scmp.eq.s32.totalorder %s14, 0
      %p103 = por %p101, %p102
      %p104 = scmp.ne.s32.totalorder %s90, %s91
      %p105 = scmp.eq.s32.totalorder %s15, 3
      %p106 = por %p104, %p105
      %p108 = scmp.ne.s32.totalorder %s91, %s107
      %p109 = scmp.eq.s32.totalorder %s15, 0
      %p110 = por %p108, %p109
      %p111 = scmp.le.s32.totalorder 1, %s9
      %p112 = scmp.lt.s32.totalorder %s9, 5
      %p113 = pnand %p111, %p112
      %p114 = pneg %p113
      // Predicated region
      $region9: #{special_block_a.1} parent=5 // pred_check
        _
      $region10: #{special_block_a.1} parent=5 // pred_check_branch
        %116 = sbr.rel (%p113) target = $region12
      $region11: #{special_block_a.1} parent=5 // pred_region
        %s117 = ssub.s32 %s9, 1
        // Predicated region
        $region13: #{special_block_a.1} parent=11 // pred_check
          %p118 = pneg %p56
        $region14: #{special_block_a.1} parent=11 // pred_check_branch
          %120 = sbr.rel (%p118) target = $region16
        $region15: #{special_block_a.1} parent=11 // pred_region
          _
        $region16: #{special_block_a.1} parent=11 // pred_fallthru
          _
        // Predicated region
        $region17: #{special_block_a.1} parent=11 // pred_check
          %p121 = pneg %p77
        $region18: #{special_block_a.1} parent=11 // pred_check_branch
          %123 = sbr.rel (%p121) target = $region20
        $region19: #{special_block_a.1} parent=11 // pred_region
          _
        $region20: #{special_block_a.1} parent=11 // pred_fallthru
          _
      $region12: #{special_block_a.1} parent=5 // pred_fallthru
        _
      %p124 = scmp.lt.s32.totalorder %s9, 4
      // Predicated region
      $region21: #{special_block_a.1} parent=5 // pred_check
        %p125 = pneg %p124
      $region22: #{special_block_a.1} parent=5 // pred_check_branch
        %127 = sbr.rel (%p125) target = $region24
      $region23: #{special_block_a.1} parent=5 // pred_region
        // Predicated region
        $region25: #{special_block_a.1} parent=23 // pred_check
          %p128 = pneg %p29
        $region26: #{special_block_a.1} parent=23 // pred_check_branch
          %130 = sbr.rel (%p128) target = $region28
        $region27: #{special_block_a.1} parent=23 // pred_region
          %p131 = scmp.lt.s32.totalorder %s9, 3
          %s132 = scalar_select %p131, %s9, 3
          %s133 = smul.addr %s132, 6
          %s134 = smul.addr %s133, 4
          %s135 = scalar_lea.vmem %s0, %s134
        $region28: #{special_block_a.1} parent=23 // pred_fallthru
          _
      $region24: #{special_block_a.1} parent=5 // pred_fallthru
        _
      %p136 = scmp.le.s32.totalorder 1, %s9
      %p137 = scmp.lt.s32.totalorder %s9, 5
      %p138 = pnand %p136, %p137
      %p139 = pneg %p138
      // Predicated region
      $region29: #{special_block_a.1} parent=5 // pred_check
        _
      $region30: #{special_block_a.1} parent=5 // pred_check_branch
        %141 = sbr.rel (%p138) target = $region32
      $region31: #{special_block_a.1} parent=5 // pred_region
        %s142 = ssub.s32 %s9, 1
        %p143 = scmp.lt.s32.totalorder %s14, 3
        %s144 = scalar_select %p143, %s14, 3
        %s145 = smul.addr %s144, 6
        %s146 = smul.addr %s145, 4
        %s147 = scalar_lea.vmem %s0, %s146
        %p148 = pneg %p35
        %p149 = pneg %p32
        %p150 = pneg %p56
        %p151 = pneg %p53
        %p152 = pneg %p77
        %p153 = pneg %p74
        %p154 = pneg %p103
        %p155 = pneg %p100
        %s156 = sand.u32 %s90, 1
        %s157 = sand.u32 %s90, 1
        %s158 = smul.addr %s157, 24
        %s159 = scalar_lea.vmem [#allocation2], %s158
        %p160 = scmp.lt.s32.totalorder %s14, 3
        %s161 = scalar_select %p160, %s14, 3
        %s162 = smul.addr %s161, 6
        %s163 = smul.addr %s162, 4
        %s164 = scalar_lea.vmem %s0, %s163
        %v166 = vld [vmem:[%s164] sm:$0xff]
        %v167 = vld [vmem:[%s164 + $0x8] sm:$0xff]
        %v168 = vld [vmem:[%s164 + $0x10] sm:$0xff]
        %v169 = vld [vmem:[%s1] sm:$0xf]
        %v170 = vld [vmem:[%s1 + $0x4] sm:$0xf]
        %v171 = vld [vmem:[%s1 + $0x8] sm:$0xf]
        %v172 = vld [vmem:[%s1 + $0xc] sm:$0xf]
        %v173 = vld [vmem:[%s1 + $0x10] sm:$0xf]
        %v174 = vld [vmem:[%s1 + $0x14] sm:$0xf]
        %v175 = vld [vmem:[%s1 + $0x18] sm:$0xf]
        %v176 = vld [vmem:[%s1 + $0x1c] sm:$0xf]
        %v177 = vld [vmem:[%s1 + $0x20] sm:$0xf]
        %v178 = vld [vmem:[%s1 + $0x24] sm:$0xf]
        %v179 = vld [vmem:[%s1 + $0x28] sm:$0xf]
        %v180 = vld [vmem:[%s1 + $0x2c] sm:$0xf]
        %v181 = vld [vmem:[%s1 + $0x30] sm:$0xf]
        %v182 = vld [vmem:[%s1 + $0x34] sm:$0xf]
        %v183 = vld [vmem:[%s1 + $0x38] sm:$0xf]
        %v184 = vld [vmem:[%s1 + $0x3c] sm:$0xf]
        %v185 = vld [vmem:[%s1 + $0x40] sm:$0xf]
        %v186 = vld [vmem:[%s1 + $0x44] sm:$0xf]
        %v187 = vld [vmem:[%s1 + $0x48] sm:$0xf]
        %v188 = vld [vmem:[%s1 + $0x4c] sm:$0xf]
        %v189 = vld [vmem:[%s1 + $0x50] sm:$0xf]
        %v190 = vld [vmem:[%s1 + $0x54] sm:$0xf]
        %v191 = vld [vmem:[%s1 + $0x58] sm:$0xf]
        %v192 = vld [vmem:[%s1 + $0x5c] sm:$0xf]
        %v193 = vld [vmem:[%s1 + $0x60] sm:$0xf]
        %v194 = vld [vmem:[%s1 + $0x64] sm:$0xf]
        %v195 = vld [vmem:[%s1 + $0x68] sm:$0xf]
        %v196 = vld [vmem:[%s1 + $0x6c] sm:$0xf]
        %v197 = vld [vmem:[%s1 + $0x70] sm:$0xf]
        %v198 = vld [vmem:[%s1 + $0x74] sm:$0xf]
        %v199 = vld [vmem:[%s1 + $0x78] sm:$0xf]
        %v200 = vld [vmem:[%s1 + $0x7c] sm:$0xf]
        %v201 = vld [vmem:[%s1 + $0x80] sm:$0xf]
        %v202 = vld [vmem:[%s1 + $0x84] sm:$0xf]
        %v203 = vld [vmem:[%s1 + $0x88] sm:$0xf]
        %v204 = vld [vmem:[%s1 + $0x8c] sm:$0xf]
        %v205 = vld [vmem:[%s1 + $0x90] sm:$0xf]
        %v206 = vld [vmem:[%s1 + $0x94] sm:$0xf]
        %v207 = vld [vmem:[%s1 + $0x98] sm:$0xf]
        %v208 = vld [vmem:[%s1 + $0x9c] sm:$0xf]
        %v209 = vld [vmem:[%s1 + $0xa0] sm:$0xf]
        %v210 = vld [vmem:[%s1 + $0xa4] sm:$0xf]
        %v211 = vld [vmem:[%s1 + $0xa8] sm:$0xf]
        %v212 = vld [vmem:[%s1 + $0xac] sm:$0xf]
        %v213 = vld [vmem:[%s1 + $0xb0] sm:$0xf]
        %v214 = vld [vmem:[%s1 + $0xb4] sm:$0xf]
        %v215 = vld [vmem:[%s1 + $0xb8] sm:$0xf]
        %v216 = vld [vmem:[%s1 + $0xbc] sm:$0xf]
        %v217 = vld [vmem:[%s1 + $0xc0] sm:$0xf]
        %v218 = vld [vmem:[%s1 + $0xc4] sm:$0xf]
        %v219 = vld [vmem:[%s1 + $0xc8] sm:$0xf]
        %v220 = vld [vmem:[%s1 + $0xcc] sm:$0xf]
        %v221 = vld [vmem:[%s1 + $0xd0] sm:$0xf]
        %v222 = vld [vmem:[%s1 + $0xd4] sm:$0xf]
        %v223 = vld [vmem:[%s1 + $0xd8] sm:$0xf]
        %v224 = vld [vmem:[%s1 + $0xdc] sm:$0xf]
        %v225 = vld [vmem:[%s1 + $0xe0] sm:$0xf]
        %v226 = vld [vmem:[%s1 + $0xe4] sm:$0xf]
        %v227 = vld [vmem:[%s1 + $0xe8] sm:$0xf]
        %v228 = vld [vmem:[%s1 + $0xec] sm:$0xf]
        %v229 = vld [vmem:[%s1 + $0xf0] sm:$0xf]
        %v230 = vld [vmem:[%s1 + $0xf4] sm:$0xf]
        %v231 = vld [vmem:[%s1 + $0xf8] sm:$0xf]
        %v232 = vld [vmem:[%s1 + $0xfc] sm:$0xf]
        %v233 = vld [vmem:[%s1 + $0x100] sm:$0xf]
        %v234 = vld [vmem:[%s1 + $0x104] sm:$0xf]
        %v235 = vld [vmem:[%s1 + $0x108] sm:$0xf]
        %v236 = vld [vmem:[%s1 + $0x10c] sm:$0xf]
        %v237 = vld [vmem:[%s1 + $0x110] sm:$0xf]
        %v238 = vld [vmem:[%s1 + $0x114] sm:$0xf]
        %v239 = vld [vmem:[%s1 + $0x118] sm:$0xf]
        %v240 = vld [vmem:[%s1 + $0x11c] sm:$0xf]
        %v241 = vld [vmem:[%s1 + $0x120] sm:$0xf]
        %v242 = vld [vmem:[%s1 + $0x124] sm:$0xf]
        %v243 = vld [vmem:[%s1 + $0x128] sm:$0xf]
        %v244 = vld [vmem:[%s1 + $0x12c] sm:$0xf]
        %v245 = vld [vmem:[%s1 + $0x130] sm:$0xf]
        %v246 = vld [vmem:[%s1 + $0x134] sm:$0xf]
        %v247 = vld [vmem:[%s1 + $0x138] sm:$0xf]
        %v248 = vld [vmem:[%s1 + $0x13c] sm:$0xf]
        %v249 = vld [vmem:[%s1 + $0x140] sm:$0xf]
        %v250 = vld [vmem:[%s1 + $0x144] sm:$0xf]
        %v251 = vld [vmem:[%s1 + $0x148] sm:$0xf]
        %v252 = vld [vmem:[%s1 + $0x14c] sm:$0xf]
        %v253 = vld [vmem:[%s1 + $0x150] sm:$0xf]
        %v254 = vld [vmem:[%s1 + $0x154] sm:$0xf]
        %v255 = vld [vmem:[%s1 + $0x158] sm:$0xf]
        %v256 = vld [vmem:[%s1 + $0x15c] sm:$0xf]
        %v257 = vld [vmem:[%s1 + $0x160] sm:$0xf]
        %v258 = vld [vmem:[%s1 + $0x164] sm:$0xf]
        %v259 = vld [vmem:[%s1 + $0x168] sm:$0xf]
        %v260 = vld [vmem:[%s1 + $0x16c] sm:$0xf]
        %v261 = vld [vmem:[%s1 + $0x170] sm:$0xf]
        %v262 = vld [vmem:[%s1 + $0x174] sm:$0xf]
        %v263 = vld [vmem:[%s1 + $0x178] sm:$0xf]
        %v264 = vld [vmem:[%s1 + $0x17c] sm:$0xf]
        %v268 = vunpack.c.l.b16 %v166
        %v269 = vunpack.c.h.b16 %v166
        %v270 = vunpack.c.l.b16 %v167
        %v271 = vunpack.c.h.b16 %v167
        %v272 = vunpack.c.l.b16 %v168
        %v273 = vunpack.c.h.b16 %v168
        %v274 = vpack.c.b16 %v268, %v268
        %v275 = vpack.c.b16 %v269, %v269
        %v276 = vpack.c.b16 %v270, %v270
        %v277 = vpack.c.b16 %v271, %v271
        %v278 = vpack.c.b16 %v272, %v272
        %v279 = vpack.c.b16 %v273, %v273
        %v382 = vunpack.c.l.b16 %v169
        %v383 = vunpack.c.l.b16 %v170
        %v384 = vunpack.c.l.b16 %v171
        %v385 = vunpack.c.l.b16 %v172
        %v386 = vunpack.c.l.b16 %v173
        %v387 = vunpack.c.l.b16 %v174
        %v388 = vunpack.c.l.b16 %v175
        %v389 = vunpack.c.l.b16 %v176
        %v390 = vunpack.c.l.b16 %v177
        %v391 = vunpack.c.l.b16 %v178
        %v392 = vunpack.c.l.b16 %v179
        %v393 = vunpack.c.l.b16 %v180
        %v394 = vunpack.c.l.b16 %v181
        %v395 = vunpack.c.l.b16 %v182
        %v396 = vunpack.c.l.b16 %v183
        %v397 = vunpack.c.l.b16 %v184
        %v398 = vunpack.c.l.b16 %v185
        %v399 = vunpack.c.l.b16 %v186
        %v400 = vunpack.c.l.b16 %v187
        %v401 = vunpack.c.l.b16 %v188
        %v402 = vunpack.c.l.b16 %v189
        %v403 = vunpack.c.l.b16 %v190
        %v404 = vunpack.c.l.b16 %v191
        %v405 = vunpack.c.l.b16 %v192
        %v406 = vunpack.c.l.b16 %v193
        %v407 = vunpack.c.l.b16 %v194
        %v408 = vunpack.c.l.b16 %v195
        %v409 = vunpack.c.l.b16 %v196
        %v410 = vunpack.c.l.b16 %v197
        %v411 = vunpack.c.l.b16 %v198
        %v412 = vunpack.c.l.b16 %v199
        %v413 = vunpack.c.l.b16 %v200
        %v414 = vunpack.c.l.b16 %v201
        %v415 = vunpack.c.l.b16 %v202
        %v416 = vunpack.c.l.b16 %v203
        %v417 = vunpack.c.l.b16 %v204
        %v418 = vunpack.c.l.b16 %v205
        %v419 = vunpack.c.l.b16 %v206
        %v420 = vunpack.c.l.b16 %v207
        %v421 = vunpack.c.l.b16 %v208
        %v422 = vunpack.c.l.b16 %v209
        %v423 = vunpack.c.l.b16 %v210
        %v424 = vunpack.c.l.b16 %v211
        %v425 = vunpack.c.l.b16 %v212
        %v426 = vunpack.c.l.b16 %v213
        %v427 = vunpack.c.l.b16 %v214
        %v428 = vunpack.c.l.b16 %v215
        %v429 = vunpack.c.l.b16 %v216
        %v430 = vunpack.c.l.b16 %v217
        %v431 = vunpack.c.l.b16 %v218
        %v432 = vunpack.c.l.b16 %v219
        %v433 = vunpack.c.l.b16 %v220
        %v434 = vunpack.c.l.b16 %v221
        %v435 = vunpack.c.l.b16 %v222
        %v436 = vunpack.c.l.b16 %v223
        %v437 = vunpack.c.l.b16 %v224
        %v438 = vunpack.c.l.b16 %v225
        %v439 = vunpack.c.l.b16 %v226
        %v440 = vunpack.c.l.b16 %v227
        %v441 = vunpack.c.l.b16 %v228
        %v442 = vunpack.c.l.b16 %v229
        %v443 = vunpack.c.l.b16 %v230
        %v444 = vunpack.c.l.b16 %v231
        %v445 = vunpack.c.l.b16 %v232
        %v446 = vunpack.c.l.b16 %v233
        %v447 = vunpack.c.l.b16 %v234
        %v448 = vunpack.c.l.b16 %v235
        %v449 = vunpack.c.l.b16 %v236
        %v450 = vunpack.c.l.b16 %v237
        %v451 = vunpack.c.l.b16 %v238
        %v452 = vunpack.c.l.b16 %v239
        %v453 = vunpack.c.l.b16 %v240
        %v454 = vunpack.c.l.b16 %v241
        %v455 = vunpack.c.l.b16 %v242
        %v456 = vunpack.c.l.b16 %v243
        %v457 = vunpack.c.l.b16 %v244
        %v458 = vunpack.c.l.b16 %v245
        %v459 = vunpack.c.l.b16 %v246
        %v460 = vunpack.c.l.b16 %v247
        %v461 = vunpack.c.l.b16 %v248
        %v462 = vunpack.c.l.b16 %v249
        %v463 = vunpack.c.l.b16 %v250
        %v464 = vunpack.c.l.b16 %v251
        %v465 = vunpack.c.l.b16 %v252
        %v466 = vunpack.c.l.b16 %v253
        %v467 = vunpack.c.l.b16 %v254
        %v468 = vunpack.c.l.b16 %v255
        %v469 = vunpack.c.l.b16 %v256
        %v470 = vunpack.c.l.b16 %v257
        %v471 = vunpack.c.l.b16 %v258
        %v472 = vunpack.c.l.b16 %v259
        %v473 = vunpack.c.l.b16 %v260
        %v474 = vunpack.c.l.b16 %v261
        %v475 = vunpack.c.l.b16 %v262
        %v476 = vunpack.c.l.b16 %v263
        %v477 = vunpack.c.l.b16 %v264
        %v478 = vpack.c.b16 %v383, %v382
        %v479 = vpack.c.b16 %v385, %v384
        %v480 = vpack.c.b16 %v387, %v386
        %v481 = vpack.c.b16 %v389, %v388
        %v482 = vpack.c.b16 %v391, %v390
        %v483 = vpack.c.b16 %v393, %v392
        %v484 = vpack.c.b16 %v395, %v394
        %v485 = vpack.c.b16 %v397, %v396
        %v486 = vpack.c.b16 %v399, %v398
        %v487 = vpack.c.b16 %v401, %v400
        %v488 = vpack.c.b16 %v403, %v402
        %v489 = vpack.c.b16 %v405, %v404
        %v490 = vpack.c.b16 %v407, %v406
        %v491 = vpack.c.b16 %v409, %v408
        %v492 = vpack.c.b16 %v411, %v410
        %v493 = vpack.c.b16 %v413, %v412
        %v494 = vpack.c.b16 %v415, %v414
        %v495 = vpack.c.b16 %v417, %v416
        %v496 = vpack.c.b16 %v419, %v418
        %v497 = vpack.c.b16 %v421, %v420
        %v498 = vpack.c.b16 %v423, %v422
        %v499 = vpack.c.b16 %v425, %v424
        %v500 = vpack.c.b16 %v427, %v426
        %v501 = vpack.c.b16 %v429, %v428
        %v502 = vpack.c.b16 %v431, %v430
        %v503 = vpack.c.b16 %v433, %v432
        %v504 = vpack.c.b16 %v435, %v434
        %v505 = vpack.c.b16 %v437, %v436
        %v506 = vpack.c.b16 %v439, %v438
        %v507 = vpack.c.b16 %v441, %v440
        %v508 = vpack.c.b16 %v443, %v442
        %v509 = vpack.c.b16 %v445, %v444
        %v510 = vpack.c.b16 %v447, %v446
        %v511 = vpack.c.b16 %v449, %v448
        %v512 = vpack.c.b16 %v451, %v450
        %v513 = vpack.c.b16 %v453, %v452
        %v514 = vpack.c.b16 %v455, %v454
        %v515 = vpack.c.b16 %v457, %v456
        %v516 = vpack.c.b16 %v459, %v458
        %v517 = vpack.c.b16 %v461, %v460
        %v518 = vpack.c.b16 %v463, %v462
        %v519 = vpack.c.b16 %v465, %v464
        %v520 = vpack.c.b16 %v467, %v466
        %v521 = vpack.c.b16 %v469, %v468
        %v522 = vpack.c.b16 %v471, %v470
        %v523 = vpack.c.b16 %v473, %v472
        %v524 = vpack.c.b16 %v475, %v474
        %v525 = vpack.c.b16 %v477, %v476
        %574 = vmatprep.subr.bf16.mxu0 0
        %575 = vmatpush1.bf16.msra.mxu0 %v478
        %576 = vmatprep.subr.bf16.mxu0 0
        %577 = vmatpush1.bf16.msra.mxu0 %v479
        %578 = vmatprep.subr.bf16.mxu0 0
        %579 = vmatpush1.bf16.msra.mxu0 %v480
        %580 = vmatprep.subr.bf16.mxu0 0
        %581 = vmatpush1.bf16.msra.mxu0 %v481
        %582 = vmatprep.subr.bf16.mxu0 0
        %583 = vmatpush1.bf16.msra.mxu0 %v482
        %584 = vmatprep.subr.bf16.mxu0 0
        %585 = vmatpush1.bf16.msra.mxu0 %v483
        %586 = vmatprep.subr.bf16.mxu0 0
        %587 = vmatpush1.bf16.msra.mxu0 %v484
        %588 = vmatprep.subr.bf16.mxu0 0
        %589 = vmatpush1.bf16.msra.mxu0 %v485
        %590 = vmatprep.subr.bf16.mxu0 0
        %591 = vmatpush1.bf16.msra.mxu0 %v486
        %592 = vmatprep.subr.bf16.mxu0 0
        %593 = vmatpush1.bf16.msra.mxu0 %v487
        %594 = vmatprep.subr.bf16.mxu0 0
        %595 = vmatpush1.bf16.msra.mxu0 %v488
        %596 = vmatprep.subr.bf16.mxu0 0
        %597 = vmatpush1.bf16.msra.mxu0 %v489
        %598 = vmatprep.subr.bf16.mxu0 0
        %599 = vmatpush1.bf16.msra.mxu0 %v490
        %600 = vmatprep.subr.bf16.mxu0 0
        %601 = vmatpush1.bf16.msra.mxu0 %v491
        %602 = vmatprep.subr.bf16.mxu0 0
        %603 = vmatpush1.bf16.msra.mxu0 %v492
        %604 = vmatprep.subr.bf16.mxu0 0
        %605 = vmatpush1.bf16.msra.mxu0 %v493
        %606 = vmatprep.mubr.bf16.mxu0 %v275
        %607 = vmatmul.mubr.bf16.gmra.mrb[0].mxu0 %v274
        %v608 = vpop.f32.mrb[0].mxu0
        %v609 = vadd.f32 0.0, %v608
        %v610 = vpop.f32.mrb[0].mxu0
        %v611 = vpop.f32.mrb[0].mxu0
        %v612 = vpop.f32.mrb[0].mxu0
        %613 = vdwg.mxu0
        %614 = vmatprep.subr.bf16.mxu0 0
        %615 = vmatpush1.bf16.msra.mxu0 %v494
        %616 = vmatprep.subr.bf16.mxu0 0
        %617 = vmatpush1.bf16.msra.mxu0 %v495
        %618 = vmatprep.subr.bf16.mxu0 0
        %619 = vmatpush1.bf16.msra.mxu0 %v496
        %620 = vmatprep.subr.bf16.mxu0 0
        %621 = vmatpush1.bf16.msra.mxu0 %v497
        %622 = vmatprep.subr.bf16.mxu0 0
        %623 = vmatpush1.bf16.msra.mxu0 %v498
        %624 = vmatprep.subr.bf16.mxu0 0
        %625 = vmatpush1.bf16.msra.mxu0 %v499
        %626 = vmatprep.subr.bf16.mxu0 0
        %627 = vmatpush1.bf16.msra.mxu0 %v500
        %628 = vmatprep.subr.bf16.mxu0 0
        %629 = vmatpush1.bf16.msra.mxu0 %v501
        %630 = vmatprep.subr.bf16.mxu0 0
        %631 = vmatpush1.bf16.msra.mxu0 %v502
        %632 = vmatprep.subr.bf16.mxu0 0
        %633 = vmatpush1.bf16.msra.mxu0 %v503
        %634 = vmatprep.subr.bf16.mxu0 0
        %635 = vmatpush1.bf16.msra.mxu0 %v504
        %636 = vmatprep.subr.bf16.mxu0 0
        %637 = vmatpush1.bf16.msra.mxu0 %v505
        %638 = vmatprep.subr.bf16.mxu0 0
        %639 = vmatpush1.bf16.msra.mxu0 %v506
        %640 = vmatprep.subr.bf16.mxu0 0
        %641 = vmatpush1.bf16.msra.mxu0 %v507
        %642 = vmatprep.subr.bf16.mxu0 0
        %643 = vmatpush1.bf16.msra.mxu0 %v508
        %644 = vmatprep.subr.bf16.mxu0 0
        %645 = vmatpush1.bf16.msra.mxu0 %v509
        %646 = vmatprep.mubr.bf16.mxu0 %v277
        %647 = vmatmul.mubr.bf16.gmra.mrb[0].mxu0 %v276
        %v648 = vpop.f32.mrb[0].mxu0
        %v649 = vadd.f32 %v609, %v648
        %v650 = vpop.f32.mrb[0].mxu0
        %v651 = vpop.f32.mrb[0].mxu0
        %v652 = vpop.f32.mrb[0].mxu0
        %653 = vdwg.mxu0
        %654 = vmatprep.subr.bf16.mxu0 0
        %655 = vmatpush1.bf16.msra.mxu0 %v510
        %656 = vmatprep.subr.bf16.mxu0 0
        %657 = vmatpush1.bf16.msra.mxu0 %v511
        %658 = vmatprep.subr.bf16.mxu0 0
        %659 = vmatpush1.bf16.msra.mxu0 %v512
        %660 = vmatprep.subr.bf16.mxu0 0
        %661 = vmatpush1.bf16.msra.mxu0 %v513
        %662 = vmatprep.subr.bf16.mxu0 0
        %663 = vmatpush1.bf16.msra.mxu0 %v514
        %664 = vmatprep.subr.bf16.mxu0 0
        %665 = vmatpush1.bf16.msra.mxu0 %v515
        %666 = vmatprep.subr.bf16.mxu0 0
        %667 = vmatpush1.bf16.msra.mxu0 %v516
        %668 = vmatprep.subr.bf16.mxu0 0
        %669 = vmatpush1.bf16.msra.mxu0 %v517
        %670 = vmatprep.subr.bf16.mxu0 0
        %671 = vmatpush1.bf16.msra.mxu0 %v518
        %672 = vmatprep.subr.bf16.mxu0 0
        %673 = vmatpush1.bf16.msra.mxu0 %v519
        %674 = vmatprep.subr.bf16.mxu0 0
        %675 = vmatpush1.bf16.msra.mxu0 %v520
        %676 = vmatprep.subr.bf16.mxu0 0
        %677 = vmatpush1.bf16.msra.mxu0 %v521
        %678 = vmatprep.subr.bf16.mxu0 0
        %679 = vmatpush1.bf16.msra.mxu0 %v522
        %680 = vmatprep.subr.bf16.mxu0 0
        %681 = vmatpush1.bf16.msra.mxu0 %v523
        %682 = vmatprep.subr.bf16.mxu0 0
        %683 = vmatpush1.bf16.msra.mxu0 %v524
        %684 = vmatprep.subr.bf16.mxu0 0
        %685 = vmatpush1.bf16.msra.mxu0 %v525
        %686 = vmatprep.mubr.bf16.mxu0 %v279
        %687 = vmatmul.mubr.bf16.gmra.mrb[0].mxu0 %v278
        %v688 = vpop.f32.mrb[0].mxu0
        %v689 = vadd.f32 %v649, %v688
        %v690 = vpop.f32.mrb[0].mxu0
        %v691 = vpop.f32.mrb[0].mxu0
        %v692 = vpop.f32.mrb[0].mxu0
        %693 = vdwg.mxu0
        %s694 = scalar_lea.vmem %s1, 384
        %v695 = vld [vmem:[%s694] sm:$0xf]
        %v696 = vld [vmem:[%s694 + $0x4] sm:$0xf]
        %v697 = vld [vmem:[%s694 + $0x8] sm:$0xf]
        %v698 = vld [vmem:[%s694 + $0xc] sm:$0xf]
        %v699 = vld [vmem:[%s694 + $0x10] sm:$0xf]
        %v700 = vld [vmem:[%s694 + $0x14] sm:$0xf]
        %v701 = vld [vmem:[%s694 + $0x18] sm:$0xf]
        %v702 = vld [vmem:[%s694 + $0x1c] sm:$0xf]
        %v703 = vld [vmem:[%s694 + $0x20] sm:$0xf]
        %v704 = vld [vmem:[%s694 + $0x24] sm:$0xf]
        %v705 = vld [vmem:[%s694 + $0x28] sm:$0xf]
        %v706 = vld [vmem:[%s694 + $0x2c] sm:$0xf]
        %v707 = vld [vmem:[%s694 + $0x30] sm:$0xf]
        %v708 = vld [vmem:[%s694 + $0x34] sm:$0xf]
        %v709 = vld [vmem:[%s694 + $0x38] sm:$0xf]
        %v710 = vld [vmem:[%s694 + $0x3c] sm:$0xf]
        %v711 = vld [vmem:[%s694 + $0x40] sm:$0xf]
        %v712 = vld [vmem:[%s694 + $0x44] sm:$0xf]
        %v713 = vld [vmem:[%s694 + $0x48] sm:$0xf]
        %v714 = vld [vmem:[%s694 + $0x4c] sm:$0xf]
        %v715 = vld [vmem:[%s694 + $0x50] sm:$0xf]
        %v716 = vld [vmem:[%s694 + $0x54] sm:$0xf]
        %v717 = vld [vmem:[%s694 + $0x58] sm:$0xf]
        %v718 = vld [vmem:[%s694 + $0x5c] sm:$0xf]
        %v719 = vld [vmem:[%s694 + $0x60] sm:$0xf]
        %v720 = vld [vmem:[%s694 + $0x64] sm:$0xf]
        %v721 = vld [vmem:[%s694 + $0x68] sm:$0xf]
        %v722 = vld [vmem:[%s694 + $0x6c] sm:$0xf]
        %v723 = vld [vmem:[%s694 + $0x70] sm:$0xf]
        %v724 = vld [vmem:[%s694 + $0x74] sm:$0xf]
        %v725 = vld [vmem:[%s694 + $0x78] sm:$0xf]
        %v726 = vld [vmem:[%s694 + $0x7c] sm:$0xf]
        %v727 = vld [vmem:[%s694 + $0x80] sm:$0xf]
        %v728 = vld [vmem:[%s694 + $0x84] sm:$0xf]
        %v729 = vld [vmem:[%s694 + $0x88] sm:$0xf]
        %v730 = vld [vmem:[%s694 + $0x8c] sm:$0xf]
        %v731 = vld [vmem:[%s694 + $0x90] sm:$0xf]
        %v732 = vld [vmem:[%s694 + $0x94] sm:$0xf]
        %v733 = vld [vmem:[%s694 + $0x98] sm:$0xf]
        %v734 = vld [vmem:[%s694 + $0x9c] sm:$0xf]
        %v735 = vld [vmem:[%s694 + $0xa0] sm:$0xf]
        %v736 = vld [vmem:[%s694 + $0xa4] sm:$0xf]
        %v737 = vld [vmem:[%s694 + $0xa8] sm:$0xf]
        %v738 = vld [vmem:[%s694 + $0xac] sm:$0xf]
        %v739 = vld [vmem:[%s694 + $0xb0] sm:$0xf]
        %v740 = vld [vmem:[%s694 + $0xb4] sm:$0xf]
        %v741 = vld [vmem:[%s694 + $0xb8] sm:$0xf]
        %v742 = vld [vmem:[%s694 + $0xbc] sm:$0xf]
        %v743 = vld [vmem:[%s694 + $0xc0] sm:$0xf]
        %v744 = vld [vmem:[%s694 + $0xc4] sm:$0xf]
        %v745 = vld [vmem:[%s694 + $0xc8] sm:$0xf]
        %v746 = vld [vmem:[%s694 + $0xcc] sm:$0xf]
        %v747 = vld [vmem:[%s694 + $0xd0] sm:$0xf]
        %v748 = vld [vmem:[%s694 + $0xd4] sm:$0xf]
        %v749 = vld [vmem:[%s694 + $0xd8] sm:$0xf]
        %v750 = vld [vmem:[%s694 + $0xdc] sm:$0xf]
        %v751 = vld [vmem:[%s694 + $0xe0] sm:$0xf]
        %v752 = vld [vmem:[%s694 + $0xe4] sm:$0xf]
        %v753 = vld [vmem:[%s694 + $0xe8] sm:$0xf]
        %v754 = vld [vmem:[%s694 + $0xec] sm:$0xf]
        %v755 = vld [vmem:[%s694 + $0xf0] sm:$0xf]
        %v756 = vld [vmem:[%s694 + $0xf4] sm:$0xf]
        %v757 = vld [vmem:[%s694 + $0xf8] sm:$0xf]
        %v758 = vld [vmem:[%s694 + $0xfc] sm:$0xf]
        %v759 = vld [vmem:[%s694 + $0x100] sm:$0xf]
        %v760 = vld [vmem:[%s694 + $0x104] sm:$0xf]
        %v761 = vld [vmem:[%s694 + $0x108] sm:$0xf]
        %v762 = vld [vmem:[%s694 + $0x10c] sm:$0xf]
        %v763 = vld [vmem:[%s694 + $0x110] sm:$0xf]
        %v764 = vld [vmem:[%s694 + $0x114] sm:$0xf]
        %v765 = vld [vmem:[%s694 + $0x118] sm:$0xf]
        %v766 = vld [vmem:[%s694 + $0x11c] sm:$0xf]
        %v767 = vld [vmem:[%s694 + $0x120] sm:$0xf]
        %v768 = vld [vmem:[%s694 + $0x124] sm:$0xf]
        %v769 = vld [vmem:[%s694 + $0x128] sm:$0xf]
        %v770 = vld [vmem:[%s694 + $0x12c] sm:$0xf]
        %v771 = vld [vmem:[%s694 + $0x130] sm:$0xf]
        %v772 = vld [vmem:[%s694 + $0x134] sm:$0xf]
        %v773 = vld [vmem:[%s694 + $0x138] sm:$0xf]
        %v774 = vld [vmem:[%s694 + $0x13c] sm:$0xf]
        %v775 = vld [vmem:[%s694 + $0x140] sm:$0xf]
        %v776 = vld [vmem:[%s694 + $0x144] sm:$0xf]
        %v777 = vld [vmem:[%s694 + $0x148] sm:$0xf]
        %v778 = vld [vmem:[%s694 + $0x14c] sm:$0xf]
        %v779 = vld [vmem:[%s694 + $0x150] sm:$0xf]
        %v780 = vld [vmem:[%s694 + $0x154] sm:$0xf]
        %v781 = vld [vmem:[%s694 + $0x158] sm:$0xf]
        %v782 = vld [vmem:[%s694 + $0x15c] sm:$0xf]
        %v783 = vld [vmem:[%s694 + $0x160] sm:$0xf]
        %v784 = vld [vmem:[%s694 + $0x164] sm:$0xf]
        %v785 = vld [vmem:[%s694 + $0x168] sm:$0xf]
        %v786 = vld [vmem:[%s694 + $0x16c] sm:$0xf]
        %v787 = vld [vmem:[%s694 + $0x170] sm:$0xf]
        %v788 = vld [vmem:[%s694 + $0x174] sm:$0xf]
        %v789 = vld [vmem:[%s694 + $0x178] sm:$0xf]
        %v790 = vld [vmem:[%s694 + $0x17c] sm:$0xf]
        %v887 = vunpack.c.l.b16 %v695
        %v888 = vunpack.c.l.b16 %v696
        %v889 = vunpack.c.l.b16 %v697
        %v890 = vunpack.c.l.b16 %v698
        %v891 = vunpack.c.l.b16 %v699
        %v892 = vunpack.c.l.b16 %v700
        %v893 = vunpack.c.l.b16 %v701
        %v894 = vunpack.c.l.b16 %v702
        %v895 = vunpack.c.l.b16 %v703
        %v896 = vunpack.c.l.b16 %v704
        %v897 = vunpack.c.l.b16 %v705
        %v898 = vunpack.c.l.b16 %v706
        %v899 = vunpack.c.l.b16 %v707
        %v900 = vunpack.c.l.b16 %v708
        %v901 = vunpack.c.l.b16 %v709
        %v902 = vunpack.c.l.b16 %v710
        %v903 = vunpack.c.l.b16 %v711
        %v904 = vunpack.c.l.b16 %v712
        %v905 = vunpack.c.l.b16 %v713
        %v906 = vunpack.c.l.b16 %v714
        %v907 = vunpack.c.l.b16 %v715
        %v908 = vunpack.c.l.b16 %v716
        %v909 = vunpack.c.l.b16 %v717
        %v910 = vunpack.c.l.b16 %v718
        %v911 = vunpack.c.l.b16 %v719
        %v912 = vunpack.c.l.b16 %v720
        %v913 = vunpack.c.l.b16 %v721
        %v914 = vunpack.c.l.b16 %v722
        %v915 = vunpack.c.l.b16 %v723
        %v916 = vunpack.c.l.b16 %v724
        %v917 = vunpack.c.l.b16 %v725
        %v918 = vunpack.c.l.b16 %v726
        %v919 = vunpack.c.l.b16 %v727
        %v920 = vunpack.c.l.b16 %v728
        %v921 = vunpack.c.l.b16 %v729
        %v922 = vunpack.c.l.b16 %v730
        %v923 = vunpack.c.l.b16 %v731
        %v924 = vunpack.c.l.b16 %v732
        %v925 = vunpack.c.l.b16 %v733
        %v926 = vunpack.c.l.b16 %v734
        %v927 = vunpack.c.l.b16 %v735
        %v928 = vunpack.c.l.b16 %v736
        %v929 = vunpack.c.l.b16 %v737
        %v930 = vunpack.c.l.b16 %v738
        %v931 = vunpack.c.l.b16 %v739
        %v932 = vunpack.c.l.b16 %v740
        %v933 = vunpack.c.l.b16 %v741
        %v934 = vunpack.c.l.b16 %v742
        %v935 = vunpack.c.l.b16 %v743
        %v936 = vunpack.c.l.b16 %v744
        %v937 = vunpack.c.l.b16 %v745
        %v938 = vunpack.c.l.b16 %v746
        %v939 = vunpack.c.l.b16 %v747
        %v940 = vunpack.c.l.b16 %v748
        %v941 = vunpack.c.l.b16 %v749
        %v942 = vunpack.c.l.b16 %v750
        %v943 = vunpack.c.l.b16 %v751
        %v944 = vunpack.c.l.b16 %v752
        %v945 = vunpack.c.l.b16 %v753
        %v946 = vunpack.c.l.b16 %v754
        %v947 = vunpack.c.l.b16 %v755
        %v948 = vunpack.c.l.b16 %v756
        %v949 = vunpack.c.l.b16 %v757
        %v950 = vunpack.c.l.b16 %v758
        %v951 = vunpack.c.l.b16 %v759
        %v952 = vunpack.c.l.b16 %v760
        %v953 = vunpack.c.l.b16 %v761
        %v954 = vunpack.c.l.b16 %v762
        %v955 = vunpack.c.l.b16 %v763
        %v956 = vunpack.c.l.b16 %v764
        %v957 = vunpack.c.l.b16 %v765
        %v958 = vunpack.c.l.b16 %v766
        %v959 = vunpack.c.l.b16 %v767
        %v960 = vunpack.c.l.b16 %v768
        %v961 = vunpack.c.l.b16 %v769
        %v962 = vunpack.c.l.b16 %v770
        %v963 = vunpack.c.l.b16 %v771
        %v964 = vunpack.c.l.b16 %v772
        %v965 = vunpack.c.l.b16 %v773
        %v966 = vunpack.c.l.b16 %v774
        %v967 = vunpack.c.l.b16 %v775
        %v968 = vunpack.c.l.b16 %v776
        %v969 = vunpack.c.l.b16 %v777
        %v970 = vunpack.c.l.b16 %v778
        %v971 = vunpack.c.l.b16 %v779
        %v972 = vunpack.c.l.b16 %v780
        %v973 = vunpack.c.l.b16 %v781
        %v974 = vunpack.c.l.b16 %v782
        %v975 = vunpack.c.l.b16 %v783
        %v976 = vunpack.c.l.b16 %v784
        %v977 = vunpack.c.l.b16 %v785
        %v978 = vunpack.c.l.b16 %v786
        %v979 = vunpack.c.l.b16 %v787
        %v980 = vunpack.c.l.b16 %v788
        %v981 = vunpack.c.l.b16 %v789
        %v982 = vunpack.c.l.b16 %v790
        %v983 = vpack.c.b16 %v888, %v887
        %v984 = vpack.c.b16 %v890, %v889
        %v985 = vpack.c.b16 %v892, %v891
        %v986 = vpack.c.b16 %v894, %v893
        %v987 = vpack.c.b16 %v896, %v895
        %v988 = vpack.c.b16 %v898, %v897
        %v989 = vpack.c.b16 %v900, %v899
        %v990 = vpack.c.b16 %v902, %v901
        %v991 = vpack.c.b16 %v904, %v903
        %v992 = vpack.c.b16 %v906, %v905
        %v993 = vpack.c.b16 %v908, %v907
        %v994 = vpack.c.b16 %v910, %v909
        %v995 = vpack.c.b16 %v912, %v911
        %v996 = vpack.c.b16 %v914, %v913
        %v997 = vpack.c.b16 %v916, %v915
        %v998 = vpack.c.b16 %v918, %v917
        %v999 = vpack.c.b16 %v920, %v919
        %v1000 = vpack.c.b16 %v922, %v921
        %v1001 = vpack.c.b16 %v924, %v923
        %v1002 = vpack.c.b16 %v926, %v925
        %v1003 = vpack.c.b16 %v928, %v927
        %v1004 = vpack.c.b16 %v930, %v929
        %v1005 = vpack.c.b16 %v932, %v931
        %v1006 = vpack.c.b16 %v934, %v933
        %v1007 = vpack.c.b16 %v936, %v935
        %v1008 = vpack.c.b16 %v938, %v937
        %v1009 = vpack.c.b16 %v940, %v939
        %v1010 = vpack.c.b16 %v942, %v941
        %v1011 = vpack.c.b16 %v944, %v943
        %v1012 = vpack.c.b16 %v946, %v945
        %v1013 = vpack.c.b16 %v948, %v947
        %v1014 = vpack.c.b16 %v950, %v949
        %v1015 = vpack.c.b16 %v952, %v951
        %v1016 = vpack.c.b16 %v954, %v953
        %v1017 = vpack.c.b16 %v956, %v955
        %v1018 = vpack.c.b16 %v958, %v957
        %v1019 = vpack.c.b16 %v960, %v959
        %v1020 = vpack.c.b16 %v962, %v961
        %v1021 = vpack.c.b16 %v964, %v963
        %v1022 = vpack.c.b16 %v966, %v965
        %v1023 = vpack.c.b16 %v968, %v967
        %v1024 = vpack.c.b16 %v970, %v969
        %v1025 = vpack.c.b16 %v972, %v971
        %v1026 = vpack.c.b16 %v974, %v973
        %v1027 = vpack.c.b16 %v976, %v975
        %v1028 = vpack.c.b16 %v978, %v977
        %v1029 = vpack.c.b16 %v980, %v979
        %v1030 = vpack.c.b16 %v982, %v981
        %1079 = vmatprep.subr.bf16.mxu0 0
        %1080 = vmatpush1.bf16.msra.mxu0 %v983
        %1081 = vmatprep.subr.bf16.mxu0 0
        %1082 = vmatpush1.bf16.msra.mxu0 %v984
        %1083 = vmatprep.subr.bf16.mxu0 0
        %1084 = vmatpush1.bf16.msra.mxu0 %v985
        %1085 = vmatprep.subr.bf16.mxu0 0
        %1086 = vmatpush1.bf16.msra.mxu0 %v986
        %1087 = vmatprep.subr.bf16.mxu0 0
        %1088 = vmatpush1.bf16.msra.mxu0 %v987
        %1089 = vmatprep.subr.bf16.mxu0 0
        %1090 = vmatpush1.bf16.msra.mxu0 %v988
        %1091 = vmatprep.subr.bf16.mxu0 0
        %1092 = vmatpush1.bf16.msra.mxu0 %v989
        %1093 = vmatprep.subr.bf16.mxu0 0
        %1094 = vmatpush1.bf16.msra.mxu0 %v990
        %1095 = vmatprep.subr.bf16.mxu0 0
        %1096 = vmatpush1.bf16.msra.mxu0 %v991
        %1097 = vmatprep.subr.bf16.mxu0 0
        %1098 = vmatpush1.bf16.msra.mxu0 %v992
        %1099 = vmatprep.subr.bf16.mxu0 0
        %1100 = vmatpush1.bf16.msra.mxu0 %v993
        %1101 = vmatprep.subr.bf16.mxu0 0
        %1102 = vmatpush1.bf16.msra.mxu0 %v994
        %1103 = vmatprep.subr.bf16.mxu0 0
        %1104 = vmatpush1.bf16.msra.mxu0 %v995
        %1105 = vmatprep.subr.bf16.mxu0 0
        %1106 = vmatpush1.bf16.msra.mxu0 %v996
        %1107 = vmatprep.subr.bf16.mxu0 0
        %1108 = vmatpush1.bf16.msra.mxu0 %v997
        %1109 = vmatprep.subr.bf16.mxu0 0
        %1110 = vmatpush1.bf16.msra.mxu0 %v998
        %1111 = vmatprep.mubr.bf16.mxu0 %v275
        %1112 = vmatmul.mubr.bf16.gmra.mrb[0].mxu0 %v274
        %v1113 = vpop.f32.mrb[0].mxu0
        %v1114 = vadd.f32 0.0, %v1113
        %v1115 = vpop.f32.mrb[0].mxu0
        %v1116 = vpop.f32.mrb[0].mxu0
        %v1117 = vpop.f32.mrb[0].mxu0
        %1118 = vdwg.mxu0
        %1119 = vmatprep.subr.bf16.mxu0 0
        %1120 = vmatpush1.bf16.msra.mxu0 %v999
        %1121 = vmatprep.subr.bf16.mxu0 0
        %1122 = vmatpush1.bf16.msra.mxu0 %v1000
        %1123 = vmatprep.subr.bf16.mxu0 0
        %1124 = vmatpush1.bf16.msra.mxu0 %v1001
        %1125 = vmatprep.subr.bf16.mxu0 0
        %1126 = vmatpush1.bf16.msra.mxu0 %v1002
        %1127 = vmatprep.subr.bf16.mxu0 0
        %1128 = vmatpush1.bf16.msra.mxu0 %v1003
        %1129 = vmatprep.subr.bf16.mxu0 0
        %1130 = vmatpush1.bf16.msra.mxu0 %v1004
        %1131 = vmatprep.subr.bf16.mxu0 0
        %1132 = vmatpush1.bf16.msra.mxu0 %v1005
        %1133 = vmatprep.subr.bf16.mxu0 0
        %1134 = vmatpush1.bf16.msra.mxu0 %v1006
        %1135 = vmatprep.subr.bf16.mxu0 0
        %1136 = vmatpush1.bf16.msra.mxu0 %v1007
        %1137 = vmatprep.subr.bf16.mxu0 0
        %1138 = vmatpush1.bf16.msra.mxu0 %v1008
        %1139 = vmatprep.subr.bf16.mxu0 0
        %1140 = vmatpush1.bf16.msra.mxu0 %v1009
        %1141 = vmatprep.subr.bf16.mxu0 0
        %1142 = vmatpush1.bf16.msra.mxu0 %v1010
        %1143 = vmatprep.subr.bf16.mxu0 0
        %1144 = vmatpush1.bf16.msra.mxu0 %v1011
        %1145 = vmatprep.subr.bf16.mxu0 0
        %1146 = vmatpush1.bf16.msra.mxu0 %v1012
        %1147 = vmatprep.subr.bf16.mxu0 0
        %1148 = vmatpush1.bf16.msra.mxu0 %v1013
        %1149 = vmatprep.subr.bf16.mxu0 0
        %1150 = vmatpush1.bf16.msra.mxu0 %v1014
        %1151 = vmatprep.mubr.bf16.mxu0 %v277
        %1152 = vmatmul.mubr.bf16.gmra.mrb[0].mxu0 %v276
        %v1153 = vpop.f32.mrb[0].mxu0
        %v1154 = vadd.f32 %v1114, %v1153
        %v1155 = vpop.f32.mrb[0].mxu0
        %v1156 = vpop.f32.mrb[0].mxu0
        %v1157 = vpop.f32.mrb[0].mxu0
        %1158 = vdwg.mxu0
        %1159 = vmatprep.subr.bf16.mxu0 0
        %1160 = vmatpush1.bf16.msra.mxu0 %v1015
        %1161 = vmatprep.subr.bf16.mxu0 0
        %1162 = vmatpush1.bf16.msra.mxu0 %v1016
        %1163 = vmatprep.subr.bf16.mxu0 0
        %1164 = vmatpush1.bf16.msra.mxu0 %v1017
        %1165 = vmatprep.subr.bf16.mxu0 0
        %1166 = vmatpush1.bf16.msra.mxu0 %v1018
        %1167 = vmatprep.subr.bf16.mxu0 0
        %1168 = vmatpush1.bf16.msra.mxu0 %v1019
        %1169 = vmatprep.subr.bf16.mxu0 0
        %1170 = vmatpush1.bf16.msra.mxu0 %v1020
        %1171 = vmatprep.subr.bf16.mxu0 0
        %1172 = vmatpush1.bf16.msra.mxu0 %v1021
        %1173 = vmatprep.subr.bf16.mxu0 0
        %1174 = vmatpush1.bf16.msra.mxu0 %v1022
        %1175 = vmatprep.subr.bf16.mxu0 0
        %1176 = vmatpush1.bf16.msra.mxu0 %v1023
        %1177 = vmatprep.subr.bf16.mxu0 0
        %1178 = vmatpush1.bf16.msra.mxu0 %v1024
        %1179 = vmatprep.subr.bf16.mxu0 0
        %1180 = vmatpush1.bf16.msra.mxu0 %v1025
        %1181 = vmatprep.subr.bf16.mxu0 0
        %1182 = vmatpush1.bf16.msra.mxu0 %v1026
        %1183 = vmatprep.subr.bf16.mxu0 0
        %1184 = vmatpush1.bf16.msra.mxu0 %v1027
        %1185 = vmatprep.subr.bf16.mxu0 0
        %1186 = vmatpush1.bf16.msra.mxu0 %v1028
        %1187 = vmatprep.subr.bf16.mxu0 0
        %1188 = vmatpush1.bf16.msra.mxu0 %v1029
        %1189 = vmatprep.subr.bf16.mxu0 0
        %1190 = vmatpush1.bf16.msra.mxu0 %v1030
        %1191 = vmatprep.mubr.bf16.mxu0 %v279
        %1192 = vmatmul.mubr.bf16.gmra.mrb[0].mxu0 %v278
        %v1193 = vpop.f32.mrb[0].mxu0
        %v1194 = vadd.f32 %v1154, %v1193
        %v1195 = vpop.f32.mrb[0].mxu0
        %v1196 = vpop.f32.mrb[0].mxu0
        %v1197 = vpop.f32.mrb[0].mxu0
        %1198 = vdwg.mxu0
        %v1199 = vmax.f32 %v689, %v1194
        %s1200 = scalar_lea.vmem %s1, 768
        %v1201 = vld [vmem:[%s1200] sm:$0xf]
        %v1202 = vld [vmem:[%s1200 + $0x4] sm:$0xf]
        %v1203 = vld [vmem:[%s1200 + $0x8] sm:$0xf]
        %v1204 = vld [vmem:[%s1200 + $0xc] sm:$0xf]
        %v1205 = vld [vmem:[%s1200 + $0x10] sm:$0xf]
        %v1206 = vld [vmem:[%s1200 + $0x14] sm:$0xf]
        %v1207 = vld [vmem:[%s1200 + $0x18] sm:$0xf]
        %v1208 = vld [vmem:[%s1200 + $0x1c] sm:$0xf]
        %v1209 = vld [vmem:[%s1200 + $0x20] sm:$0xf]
        %v1210 = vld [vmem:[%s1200 + $0x24] sm:$0xf]
        %v1211 = vld [vmem:[%s1200 + $0x28] sm:$0xf]
        %v1212 = vld [vmem:[%s1200 + $0x2c] sm:$0xf]
        %v1213 = vld [vmem:[%s1200 + $0x30] sm:$0xf]
        %v1214 = vld [vmem:[%s1200 + $0x34] sm:$0xf]
        %v1215 = vld [vmem:[%s1200 + $0x38] sm:$0xf]
        %v1216 = vld [vmem:[%s1200 + $0x3c] sm:$0xf]
        %v1217 = vld [vmem:[%s1200 + $0x40] sm:$0xf]
        %v1218 = vld [vmem:[%s1200 + $0x44] sm:$0xf]
        %v1219 = vld [vmem:[%s1200 + $0x48] sm:$0xf]
        %v1220 = vld [vmem:[%s1200 + $0x4c] sm:$0xf]
        %v1221 = vld [vmem:[%s1200 + $0x50] sm:$0xf]
        %v1222 = vld [vmem:[%s1200 + $0x54] sm:$0xf]
        %v1223 = vld [vmem:[%s1200 + $0x58] sm:$0xf]
        %v1224 = vld [vmem:[%s1200 + $0x5c] sm:$0xf]
        %v1225 = vld [vmem:[%s1200 + $0x60] sm:$0xf]
        %v1226 = vld [vmem:[%s1200 + $0x64] sm:$0xf]
        %v1227 = vld [vmem:[%s1200 + $0x68] sm:$0xf]
        %v1228 = vld [vmem:[%s1200 + $0x6c] sm:$0xf]
        %v1229 = vld [vmem:[%s1200 + $0x70] sm:$0xf]
        %v1230 = vld [vmem:[%s1200 + $0x74] sm:$0xf]
        %v1231 = vld [vmem:[%s1200 + $0x78] sm:$0xf]
        %v1232 = vld [vmem:[%s1200 + $0x7c] sm:$0xf]
        %v1233 = vld [vmem:[%s1200 + $0x80] sm:$0xf]
        %v1234 = vld [vmem:[%s1200 + $0x84] sm:$0xf]
        %v1235 = vld [vmem:[%s1200 + $0x88] sm:$0xf]
        %v1236 = vld [vmem:[%s1200 + $0x8c] sm:$0xf]
        %v1237 = vld [vmem:[%s1200 + $0x90] sm:$0xf]
        %v1238 = vld [vmem:[%s1200 + $0x94] sm:$0xf]
        %v1239 = vld [vmem:[%s1200 + $0x98] sm:$0xf]
        %v1240 = vld [vmem:[%s1200 + $0x9c] sm:$0xf]
        %v1241 = vld [vmem:[%s1200 + $0xa0] sm:$0xf]
        %v1242 = vld [vmem:[%s1200 + $0xa4] sm:$0xf]
        %v1243 = vld [vmem:[%s1200 + $0xa8] sm:$0xf]
        %v1244 = vld [vmem:[%s1200 + $0xac] sm:$0xf]
        %v1245 = vld [vmem:[%s1200 + $0xb0] sm:$0xf]
        %v1246 = vld [vmem:[%s1200 + $0xb4] sm:$0xf]
        %v1247 = vld [vmem:[%s1200 + $0xb8] sm:$0xf]
        %v1248 = vld [vmem:[%s1200 + $0xbc] sm:$0xf]
        %v1249 = vld [vmem:[%s1200 + $0xc0] sm:$0xf]
        %v1250 = vld [vmem:[%s1200 + $0xc4] sm:$0xf]
        %v1251 = vld [vmem:[%s1200 + $0xc8] sm:$0xf]
        %v1252 = vld [vmem:[%s1200 + $0xcc] sm:$0xf]
        %v1253 = vld [vmem:[%s1200 + $0xd0] sm:$0xf]
        %v1254 = vld [vmem:[%s1200 + $0xd4] sm:$0xf]
        %v1255 = vld [vmem:[%s1200 + $0xd8] sm:$0xf]
        %v1256 = vld [vmem:[%s1200 + $0xdc] sm:$0xf]
        %v1257 = vld [vmem:[%s1200 + $0xe0] sm:$0xf]
        %v1258 = vld [vmem:[%s1200 + $0xe4] sm:$0xf]
        %v1259 = vld [vmem:[%s1200 + $0xe8] sm:$0xf]
        %v1260 = vld [vmem:[%s1200 + $0xec] sm:$0xf]
        %v1261 = vld [vmem:[%s1200 + $0xf0] sm:$0xf]
        %v1262 = vld [vmem:[%s1200 + $0xf4] sm:$0xf]
        %v1263 = vld [vmem:[%s1200 + $0xf8] sm:$0xf]
        %v1264 = vld [vmem:[%s1200 + $0xfc] sm:$0xf]
        %v1265 = vld [vmem:[%s1200 + $0x100] sm:$0xf]
        %v1266 = vld [vmem:[%s1200 + $0x104] sm:$0xf]
        %v1267 = vld [vmem:[%s1200 + $0x108] sm:$0xf]
        %v1268 = vld [vmem:[%s1200 + $0x10c] sm:$0xf]
        %v1269 = vld [vmem:[%s1200 + $0x110] sm:$0xf]
        %v1270 = vld [vmem:[%s1200 + $0x114] sm:$0xf]
        %v1271 = vld [vmem:[%s1200 + $0x118] sm:$0xf]
        %v1272 = vld [vmem:[%s1200 + $0x11c] sm:$0xf]
        %v1273 = vld [vmem:[%s1200 + $0x120] sm:$0xf]
        %v1274 = vld [vmem:[%s1200 + $0x124] sm:$0xf]
        %v1275 = vld [vmem:[%s1200 + $0x128] sm:$0xf]
        %v1276 = vld [vmem:[%s1200 + $0x12c] sm:$0xf]
        %v1277 = vld [vmem:[%s1200 + $0x130] sm:$0xf]
        %v1278 = vld [vmem:[%s1200 + $0x134] sm:$0xf]
        %v1279 = vld [vmem:[%s1200 + $0x138] sm:$0xf]
        %v1280 = vld [vmem:[%s1200 + $0x13c] sm:$0xf]
        %v1281 = vld [vmem:[%s1200 + $0x140] sm:$0xf]
        %v1282 = vld [vmem:[%s1200 + $0x144] sm:$0xf]
        %v1283 = vld [vmem:[%s1200 + $0x148] sm:$0xf]
        %v1284 = vld [vmem:[%s1200 + $0x14c] sm:$0xf]
        %v1285 = vld [vmem:[%s1200 + $0x150] sm:$0xf]
        %v1286 = vld [vmem:[%s1200 + $0x154] sm:$0xf]
        %v1287 = vld [vmem:[%s1200 + $0x158] sm:$0xf]
        %v1288 = vld [vmem:[%s1200 + $0x15c] sm:$0xf]
        %v1289 = vld [vmem:[%s1200 + $0x160] sm:$0xf]
        %v1290 = vld [vmem:[%s1200 + $0x164] sm:$0xf]
        %v1291 = vld [vmem:[%s1200 + $0x168] sm:$0xf]
        %v1292 = vld [vmem:[%s1200 + $0x16c] sm:$0xf]
        %v1293 = vld [vmem:[%s1200 + $0x170] sm:$0xf]
        %v1294 = vld [vmem:[%s1200 + $0x174] sm:$0xf]
        %v1295 = vld [vmem:[%s1200 + $0x178] sm:$0xf]
        %v1296 = vld [vmem:[%s1200 + $0x17c] sm:$0xf]
        %v1393 = vunpack.c.l.b16 %v1201
        %v1394 = vunpack.c.l.b16 %v1202
        %v1395 = vunpack.c.l.b16 %v1203
        %v1396 = vunpack.c.l.b16 %v1204
        %v1397 = vunpack.c.l.b16 %v1205
        %v1398 = vunpack.c.l.b16 %v1206
        %v1399 = vunpack.c.l.b16 %v1207
        %v1400 = vunpack.c.l.b16 %v1208
        %v1401 = vunpack.c.l.b16 %v1209
        %v1402 = vunpack.c.l.b16 %v1210
        %v1403 = vunpack.c.l.b16 %v1211
        %v1404 = vunpack.c.l.b16 %v1212
        %v1405 = vunpack.c.l.b16 %v1213
        %v1406 = vunpack.c.l.b16 %v1214
        %v1407 = vunpack.c.l.b16 %v1215
        %v1408 = vunpack.c.l.b16 %v1216
        %v1409 = vunpack.c.l.b16 %v1217
        %v1410 = vunpack.c.l.b16 %v1218
        %v1411 = vunpack.c.l.b16 %v1219
        %v1412 = vunpack.c.l.b16 %v1220
        %v1413 = vunpack.c.l.b16 %v1221
        %v1414 = vunpack.c.l.b16 %v1222
        %v1415 = vunpack.c.l.b16 %v1223
        %v1416 = vunpack.c.l.b16 %v1224
        %v1417 = vunpack.c.l.b16 %v1225
        %v1418 = vunpack.c.l.b16 %v1226
        %v1419 = vunpack.c.l.b16 %v1227
        %v1420 = vunpack.c.l.b16 %v1228
        %v1421 = vunpack.c.l.b16 %v1229
        %v1422 = vunpack.c.l.b16 %v1230
        %v1423 = vunpack.c.l.b16 %v1231
        %v1424 = vunpack.c.l.b16 %v1232
        %v1425 = vunpack.c.l.b16 %v1233
        %v1426 = vunpack.c.l.b16 %v1234
        %v1427 = vunpack.c.l.b16 %v1235
        %v1428 = vunpack.c.l.b16 %v1236
        %v1429 = vunpack.c.l.b16 %v1237
        %v1430 = vunpack.c.l.b16 %v1238
        %v1431 = vunpack.c.l.b16 %v1239
        %v1432 = vunpack.c.l.b16 %v1240
        %v1433 = vunpack.c.l.b16 %v1241
        %v1434 = vunpack.c.l.b16 %v1242
        %v1435 = vunpack.c.l.b16 %v1243
        %v1436 = vunpack.c.l.b16 %v1244
        %v1437 = vunpack.c.l.b16 %v1245
        %v1438 = vunpack.c.l.b16 %v1246
        %v1439 = vunpack.c.l.b16 %v1247
        %v1440 = vunpack.c.l.b16 %v1248
        %v1441 = vunpack.c.l.b16 %v1249
        %v1442 = vunpack.c.l.b16 %v1250
        %v1443 = vunpack.c.l.b16 %v1251
        %v1444 = vunpack.c.l.b16 %v1252
        %v1445 = vunpack.c.l.b16 %v1253
        %v1446 = vunpack.c.l.b16 %v1254
        %v1447 = vunpack.c.l.b16 %v1255
        %v1448 = vunpack.c.l.b16 %v1256
        %v1449 = vunpack.c.l.b16 %v1257
        %v1450 = vunpack.c.l.b16 %v1258
        %v1451 = vunpack.c.l.b16 %v1259
        %v1452 = vunpack.c.l.b16 %v1260
        %v1453 = vunpack.c.l.b16 %v1261
        %v1454 = vunpack.c.l.b16 %v1262
        %v1455 = vunpack.c.l.b16 %v1263
        %v1456 = vunpack.c.l.b16 %v1264
        %v1457 = vunpack.c.l.b16 %v1265
        %v1458 = vunpack.c.l.b16 %v1266
        %v1459 = vunpack.c.l.b16 %v1267
        %v1460 = vunpack.c.l.b16 %v1268
        %v1461 = vunpack.c.l.b16 %v1269
        %v1462 = vunpack.c.l.b16 %v1270
        %v1463 = vunpack.c.l.b16 %v1271
        %v1464 = vunpack.c.l.b16 %v1272
        %v1465 = vunpack.c.l.b16 %v1273
        %v1466 = vunpack.c.l.b16 %v1274
        %v1467 = vunpack.c.l.b16 %v1275
        %v1468 = vunpack.c.l.b16 %v1276
        %v1469 = vunpack.c.l.b16 %v1277
        %v1470 = vunpack.c.l.b16 %v1278
        %v1471 = vunpack.c.l.b16 %v1279
        %v1472 = vunpack.c.l.b16 %v1280
        %v1473 = vunpack.c.l.b16 %v1281
        %v1474 = vunpack.c.l.b16 %v1282
        %v1475 = vunpack.c.l.b16 %v1283
        %v1476 = vunpack.c.l.b16 %v1284
        %v1477 = vunpack.c.l.b16 %v1285
        %v1478 = vunpack.c.l.b16 %v1286
        %v1479 = vunpack.c.l.b16 %v1287
        %v1480 = vunpack.c.l.b16 %v1288
        %v1481 = vunpack.c.l.b16 %v1289
        %v1482 = vunpack.c.l.b16 %v1290
        %v1483 = vunpack.c.l.b16 %v1291
        %v1484 = vunpack.c.l.b16 %v1292
        %v1485 = vunpack.c.l.b16 %v1293
        %v1486 = vunpack.c.l.b16 %v1294
        %v1487 = vunpack.c.l.b16 %v1295
        %v1488 = vunpack.c.l.b16 %v1296
        %v1489 = vpack.c.b16 %v1394, %v1393
        %v1490 = vpack.c.b16 %v1396, %v1395
        %v1491 = vpack.c.b16 %v1398, %v1397
        %v1492 = vpack.c.b16 %v1400, %v1399
        %v1493 = vpack.c.b16 %v1402, %v1401
        %v1494 = vpack.c.b16 %v1404, %v1403
        %v1495 = vpack.c.b16 %v1406, %v1405
        %v1496 = vpack.c.b16 %v1408, %v1407
        %v1497 = vpack.c.b16 %v1410, %v1409
        %v1498 = vpack.c.b16 %v1412, %v1411
        %v1499 = vpack.c.b16 %v1414, %v1413
        %v1500 = vpack.c.b16 %v1416, %v1415
        %v1501 = vpack.c.b16 %v1418, %v1417
        %v1502 = vpack.c.b16 %v1420, %v1419
        %v1503 = vpack.c.b16 %v1422, %v1421
        %v1504 = vpack.c.b16 %v1424, %v1423
        %v1505 = vpack.c.b16 %v1426, %v1425
        %v1506 = vpack.c.b16 %v1428, %v1427
        %v1507 = vpack.c.b16 %v1430, %v1429
        %v1508 = vpack.c.b16 %v1432, %v1431
        %v1509 = vpack.c.b16 %v1434, %v1433
        %v1510 = vpack.c.b16 %v1436, %v1435
        %v1511 = vpack.c.b16 %v1438, %v1437
        %v1512 = vpack.c.b16 %v1440, %v1439
        %v1513 = vpack.c.b16 %v1442, %v1441
        %v1514 = vpack.c.b16 %v1444, %v1443
        %v1515 = vpack.c.b16 %v1446, %v1445
        %v1516 = vpack.c.b16 %v1448, %v1447
        %v1517 = vpack.c.b16 %v1450, %v1449
        %v1518 = vpack.c.b16 %v1452, %v1451
        %v1519 = vpack.c.b16 %v1454, %v1453
        %v1520 = vpack.c.b16 %v1456, %v1455
        %v1521 = vpack.c.b16 %v1458, %v1457
        %v1522 = vpack.c.b16 %v1460, %v1459
        %v1523 = vpack.c.b16 %v1462, %v1461
        %v1524 = vpack.c.b16 %v1464, %v1463
        %v1525 = vpack.c.b16 %v1466, %v1465
        %v1526 = vpack.c.b16 %v1468, %v1467
        %v1527 = vpack.c.b16 %v1470, %v1469
        %v1528 = vpack.c.b16 %v1472, %v1471
        %v1529 = vpack.c.b16 %v1474, %v1473
        %v1530 = vpack.c.b16 %v1476, %v1475
        %v1531 = vpack.c.b16 %v1478, %v1477
        %v1532 = vpack.c.b16 %v1480, %v1479
        %v1533 = vpack.c.b16 %v1482, %v1481
        %v1534 = vpack.c.b16 %v1484, %v1483
        %v1535 = vpack.c.b16 %v1486, %v1485
        %v1536 = vpack.c.b16 %v1488, %v1487
        %1585 = vmatprep.subr.bf16.mxu0 0
        %1586 = vmatpush1.bf16.msra.mxu0 %v1489
        %1587 = vmatprep.subr.bf16.mxu0 0
        %1588 = vmatpush1.bf16.msra.mxu0 %v1490
        %1589 = vmatprep.subr.bf16.mxu0 0
        %1590 = vmatpush1.bf16.msra.mxu0 %v1491
        %1591 = vmatprep.subr.bf16.mxu0 0
        %1592 = vmatpush1.bf16.msra.mxu0 %v1492
        %1593 = vmatprep.subr.bf16.mxu0 0
        %1594 = vmatpush1.bf16.msra.mxu0 %v1493
        %1595 = vmatprep.subr.bf16.mxu0 0
        %1596 = vmatpush1.bf16.msra.mxu0 %v1494
        %1597 = vmatprep.subr.bf16.mxu0 0
        %1598 = vmatpush1.bf16.msra.mxu0 %v1495
        %1599 = vmatprep.subr.bf16.mxu0 0
        %1600 = vmatpush1.bf16.msra.mxu0 %v1496
        %1601 = vmatprep.subr.bf16.mxu0 0
        %1602 = vmatpush1.bf16.msra.mxu0 %v1497
        %1603 = vmatprep.subr.bf16.mxu0 0
        %1604 = vmatpush1.bf16.msra.mxu0 %v1498
        %1605 = vmatprep.subr.bf16.mxu0 0
        %1606 = vmatpush1.bf16.msra.mxu0 %v1499
        %1607 = vmatprep.subr.bf16.mxu0 0
        %1608 = vmatpush1.bf16.msra.mxu0 %v1500
        %1609 = vmatprep.subr.bf16.mxu0 0
        %1610 = vmatpush1.bf16.msra.mxu0 %v1501
        %1611 = vmatprep.subr.bf16.mxu0 0
        %1612 = vmatpush1.bf16.msra.mxu0 %v1502
        %1613 = vmatprep.subr.bf16.mxu0 0
        %1614 = vmatpush1.bf16.msra.mxu0 %v1503
        %1615 = vmatprep.subr.bf16.mxu0 0
        %1616 = vmatpush1.bf16.msra.mxu0 %v1504
        %1617 = vmatprep.mubr.bf16.mxu0 %v275
        %1618 = vmatmul.mubr.bf16.gmra.mrb[0].mxu0 %v274
        %v1619 = vpop.f32.mrb[0].mxu0
        %v1620 = vadd.f32 0.0, %v1619
        %v1621 = vpop.f32.mrb[0].mxu0
        %v1622 = vpop.f32.mrb[0].mxu0
        %v1623 = vpop.f32.mrb[0].mxu0
        %1624 = vdwg.mxu0
        %1625 = vmatprep.subr.bf16.mxu0 0
        %1626 = vmatpush1.bf16.msra.mxu0 %v1505
        %1627 = vmatprep.subr.bf16.mxu0 0
        %1628 = vmatpush1.bf16.msra.mxu0 %v1506
        %1629 = vmatprep.subr.bf16.mxu0 0
        %1630 = vmatpush1.bf16.msra.mxu0 %v1507
        %1631 = vmatprep.subr.bf16.mxu0 0
        %1632 = vmatpush1.bf16.msra.mxu0 %v1508
        %1633 = vmatprep.subr.bf16.mxu0 0
        %1634 = vmatpush1.bf16.msra.mxu0 %v1509
        %1635 = vmatprep.subr.bf16.mxu0 0
        %1636 = vmatpush1.bf16.msra.mxu0 %v1510
        %1637 = vmatprep.subr.bf16.mxu0 0
        %1638 = vmatpush1.bf16.msra.mxu0 %v1511
        %1639 = vmatprep.subr.bf16.mxu0 0
        %1640 = vmatpush1.bf16.msra.mxu0 %v1512
        %1641 = vmatprep.subr.bf16.mxu0 0
        %1642 = vmatpush1.bf16.msra.mxu0 %v1513
        %1643 = vmatprep.subr.bf16.mxu0 0
        %1644 = vmatpush1.bf16.msra.mxu0 %v1514
        %1645 = vmatprep.subr.bf16.mxu0 0
        %1646 = vmatpush1.bf16.msra.mxu0 %v1515
        %1647 = vmatprep.subr.bf16.mxu0 0
        %1648 = vmatpush1.bf16.msra.mxu0 %v1516
        %1649 = vmatprep.subr.bf16.mxu0 0
        %1650 = vmatpush1.bf16.msra.mxu0 %v1517
        %1651 = vmatprep.subr.bf16.mxu0 0
        %1652 = vmatpush1.bf16.msra.mxu0 %v1518
        %1653 = vmatprep.subr.bf16.mxu0 0
        %1654 = vmatpush1.bf16.msra.mxu0 %v1519
        %1655 = vmatprep.subr.bf16.mxu0 0
        %1656 = vmatpush1.bf16.msra.mxu0 %v1520
        %1657 = vmatprep.mubr.bf16.mxu0 %v277
        %1658 = vmatmul.mubr.bf16.gmra.mrb[0].mxu0 %v276
        %v1659 = vpop.f32.mrb[0].mxu0
        %v1660 = vadd.f32 %v1620, %v1659
        %v1661 = vpop.f32.mrb[0].mxu0
        %v1662 = vpop.f32.mrb[0].mxu0
        %v1663 = vpop.f32.mrb[0].mxu0
        %1664 = vdwg.mxu0
        %1665 = vmatprep.subr.bf16.mxu0 0
        %1666 = vmatpush1.bf16.msra.mxu0 %v1521
        %1667 = vmatprep.subr.bf16.mxu0 0
        %1668 = vmatpush1.bf16.msra.mxu0 %v1522
        %1669 = vmatprep.subr.bf16.mxu0 0
        %1670 = vmatpush1.bf16.msra.mxu0 %v1523
        %1671 = vmatprep.subr.bf16.mxu0 0
        %1672 = vmatpush1.bf16.msra.mxu0 %v1524
        %1673 = vmatprep.subr.bf16.mxu0 0
        %1674 = vmatpush1.bf16.msra.mxu0 %v1525
        %1675 = vmatprep.subr.bf16.mxu0 0
        %1676 = vmatpush1.bf16.msra.mxu0 %v1526
        %1677 = vmatprep.subr.bf16.mxu0 0
        %1678 = vmatpush1.bf16.msra.mxu0 %v1527
        %1679 = vmatprep.subr.bf16.mxu0 0
        %1680 = vmatpush1.bf16.msra.mxu0 %v1528
        %1681 = vmatprep.subr.bf16.mxu0 0
        %1682 = vmatpush1.bf16.msra.mxu0 %v1529
        %1683 = vmatprep.subr.bf16.mxu0 0
        %1684 = vmatpush1.bf16.msra.mxu0 %v1530
        %1685 = vmatprep.subr.bf16.mxu0 0
        %1686 = vmatpush1.bf16.msra.mxu0 %v1531
        %1687 = vmatprep.subr.bf16.mxu0 0
        %1688 = vmatpush1.bf16.msra.mxu0 %v1532
        %1689 = vmatprep.subr.bf16.mxu0 0
        %1690 = vmatpush1.bf16.msra.mxu0 %v1533
        %1691 = vmatprep.subr.bf16.mxu0 0
        %1692 = vmatpush1.bf16.msra.mxu0 %v1534
        %1693 = vmatprep.subr.bf16.mxu0 0
        %1694 = vmatpush1.bf16.msra.mxu0 %v1535
        %1695 = vmatprep.subr.bf16.mxu0 0
        %1696 = vmatpush1.bf16.msra.mxu0 %v1536
        %1697 = vmatprep.mubr.bf16.mxu0 %v279
        %1698 = vmatmul.mubr.bf16.gmra.mrb[0].mxu0 %v278
        %v1699 = vpop.f32.mrb[0].mxu0
        %v1700 = vadd.f32 %v1660, %v1699
        %v1701 = vpop.f32.mrb[0].mxu0
        %v1702 = vpop.f32.mrb[0].mxu0
        %v1703 = vpop.f32.mrb[0].mxu0
        %1704 = vdwg.mxu0
        %v1705 = vmax.f32 %v1199, %v1700
        %s1706 = scalar_lea.vmem %s1, 1152
        %v1707 = vld [vmem:[%s1706] sm:$0xf]
        %v1708 = vld [vmem:[%s1706 + $0x4] sm:$0xf]
        %v1709 = vld [vmem:[%s1706 + $0x8] sm:$0xf]
        %v1710 = vld [vmem:[%s1706 + $0xc] sm:$0xf]
        %v1711 = vld [vmem:[%s1706 + $0x10] sm:$0xf]
        %v1712 = vld [vmem:[%s1706 + $0x14] sm:$0xf]
        %v1713 = vld [vmem:[%s1706 + $0x18] sm:$0xf]
        %v1714 = vld [vmem:[%s1706 + $0x1c] sm:$0xf]
        %v1715 = vld [vmem:[%s1706 + $0x20] sm:$0xf]
        %v1716 = vld [vmem:[%s1706 + $0x24] sm:$0xf]
        %v1717 = vld [vmem:[%s1706 + $0x28] sm:$0xf]
        %v1718 = vld [vmem:[%s1706 + $0x2c] sm:$0xf]
        %v1719 = vld [vmem:[%s1706 + $0x30] sm:$0xf]
        %v1720 = vld [vmem:[%s1706 + $0x34] sm:$0xf]
        %v1721 = vld [vmem:[%s1706 + $0x38] sm:$0xf]
        %v1722 = vld [vmem:[%s1706 + $0x3c] sm:$0xf]
        %v1723 = vld [vmem:[%s1706 + $0x40] sm:$0xf]
        %v1724 = vld [vmem:[%s1706 + $0x44] sm:$0xf]
        %v1725 = vld [vmem:[%s1706 + $0x48] sm:$0xf]
        %v1726 = vld [vmem:[%s1706 + $0x4c] sm:$0xf]
        %v1727 = vld [vmem:[%s1706 + $0x50] sm:$0xf]
        %v1728 = vld [vmem:[%s1706 + $0x54] sm:$0xf]
        %v1729 = vld [vmem:[%s1706 + $0x58] sm:$0xf]
        %v1730 = vld [vmem:[%s1706 + $0x5c] sm:$0xf]
        %v1731 = vld [vmem:[%s1706 + $0x60] sm:$0xf]
        %v1732 = vld [vmem:[%s1706 + $0x64] sm:$0xf]
        %v1733 = vld [vmem:[%s1706 + $0x68] sm:$0xf]
        %v1734 = vld [vmem:[%s1706 + $0x6c] sm:$0xf]
        %v1735 = vld [vmem:[%s1706 + $0x70] sm:$0xf]
        %v1736 = vld [vmem:[%s1706 + $0x74] sm:$0xf]
        %v1737 = vld [vmem:[%s1706 + $0x78] sm:$0xf]
        %v1738 = vld [vmem:[%s1706 + $0x7c] sm:$0xf]
        %v1739 = vld [vmem:[%s1706 + $0x80] sm:$0xf]
        %v1740 = vld [vmem:[%s1706 + $0x84] sm:$0xf]
        %v1741 = vld [vmem:[%s1706 + $0x88] sm:$0xf]
        %v1742 = vld [vmem:[%s1706 + $0x8c] sm:$0xf]
        %v1743 = vld [vmem:[%s1706 + $0x90] sm:$0xf]
        %v1744 = vld [vmem:[%s1706 + $0x94] sm:$0xf]
        %v1745 = vld [vmem:[%s1706 + $0x98] sm:$0xf]
        %v1746 = vld [vmem:[%s1706 + $0x9c] sm:$0xf]
        %v1747 = vld [vmem:[%s1706 + $0xa0] sm:$0xf]
        %v1748 = vld [vmem:[%s1706 + $0xa4] sm:$0xf]
        %v1749 = vld [vmem:[%s1706 + $0xa8] sm:$0xf]
        %v1750 = vld [vmem:[%s1706 + $0xac] sm:$0xf]
        %v1751 = vld [vmem:[%s1706 + $0xb0] sm:$0xf]
        %v1752 = vld [vmem:[%s1706 + $0xb4] sm:$0xf]
        %v1753 = vld [vmem:[%s1706 + $0xb8] sm:$0xf]
        %v1754 = vld [vmem:[%s1706 + $0xbc] sm:$0xf]
        %v1755 = vld [vmem:[%s1706 + $0xc0] sm:$0xf]
        %v1756 = vld [vmem:[%s1706 + $0xc4] sm:$0xf]
        %v1757 = vld [vmem:[%s1706 + $0xc8] sm:$0xf]
        %v1758 = vld [vmem:[%s1706 + $0xcc] sm:$0xf]
        %v1759 = vld [vmem:[%s1706 + $0xd0] sm:$0xf]
        %v1760 = vld [vmem:[%s1706 + $0xd4] sm:$0xf]
        %v1761 = vld [vmem:[%s1706 + $0xd8] sm:$0xf]
        %v1762 = vld [vmem:[%s1706 + $0xdc] sm:$0xf]
        %v1763 = vld [vmem:[%s1706 + $0xe0] sm:$0xf]
        %v1764 = vld [vmem:[%s1706 + $0xe4] sm:$0xf]
        %v1765 = vld [vmem:[%s1706 + $0xe8] sm:$0xf]
        %v1766 = vld [vmem:[%s1706 + $0xec] sm:$0xf]
        %v1767 = vld [vmem:[%s1706 + $0xf0] sm:$0xf]
        %v1768 = vld [vmem:[%s1706 + $0xf4] sm:$0xf]
        %v1769 = vld [vmem:[%s1706 + $0xf8] sm:$0xf]
        %v1770 = vld [vmem:[%s1706 + $0xfc] sm:$0xf]
        %v1771 = vld [vmem:[%s1706 + $0x100] sm:$0xf]
        %v1772 = vld [vmem:[%s1706 + $0x104] sm:$0xf]
        %v1773 = vld [vmem:[%s1706 + $0x108] sm:$0xf]
        %v1774 = vld [vmem:[%s1706 + $0x10c] sm:$0xf]
        %v1775 = vld [vmem:[%s1706 + $0x110] sm:$0xf]
        %v1776 = vld [vmem:[%s1706 + $0x114] sm:$0xf]
        %v1777 = vld [vmem:[%s1706 + $0x118] sm:$0xf]
        %v1778 = vld [vmem:[%s1706 + $0x11c] sm:$0xf]
        %v1779 = vld [vmem:[%s1706 + $0x120] sm:$0xf]
        %v1780 = vld [vmem:[%s1706 + $0x124] sm:$0xf]
        %v1781 = vld [vmem:[%s1706 + $0x128] sm:$0xf]
        %v1782 = vld [vmem:[%s1706 + $0x12c] sm:$0xf]
        %v1783 = vld [vmem:[%s1706 + $0x130] sm:$0xf]
        %v1784 = vld [vmem:[%s1706 + $0x134] sm:$0xf]
        %v1785 = vld [vmem:[%s1706 + $0x138] sm:$0xf]
        %v1786 = vld [vmem:[%s1706 + $0x13c] sm:$0xf]
        %v1787 = vld [vmem:[%s1706 + $0x140] sm:$0xf]
        %v1788 = vld [vmem:[%s1706 + $0x144] sm:$0xf]
        %v1789 = vld [vmem:[%s1706 + $0x148] sm:$0xf]
        %v1790 = vld [vmem:[%s1706 + $0x14c] sm:$0xf]
        %v1791 = vld [vmem:[%s1706 + $0x150] sm:$0xf]
        %v1792 = vld [vmem:[%s1706 + $0x154] sm:$0xf]
        %v1793 = vld [vmem:[%s1706 + $0x158] sm:$0xf]
        %v1794 = vld [vmem:[%s1706 + $0x15c] sm:$0xf]
        %v1795 = vld [vmem:[%s1706 + $0x160] sm:$0xf]
        %v1796 = vld [vmem:[%s1706 + $0x164] sm:$0xf]
        %v1797 = vld [vmem:[%s1706 + $0x168] sm:$0xf]
        %v1798 = vld [vmem:[%s1706 + $0x16c] sm:$0xf]
        %v1799 = vld [vmem:[%s1706 + $0x170] sm:$0xf]
        %v1800 = vld [vmem:[%s1706 + $0x174] sm:$0xf]
        %v1801 = vld [vmem:[%s1706 + $0x178] sm:$0xf]
        %v1802 = vld [vmem:[%s1706 + $0x17c] sm:$0xf]
        %v1899 = vunpack.c.l.b16 %v1707
        %v1900 = vunpack.c.l.b16 %v1708
        %v1901 = vunpack.c.l.b16 %v1709
        %v1902 = vunpack.c.l.b16 %v1710
        %v1903 = vunpack.c.l.b16 %v1711
        %v1904 = vunpack.c.l.b16 %v1712
        %v1905 = vunpack.c.l.b16 %v1713
        %v1906 = vunpack.c.l.b16 %v1714
        %v1907 = vunpack.c.l.b16 %v1715
        %v1908 = vunpack.c.l.b16 %v1716
        %v1909 = vunpack.c.l.b16 %v1717
        %v1910 = vunpack.c.l.b16 %v1718
        %v1911 = vunpack.c.l.b16 %v1719
        %v1912 = vunpack.c.l.b16 %v1720
        %v1913 = vunpack.c.l.b16 %v1721
        %v1914 = vunpack.c.l.b16 %v1722
        %v1915 = vunpack.c.l.b16 %v1723
        %v1916 = vunpack.c.l.b16 %v1724
        %v1917 = vunpack.c.l.b16 %v1725
        %v1918 = vunpack.c.l.b16 %v1726
        %v1919 = vunpack.c.l.b16 %v1727
        %v1920 = vunpack.c.l.b16 %v1728
        %v1921 = vunpack.c.l.b16 %v1729
        %v1922 = vunpack.c.l.b16 %v1730
        %v1923 = vunpack.c.l.b16 %v1731
        %v1924 = vunpack.c.l.b16 %v1732
        %v1925 = vunpack.c.l.b16 %v1733
        %v1926 = vunpack.c.l.b16 %v1734
        %v1927 = vunpack.c.l.b16 %v1735
        %v1928 = vunpack.c.l.b16 %v1736
        %v1929 = vunpack.c.l.b16 %v1737
        %v1930 = vunpack.c.l.b16 %v1738
        %v1931 = vunpack.c.l.b16 %v1739
        %v1932 = vunpack.c.l.b16 %v1740
        %v1933 = vunpack.c.l.b16 %v1741
        %v1934 = vunpack.c.l.b16 %v1742
        %v1935 = vunpack.c.l.b16 %v1743
        %v1936 = vunpack.c.l.b16 %v1744
        %v1937 = vunpack.c.l.b16 %v1745
        %v1938 = vunpack.c.l.b16 %v1746
        %v1939 = vunpack.c.l.b16 %v1747
        %v1940 = vunpack.c.l.b16 %v1748
        %v1941 = vunpack.c.l.b16 %v1749
        %v1942 = vunpack.c.l.b16 %v1750
        %v1943 = vunpack.c.l.b16 %v1751
        %v1944 = vunpack.c.l.b16 %v1752
        %v1945 = vunpack.c.l.b16 %v1753
        %v1946 = vunpack.c.l.b16 %v1754
        %v1947 = vunpack.c.l.b16 %v1755
        %v1948 = vunpack.c.l.b16 %v1756
        %v1949 = vunpack.c.l.b16 %v1757
        %v1950 = vunpack.c.l.b16 %v1758
        %v1951 = vunpack.c.l.b16 %v1759
        %v1952 = vunpack.c.l.b16 %v1760
        %v1953 = vunpack.c.l.b16 %v1761
        %v1954 = vunpack.c.l.b16 %v1762
        %v1955 = vunpack.c.l.b16 %v1763
        %v1956 = vunpack.c.l.b16 %v1764
        %v1957 = vunpack.c.l.b16 %v1765
        %v1958 = vunpack.c.l.b16 %v1766
        %v1959 = vunpack.c.l.b16 %v1767
        %v1960 = vunpack.c.l.b16 %v1768
        %v1961 = vunpack.c.l.b16 %v1769
        %v1962 = vunpack.c.l.b16 %v1770
        %v1963 = vunpack.c.l.b16 %v1771
        %v1964 = vunpack.c.l.b16 %v1772
        %v1965 = vunpack.c.l.b16 %v1773
        %v1966 = vunpack.c.l.b16 %v1774
        %v1967 = vunpack.c.l.b16 %v1775
        %v1968 = vunpack.c.l.b16 %v1776
        %v1969 = vunpack.c.l.b16 %v1777
        %v1970 = vunpack.c.l.b16 %v1778
        %v1971 = vunpack.c.l.b16 %v1779
        %v1972 = vunpack.c.l.b16 %v1780
        %v1973 = vunpack.c.l.b16 %v1781
        %v1974 = vunpack.c.l.b16 %v1782
        %v1975 = vunpack.c.l.b16 %v1783
        %v1976 = vunpack.c.l.b16 %v1784
        %v1977 = vunpack.c.l.b16 %v1785
        %v1978 = vunpack.c.l.b16 %v1786
        %v1979 = vunpack.c.l.b16 %v1787
        %v1980 = vunpack.c.l.b16 %v1788
        %v1981 = vunpack.c.l.b16 %v1789
        %v1982 = vunpack.c.l.b16 %v1790
        %v1983 = vunpack.c.l.b16 %v1791
        %v1984 = vunpack.c.l.b16 %v1792
        %v1985 = vunpack.c.l.b16 %v1793
        %v1986 = vunpack.c.l.b16 %v1794
        %v1987 = vunpack.c.l.b16 %v1795
        %v1988 = vunpack.c.l.b16 %v1796
        %v1989 = vunpack.c.l.b16 %v1797
        %v1990 = vunpack.c.l.b16 %v1798
        %v1991 = vunpack.c.l.b16 %v1799
        %v1992 = vunpack.c.l.b16 %v1800
        %v1993 = vunpack.c.l.b16 %v1801
        %v1994 = vunpack.c.l.b16 %v1802
        %v1995 = vpack.c.b16 %v1900, %v1899
        %v1996 = vpack.c.b16 %v1902, %v1901
        %v1997 = vpack.c.b16 %v1904, %v1903
        %v1998 = vpack.c.b16 %v1906, %v1905
        %v1999 = vpack.c.b16 %v1908, %v1907
        %v2000 = vpack.c.b16 %v1910, %v1909
        %v2001 = vpack.c.b16 %v1912, %v1911
        %v2002 = vpack.c.b16 %v1914, %v1913
        %v2003 = vpack.c.b16 %v1916, %v1915
        %v2004 = vpack.c.b16 %v1918, %v1917
        %v2005 = vpack.c.b16 %v1920, %v1919
        %v2006 = vpack.c.b16 %v1922, %v1921
        %v2007 = vpack.c.b16 %v1924, %v1923
        %v2008 = vpack.c.b16 %v1926, %v1925
        %v2009 = vpack.c.b16 %v1928, %v1927
        %v2010 = vpack.c.b16 %v1930, %v1929
        %v2011 = vpack.c.b16 %v1932, %v1931
        %v2012 = vpack.c.b16 %v1934, %v1933
        %v2013 = vpack.c.b16 %v1936, %v1935
        %v2014 = vpack.c.b16 %v1938, %v1937
        %v2015 = vpack.c.b16 %v1940, %v1939
        %v2016 = vpack.c.b16 %v1942, %v1941
        %v2017 = vpack.c.b16 %v1944, %v1943
        %v2018 = vpack.c.b16 %v1946, %v1945
        %v2019 = vpack.c.b16 %v1948, %v1947
        %v2020 = vpack.c.b16 %v1950, %v1949
        %v2021 = vpack.c.b16 %v1952, %v1951
        %v2022 = vpack.c.b16 %v1954, %v1953
        %v2023 = vpack.c.b16 %v1956, %v1955
        %v2024 = vpack.c.b16 %v1958, %v1957
        %v2025 = vpack.c.b16 %v1960, %v1959
        %v2026 = vpack.c.b16 %v1962, %v1961
        %v2027 = vpack.c.b16 %v1964, %v1963
        %v2028 = vpack.c.b16 %v1966, %v1965
        %v2029 = vpack.c.b16 %v1968, %v1967
        %v2030 = vpack.c.b16 %v1970, %v1969
        %v2031 = vpack.c.b16 %v1972, %v1971
        %v2032 = vpack.c.b16 %v1974, %v1973
        %v2033 = vpack.c.b16 %v1976, %v1975
        %v2034 = vpack.c.b16 %v1978, %v1977
        %v2035 = vpack.c.b16 %v1980, %v1979
        %v2036 = vpack.c.b16 %v1982, %v1981
        %v2037 = vpack.c.b16 %v1984, %v1983
        %v2038 = vpack.c.b16 %v1986, %v1985
        %v2039 = vpack.c.b16 %v1988, %v1987
        %v2040 = vpack.c.b16 %v1990, %v1989
        %v2041 = vpack.c.b16 %v1992, %v1991
        %v2042 = vpack.c.b16 %v1994, %v1993
        %2091 = vmatprep.subr.bf16.mxu0 0
        %2092 = vmatpush1.bf16.msra.mxu0 %v1995
        %2093 = vmatprep.subr.bf16.mxu0 0
        %2094 = vmatpush1.bf16.msra.mxu0 %v1996
        %2095 = vmatprep.subr.bf16.mxu0 0
        %2096 = vmatpush1.bf16.msra.mxu0 %v1997
        %2097 = vmatprep.subr.bf16.mxu0 0
        %2098 = vmatpush1.bf16.msra.mxu0 %v1998
        %2099 = vmatprep.subr.bf16.mxu0 0
        %2100 = vmatpush1.bf16.msra.mxu0 %v1999
        %2101 = vmatprep.subr.bf16.mxu0 0
        %2102 = vmatpush1.bf16.msra.mxu0 %v2000
        %2103 = vmatprep.subr.bf16.mxu0 0
        %2104 = vmatpush1.bf16.msra.mxu0 %v2001
        %2105 = vmatprep.subr.bf16.mxu0 0
        %2106 = vmatpush1.bf16.msra.mxu0 %v2002
        %2107 = vmatprep.subr.bf16.mxu0 0
        %2108 = vmatpush1.bf16.msra.mxu0 %v2003
        %2109 = vmatprep.subr.bf16.mxu0 0
        %2110 = vmatpush1.bf16.msra.mxu0 %v2004
        %2111 = vmatprep.subr.bf16.mxu0 0
        %2112 = vmatpush1.bf16.msra.mxu0 %v2005
        %2113 = vmatprep.subr.bf16.mxu0 0
        %2114 = vmatpush1.bf16.msra.mxu0 %v2006
        %2115 = vmatprep.subr.bf16.mxu0 0
        %2116 = vmatpush1.bf16.msra.mxu0 %v2007
        %2117 = vmatprep.subr.bf16.mxu0 0
        %2118 = vmatpush1.bf16.msra.mxu0 %v2008
        %2119 = vmatprep.subr.bf16.mxu0 0
        %2120 = vmatpush1.bf16.msra.mxu0 %v2009
        %2121 = vmatprep.subr.bf16.mxu0 0
        %2122 = vmatpush1.bf16.msra.mxu0 %v2010
        %2123 = vmatprep.mubr.bf16.mxu0 %v275
        %2124 = vmatmul.mubr.bf16.gmra.mrb[0].mxu0 %v274
        %v2125 = vpop.f32.mrb[0].mxu0
        %v2126 = vadd.f32 0.0, %v2125
        %v2127 = vpop.f32.mrb[0].mxu0
        %v2128 = vpop.f32.mrb[0].mxu0
        %v2129 = vpop.f32.mrb[0].mxu0
        %2130 = vdwg.mxu0
        %2131 = vmatprep.subr.bf16.mxu0 0
        %2132 = vmatpush1.bf16.msra.mxu0 %v2011
        %2133 = vmatprep.subr.bf16.mxu0 0
        %2134 = vmatpush1.bf16.msra.mxu0 %v2012
        %2135 = vmatprep.subr.bf16.mxu0 0
        %2136 = vmatpush1.bf16.msra.mxu0 %v2013
        %2137 = vmatprep.subr.bf16.mxu0 0
        %2138 = vmatpush1.bf16.msra.mxu0 %v2014
        %2139 = vmatprep.subr.bf16.mxu0 0
        %2140 = vmatpush1.bf16.msra.mxu0 %v2015
        %2141 = vmatprep.subr.bf16.mxu0 0
        %2142 = vmatpush1.bf16.msra.mxu0 %v2016
        %2143 = vmatprep.subr.bf16.mxu0 0
        %2144 = vmatpush1.bf16.msra.mxu0 %v2017
        %2145 = vmatprep.subr.bf16.mxu0 0
        %2146 = vmatpush1.bf16.msra.mxu0 %v2018
        %2147 = vmatprep.subr.bf16.mxu0 0
        %2148 = vmatpush1.bf16.msra.mxu0 %v2019
        %2149 = vmatprep.subr.bf16.mxu0 0
        %2150 = vmatpush1.bf16.msra.mxu0 %v2020
        %2151 = vmatprep.subr.bf16.mxu0 0
        %2152 = vmatpush1.bf16.msra.mxu0 %v2021
        %2153 = vmatprep.subr.bf16.mxu0 0
        %2154 = vmatpush1.bf16.msra.mxu0 %v2022
        %2155 = vmatprep.subr.bf16.mxu0 0
        %2156 = vmatpush1.bf16.msra.mxu0 %v2023
        %2157 = vmatprep.subr.bf16.mxu0 0
        %2158 = vmatpush1.bf16.msra.mxu0 %v2024
        %2159 = vmatprep.subr.bf16.mxu0 0
        %2160 = vmatpush1.bf16.msra.mxu0 %v2025
        %2161 = vmatprep.subr.bf16.mxu0 0
        %2162 = vmatpush1.bf16.msra.mxu0 %v2026
        %2163 = vmatprep.mubr.bf16.mxu0 %v277
        %2164 = vmatmul.mubr.bf16.gmra.mrb[0].mxu0 %v276
        %v2165 = vpop.f32.mrb[0].mxu0
        %v2166 = vadd.f32 %v2126, %v2165
        %v2167 = vpop.f32.mrb[0].mxu0
        %v2168 = vpop.f32.mrb[0].mxu0
        %v2169 = vpop.f32.mrb[0].mxu0
        %2170 = vdwg.mxu0
        %2171 = vmatprep.subr.bf16.mxu0 0
        %2172 = vmatpush1.bf16.msra.mxu0 %v2027
        %2173 = vmatprep.subr.bf16.mxu0 0
        %2174 = vmatpush1.bf16.msra.mxu0 %v2028
        %2175 = vmatprep.subr.bf16.mxu0 0
        %2176 = vmatpush1.bf16.msra.mxu0 %v2029
        %2177 = vmatprep.subr.bf16.mxu0 0
        %2178 = vmatpush1.bf16.msra.mxu0 %v2030
        %2179 = vmatprep.subr.bf16.mxu0 0
        %2180 = vmatpush1.bf16.msra.mxu0 %v2031
        %2181 = vmatprep.subr.bf16.mxu0 0
        %2182 = vmatpush1.bf16.msra.mxu0 %v2032
        %2183 = vmatprep.subr.bf16.mxu0 0
        %2184 = vmatpush1.bf16.msra.mxu0 %v2033
        %2185 = vmatprep.subr.bf16.mxu0 0
        %2186 = vmatpush1.bf16.msra.mxu0 %v2034
        %2187 = vmatprep.subr.bf16.mxu0 0
        %2188 = vmatpush1.bf16.msra.mxu0 %v2035
        %2189 = vmatprep.subr.bf16.mxu0 0
        %2190 = vmatpush1.bf16.msra.mxu0 %v2036
        %2191 = vmatprep.subr.bf16.mxu0 0
        %2192 = vmatpush1.bf16.msra.mxu0 %v2037
        %2193 = vmatprep.subr.bf16.mxu0 0
        %2194 = vmatpush1.bf16.msra.mxu0 %v2038
        %2195 = vmatprep.subr.bf16.mxu0 0
        %2196 = vmatpush1.bf16.msra.mxu0 %v2039
        %2197 = vmatprep.subr.bf16.mxu0 0
        %2198 = vmatpush1.bf16.msra.mxu0 %v2040
        %2199 = vmatprep.subr.bf16.mxu0 0
        %2200 = vmatpush1.bf16.msra.mxu0 %v2041
        %2201 = vmatprep.subr.bf16.mxu0 0
        %2202 = vmatpush1.bf16.msra.mxu0 %v2042
        %2203 = vmatprep.mubr.bf16.mxu0 %v279
        %2204 = vmatmul.mubr.bf16.gmra.mrb[0].mxu0 %v278
        %v2205 = vpop.f32.mrb[0].mxu0
        %v2206 = vadd.f32 %v2166, %v2205
        %v2207 = vpop.f32.mrb[0].mxu0
        %v2208 = vpop.f32.mrb[0].mxu0
        %v2209 = vpop.f32.mrb[0].mxu0
        %2210 = vdwg.mxu0
        %v2211 = vmax.f32 %v1705, %v2206
        %s2212 = scalar_lea.vmem %s1, 1536
        %v2213 = vld [vmem:[%s2212] sm:$0xf]
        %v2214 = vld [vmem:[%s2212 + $0x4] sm:$0xf]
        %v2215 = vld [vmem:[%s2212 + $0x8] sm:$0xf]
        %v2216 = vld [vmem:[%s2212 + $0xc] sm:$0xf]
        %v2217 = vld [vmem:[%s2212 + $0x10] sm:$0xf]
        %v2218 = vld [vmem:[%s2212 + $0x14] sm:$0xf]
        %v2219 = vld [vmem:[%s2212 + $0x18] sm:$0xf]
        %v2220 = vld [vmem:[%s2212 + $0x1c] sm:$0xf]
        %v2221 = vld [vmem:[%s2212 + $0x20] sm:$0xf]
        %v2222 = vld [vmem:[%s2212 + $0x24] sm:$0xf]
        %v2223 = vld [vmem:[%s2212 + $0x28] sm:$0xf]
        %v2224 = vld [vmem:[%s2212 + $0x2c] sm:$0xf]
        %v2225 = vld [vmem:[%s2212 + $0x30] sm:$0xf]
        %v2226 = vld [vmem:[%s2212 + $0x34] sm:$0xf]
        %v2227 = vld [vmem:[%s2212 + $0x38] sm:$0xf]
        %v2228 = vld [vmem:[%s2212 + $0x3c] sm:$0xf]
        %v2229 = vld [vmem:[%s2212 + $0x40] sm:$0xf]
        %v2230 = vld [vmem:[%s2212 + $0x44] sm:$0xf]
        %v2231 = vld [vmem:[%s2212 + $0x48] sm:$0xf]
        %v2232 = vld [vmem:[%s2212 + $0x4c] sm:$0xf]
        %v2233 = vld [vmem:[%s2212 + $0x50] sm:$0xf]
        %v2234 = vld [vmem:[%s2212 + $0x54] sm:$0xf]
        %v2235 = vld [vmem:[%s2212 + $0x58] sm:$0xf]
        %v2236 = vld [vmem:[%s2212 + $0x5c] sm:$0xf]
        %v2237 = vld [vmem:[%s2212 + $0x60] sm:$0xf]
        %v2238 = vld [vmem:[%s2212 + $0x64] sm:$0xf]
        %v2239 = vld [vmem:[%s2212 + $0x68] sm:$0xf]
        %v2240 = vld [vmem:[%s2212 + $0x6c] sm:$0xf]
        %v2241 = vld [vmem:[%s2212 + $0x70] sm:$0xf]
        %v2242 = vld [vmem:[%s2212 + $0x74] sm:$0xf]
        %v2243 = vld [vmem:[%s2212 + $0x78] sm:$0xf]
        %v2244 = vld [vmem:[%s2212 + $0x7c] sm:$0xf]
        %v2245 = vld [vmem:[%s2212 + $0x80] sm:$0xf]
        %v2246 = vld [vmem:[%s2212 + $0x84] sm:$0xf]
        %v2247 = vld [vmem:[%s2212 + $0x88] sm:$0xf]
        %v2248 = vld [vmem:[%s2212 + $0x8c] sm:$0xf]
        %v2249 = vld [vmem:[%s2212 + $0x90] sm:$0xf]
        %v2250 = vld [vmem:[%s2212 + $0x94] sm:$0xf]
        %v2251 = vld [vmem:[%s2212 + $0x98] sm:$0xf]
        %v2252 = vld [vmem:[%s2212 + $0x9c] sm:$0xf]
        %v2253 = vld [vmem:[%s2212 + $0xa0] sm:$0xf]
        %v2254 = vld [vmem:[%s2212 + $0xa4] sm:$0xf]
        %v2255 = vld [vmem:[%s2212 + $0xa8] sm:$0xf]
        %v2256 = vld [vmem:[%s2212 + $0xac] sm:$0xf]
        %v2257 = vld [vmem:[%s2212 + $0xb0] sm:$0xf]
        %v2258 = vld [vmem:[%s2212 + $0xb4] sm:$0xf]
        %v2259 = vld [vmem:[%s2212 + $0xb8] sm:$0xf]
        %v2260 = vld [vmem:[%s2212 + $0xbc] sm:$0xf]
        %v2261 = vld [vmem:[%s2212 + $0xc0] sm:$0xf]
        %v2262 = vld [vmem:[%s2212 + $0xc4] sm:$0xf]
        %v2263 = vld [vmem:[%s2212 + $0xc8] sm:$0xf]
        %v2264 = vld [vmem:[%s2212 + $0xcc] sm:$0xf]
        %v2265 = vld [vmem:[%s2212 + $0xd0] sm:$0xf]
        %v2266 = vld [vmem:[%s2212 + $0xd4] sm:$0xf]
        %v2267 = vld [vmem:[%s2212 + $0xd8] sm:$0xf]
        %v2268 = vld [vmem:[%s2212 + $0xdc] sm:$0xf]
        %v2269 = vld [vmem:[%s2212 + $0xe0] sm:$0xf]
        %v2270 = vld [vmem:[%s2212 + $0xe4] sm:$0xf]
        %v2271 = vld [vmem:[%s2212 + $0xe8] sm:$0xf]
        %v2272 = vld [vmem:[%s2212 + $0xec] sm:$0xf]
        %v2273 = vld [vmem:[%s2212 + $0xf0] sm:$0xf]
        %v2274 = vld [vmem:[%s2212 + $0xf4] sm:$0xf]
        %v2275 = vld [vmem:[%s2212 + $0xf8] sm:$0xf]
        %v2276 = vld [vmem:[%s2212 + $0xfc] sm:$0xf]
        %v2277 = vld [vmem:[%s2212 + $0x100] sm:$0xf]
        %v2278 = vld [vmem:[%s2212 + $0x104] sm:$0xf]
        %v2279 = vld [vmem:[%s2212 + $0x108] sm:$0xf]
        %v2280 = vld [vmem:[%s2212 + $0x10c] sm:$0xf]
        %v2281 = vld [vmem:[%s2212 + $0x110] sm:$0xf]
        %v2282 = vld [vmem:[%s2212 + $0x114] sm:$0xf]
        %v2283 = vld [vmem:[%s2212 + $0x118] sm:$0xf]
        %v2284 = vld [vmem:[%s2212 + $0x11c] sm:$0xf]
        %v2285 = vld [vmem:[%s2212 + $0x120] sm:$0xf]
        %v2286 = vld [vmem:[%s2212 + $0x124] sm:$0xf]
        %v2287 = vld [vmem:[%s2212 + $0x128] sm:$0xf]
        %v2288 = vld [vmem:[%s2212 + $0x12c] sm:$0xf]
        %v2289 = vld [vmem:[%s2212 + $0x130] sm:$0xf]
        %v2290 = vld [vmem:[%s2212 + $0x134] sm:$0xf]
        %v2291 = vld [vmem:[%s2212 + $0x138] sm:$0xf]
        %v2292 = vld [vmem:[%s2212 + $0x13c] sm:$0xf]
        %v2293 = vld [vmem:[%s2212 + $0x140] sm:$0xf]
        %v2294 = vld [vmem:[%s2212 + $0x144] sm:$0xf]
        %v2295 = vld [vmem:[%s2212 + $0x148] sm:$0xf]
        %v2296 = vld [vmem:[%s2212 + $0x14c] sm:$0xf]
        %v2297 = vld [vmem:[%s2212 + $0x150] sm:$0xf]
        %v2298 = vld [vmem:[%s2212 + $0x154] sm:$0xf]
        %v2299 = vld [vmem:[%s2212 + $0x158] sm:$0xf]
        %v2300 = vld [vmem:[%s2212 + $0x15c] sm:$0xf]
        %v2301 = vld [vmem:[%s2212 + $0x160] sm:$0xf]
        %v2302 = vld [vmem:[%s2212 + $0x164] sm:$0xf]
        %v2303 = vld [vmem:[%s2212 + $0x168] sm:$0xf]
        %v2304 = vld [vmem:[%s2212 + $0x16c] sm:$0xf]
        %v2305 = vld [vmem:[%s2212 + $0x170] sm:$0xf]
        %v2306 = vld [vmem:[%s2212 + $0x174] sm:$0xf]
        %v2307 = vld [vmem:[%s2212 + $0x178] sm:$0xf]
        %v2308 = vld [vmem:[%s2212 + $0x17c] sm:$0xf]
        %v2405 = vunpack.c.l.b16 %v2213
        %v2406 = vunpack.c.l.b16 %v2214
        %v2407 = vunpack.c.l.b16 %v2215
        %v2408 = vunpack.c.l.b16 %v2216
        %v2409 = vunpack.c.l.b16 %v2217
        %v2410 = vunpack.c.l.b16 %v2218
        %v2411 = vunpack.c.l.b16 %v2219
        %v2412 = vunpack.c.l.b16 %v2220
        %v2413 = vunpack.c.l.b16 %v2221
        %v2414 = vunpack.c.l.b16 %v2222
        %v2415 = vunpack.c.l.b16 %v2223
        %v2416 = vunpack.c.l.b16 %v2224
        %v2417 = vunpack.c.l.b16 %v2225
        %v2418 = vunpack.c.l.b16 %v2226
        %v2419 = vunpack.c.l.b16 %v2227
        %v2420 = vunpack.c.l.b16 %v2228
        %v2421 = vunpack.c.l.b16 %v2229
        %v2422 = vunpack.c.l.b16 %v2230
        %v2423 = vunpack.c.l.b16 %v2231
        %v2424 = vunpack.c.l.b16 %v2232
        %v2425 = vunpack.c.l.b16 %v2233
        %v2426 = vunpack.c.l.b16 %v2234
        %v2427 = vunpack.c.l.b16 %v2235
        %v2428 = vunpack.c.l.b16 %v2236
        %v2429 = vunpack.c.l.b16 %v2237
        %v2430 = vunpack.c.l.b16 %v2238
        %v2431 = vunpack.c.l.b16 %v2239
        %v2432 = vunpack.c.l.b16 %v2240
        %v2433 = vunpack.c.l.b16 %v2241
        %v2434 = vunpack.c.l.b16 %v2242
        %v2435 = vunpack.c.l.b16 %v2243
        %v2436 = vunpack.c.l.b16 %v2244
        %v2437 = vunpack.c.l.b16 %v2245
        %v2438 = vunpack.c.l.b16 %v2246
        %v2439 = vunpack.c.l.b16 %v2247
        %v2440 = vunpack.c.l.b16 %v2248
        %v2441 = vunpack.c.l.b16 %v2249
        %v2442 = vunpack.c.l.b16 %v2250
        %v2443 = vunpack.c.l.b16 %v2251
        %v2444 = vunpack.c.l.b16 %v2252
        %v2445 = vunpack.c.l.b16 %v2253
        %v2446 = vunpack.c.l.b16 %v2254
        %v2447 = vunpack.c.l.b16 %v2255
        %v2448 = vunpack.c.l.b16 %v2256
        %v2449 = vunpack.c.l.b16 %v2257
        %v2450 = vunpack.c.l.b16 %v2258
        %v2451 = vunpack.c.l.b16 %v2259
        %v2452 = vunpack.c.l.b16 %v2260
        %v2453 = vunpack.c.l.b16 %v2261
        %v2454 = vunpack.c.l.b16 %v2262
        %v2455 = vunpack.c.l.b16 %v2263
        %v2456 = vunpack.c.l.b16 %v2264
        %v2457 = vunpack.c.l.b16 %v2265
        %v2458 = vunpack.c.l.b16 %v2266
        %v2459 = vunpack.c.l.b16 %v2267
        %v2460 = vunpack.c.l.b16 %v2268
        %v2461 = vunpack.c.l.b16 %v2269
        %v2462 = vunpack.c.l.b16 %v2270
        %v2463 = vunpack.c.l.b16 %v2271
        %v2464 = vunpack.c.l.b16 %v2272
        %v2465 = vunpack.c.l.b16 %v2273
        %v2466 = vunpack.c.l.b16 %v2274
        %v2467 = vunpack.c.l.b16 %v2275
        %v2468 = vunpack.c.l.b16 %v2276
        %v2469 = vunpack.c.l.b16 %v2277
        %v2470 = vunpack.c.l.b16 %v2278
        %v2471 = vunpack.c.l.b16 %v2279
        %v2472 = vunpack.c.l.b16 %v2280
        %v2473 = vunpack.c.l.b16 %v2281
        %v2474 = vunpack.c.l.b16 %v2282
        %v2475 = vunpack.c.l.b16 %v2283
        %v2476 = vunpack.c.l.b16 %v2284
        %v2477 = vunpack.c.l.b16 %v2285
        %v2478 = vunpack.c.l.b16 %v2286
        %v2479 = vunpack.c.l.b16 %v2287
        %v2480 = vunpack.c.l.b16 %v2288
        %v2481 = vunpack.c.l.b16 %v2289
        %v2482 = vunpack.c.l.b16 %v2290
        %v2483 = vunpack.c.l.b16 %v2291
        %v2484 = vunpack.c.l.b16 %v2292
        %v2485 = vunpack.c.l.b16 %v2293
        %v2486 = vunpack.c.l.b16 %v2294
        %v2487 = vunpack.c.l.b16 %v2295
        %v2488 = vunpack.c.l.b16 %v2296
        %v2489 = vunpack.c.l.b16 %v2297
        %v2490 = vunpack.c.l.b16 %v2298
        %v2491 = vunpack.c.l.b16 %v2299
        %v2492 = vunpack.c.l.b16 %v2300
        %v2493 = vunpack.c.l.b16 %v2301
        %v2494 = vunpack.c.l.b16 %v2302
        %v2495 = vunpack.c.l.b16 %v2303
        %v2496 = vunpack.c.l.b16 %v2304
        %v2497 = vunpack.c.l.b16 %v2305
        %v2498 = vunpack.c.l.b16 %v2306
        %v2499 = vunpack.c.l.b16 %v2307
        %v2500 = vunpack.c.l.b16 %v2308
        %v2501 = vpack.c.b16 %v2406, %v2405
        %v2502 = vpack.c.b16 %v2408, %v2407
        %v2503 = vpack.c.b16 %v2410, %v2409
        %v2504 = vpack.c.b16 %v2412, %v2411
        %v2505 = vpack.c.b16 %v2414, %v2413
        %v2506 = vpack.c.b16 %v2416, %v2415
        %v2507 = vpack.c.b16 %v2418, %v2417
        %v2508 = vpack.c.b16 %v2420, %v2419
        %v2509 = vpack.c.b16 %v2422, %v2421
        %v2510 = vpack.c.b16 %v2424, %v2423
        %v2511 = vpack.c.b16 %v2426, %v2425
        %v2512 = vpack.c.b16 %v2428, %v2427
        %v2513 = vpack.c.b16 %v2430, %v2429
        %v2514 = vpack.c.b16 %v2432, %v2431
        %v2515 = vpack.c.b16 %v2434, %v2433
        %v2516 = vpack.c.b16 %v2436, %v2435
        %v2517 = vpack.c.b16 %v2438, %v2437
        %v2518 = vpack.c.b16 %v2440, %v2439
        %v2519 = vpack.c.b16 %v2442, %v2441
        %v2520 = vpack.c.b16 %v2444, %v2443
        %v2521 = vpack.c.b16 %v2446, %v2445
        %v2522 = vpack.c.b16 %v2448, %v2447
        %v2523 = vpack.c.b16 %v2450, %v2449
        %v2524 = vpack.c.b16 %v2452, %v2451
        %v2525 = vpack.c.b16 %v2454, %v2453
        %v2526 = vpack.c.b16 %v2456, %v2455
        %v2527 = vpack.c.b16 %v2458, %v2457
        %v2528 = vpack.c.b16 %v2460, %v2459
        %v2529 = vpack.c.b16 %v2462, %v2461
        %v2530 = vpack.c.b16 %v2464, %v2463
        %v2531 = vpack.c.b16 %v2466, %v2465
        %v2532 = vpack.c.b16 %v2468, %v2467
        %v2533 = vpack.c.b16 %v2470, %v2469
        %v2534 = vpack.c.b16 %v2472, %v2471
        %v2535 = vpack.c.b16 %v2474, %v2473
        %v2536 = vpack.c.b16 %v2476, %v2475
        %v2537 = vpack.c.b16 %v2478, %v2477
        %v2538 = vpack.c.b16 %v2480, %v2479
        %v2539 = vpack.c.b16 %v2482, %v2481
        %v2540 = vpack.c.b16 %v2484, %v2483
        %v2541 = vpack.c.b16 %v2486, %v2485
        %v2542 = vpack.c.b16 %v2488, %v2487
        %v2543 = vpack.c.b16 %v2490, %v2489
        %v2544 = vpack.c.b16 %v2492, %v2491
        %v2545 = vpack.c.b16 %v2494, %v2493
        %v2546 = vpack.c.b16 %v2496, %v2495
        %v2547 = vpack.c.b16 %v2498, %v2497
        %v2548 = vpack.c.b16 %v2500, %v2499
        %2597 = vmatprep.subr.bf16.mxu0 0
        %2598 = vmatpush1.bf16.msra.mxu0 %v2501
        %2599 = vmatprep.subr.bf16.mxu0 0
        %2600 = vmatpush1.bf16.msra.mxu0 %v2502
        %2601 = vmatprep.subr.bf16.mxu0 0
        %2602 = vmatpush1.bf16.msra.mxu0 %v2503
        %2603 = vmatprep.subr.bf16.mxu0 0
        %2604 = vmatpush1.bf16.msra.mxu0 %v2504
        %2605 = vmatprep.subr.bf16.mxu0 0
        %2606 = vmatpush1.bf16.msra.mxu0 %v2505
        %2607 = vmatprep.subr.bf16.mxu0 0
        %2608 = vmatpush1.bf16.msra.mxu0 %v2506
        %2609 = vmatprep.subr.bf16.mxu0 0
        %2610 = vmatpush1.bf16.msra.mxu0 %v2507
        %2611 = vmatprep.subr.bf16.mxu0 0
        %2612 = vmatpush1.bf16.msra.mxu0 %v2508
        %2613 = vmatprep.subr.bf16.mxu0 0
        %2614 = vmatpush1.bf16.msra.mxu0 %v2509
        %2615 = vmatprep.subr.bf16.mxu0 0
        %2616 = vmatpush1.bf16.msra.mxu0 %v2510
        %2617 = vmatprep.subr.bf16.mxu0 0
        %2618 = vmatpush1.bf16.msra.mxu0 %v2511
        %2619 = vmatprep.subr.bf16.mxu0 0
        %2620 = vmatpush1.bf16.msra.mxu0 %v2512
        %2621 = vmatprep.subr.bf16.mxu0 0
        %2622 = vmatpush1.bf16.msra.mxu0 %v2513
        %2623 = vmatprep.subr.bf16.mxu0 0
        %2624 = vmatpush1.bf16.msra.mxu0 %v2514
        %2625 = vmatprep.subr.bf16.mxu0 0
        %2626 = vmatpush1.bf16.msra.mxu0 %v2515
        %2627 = vmatprep.subr.bf16.mxu0 0
        %2628 = vmatpush1.bf16.msra.mxu0 %v2516
        %2629 = vmatprep.mubr.bf16.mxu0 %v275
        %2630 = vmatmul.mubr.bf16.gmra.mrb[0].mxu0 %v274
        %v2631 = vpop.f32.mrb[0].mxu0
        %v2632 = vadd.f32 0.0, %v2631
        %v2633 = vpop.f32.mrb[0].mxu0
        %v2634 = vpop.f32.mrb[0].mxu0
        %v2635 = vpop.f32.mrb[0].mxu0
        %2636 = vdwg.mxu0
        %2637 = vmatprep.subr.bf16.mxu0 0
        %2638 = vmatpush1.bf16.msra.mxu0 %v2517
        %2639 = vmatprep.subr.bf16.mxu0 0
        %2640 = vmatpush1.bf16.msra.mxu0 %v2518
        %2641 = vmatprep.subr.bf16.mxu0 0
        %2642 = vmatpush1.bf16.msra.mxu0 %v2519
        %2643 = vmatprep.subr.bf16.mxu0 0
        %2644 = vmatpush1.bf16.msra.mxu0 %v2520
        %2645 = vmatprep.subr.bf16.mxu0 0
        %2646 = vmatpush1.bf16.msra.mxu0 %v2521
        %2647 = vmatprep.subr.bf16.mxu0 0
        %2648 = vmatpush1.bf16.msra.mxu0 %v2522
        %2649 = vmatprep.subr.bf16.mxu0 0
        %2650 = vmatpush1.bf16.msra.mxu0 %v2523
        %2651 = vmatprep.subr.bf16.mxu0 0
        %2652 = vmatpush1.bf16.msra.mxu0 %v2524
        %2653 = vmatprep.subr.bf16.mxu0 0
        %2654 = vmatpush1.bf16.msra.mxu0 %v2525
        %2655 = vmatprep.subr.bf16.mxu0 0
        %2656 = vmatpush1.bf16.msra.mxu0 %v2526
        %2657 = vmatprep.subr.bf16.mxu0 0
        %2658 = vmatpush1.bf16.msra.mxu0 %v2527
        %2659 = vmatprep.subr.bf16.mxu0 0
        %2660 = vmatpush1.bf16.msra.mxu0 %v2528
        %2661 = vmatprep.subr.bf16.mxu0 0
        %2662 = vmatpush1.bf16.msra.mxu0 %v2529
        %2663 = vmatprep.subr.bf16.mxu0 0
        %2664 = vmatpush1.bf16.msra.mxu0 %v2530
        %2665 = vmatprep.subr.bf16.mxu0 0
        %2666 = vmatpush1.bf16.msra.mxu0 %v2531
        %2667 = vmatprep.subr.bf16.mxu0 0
        %2668 = vmatpush1.bf16.msra.mxu0 %v2532
        %2669 = vmatprep.mubr.bf16.mxu0 %v277
        %2670 = vmatmul.mubr.bf16.gmra.mrb[0].mxu0 %v276
        %v2671 = vpop.f32.mrb[0].mxu0
        %v2672 = vadd.f32 %v2632, %v2671
        %v2673 = vpop.f32.mrb[0].mxu0
        %v2674 = vpop.f32.mrb[0].mxu0
        %v2675 = vpop.f32.mrb[0].mxu0
        %2676 = vdwg.mxu0
        %2677 = vmatprep.subr.bf16.mxu0 0
        %2678 = vmatpush1.bf16.msra.mxu0 %v2533
        %2679 = vmatprep.subr.bf16.mxu0 0
        %2680 = vmatpush1.bf16.msra.mxu0 %v2534
        %2681 = vmatprep.subr.bf16.mxu0 0
        %2682 = vmatpush1.bf16.msra.mxu0 %v2535
        %2683 = vmatprep.subr.bf16.mxu0 0
        %2684 = vmatpush1.bf16.msra.mxu0 %v2536
        %2685 = vmatprep.subr.bf16.mxu0 0
        %2686 = vmatpush1.bf16.msra.mxu0 %v2537
        %2687 = vmatprep.subr.bf16.mxu0 0
        %2688 = vmatpush1.bf16.msra.mxu0 %v2538
        %2689 = vmatprep.subr.bf16.mxu0 0
        %2690 = vmatpush1.bf16.msra.mxu0 %v2539
        %2691 = vmatprep.subr.bf16.mxu0 0
        %2692 = vmatpush1.bf16.msra.mxu0 %v2540
        %2693 = vmatprep.subr.bf16.mxu0 0
        %2694 = vmatpush1.bf16.msra.mxu0 %v2541
        %2695 = vmatprep.subr.bf16.mxu0 0
        %2696 = vmatpush1.bf16.msra.mxu0 %v2542
        %2697 = vmatprep.subr.bf16.mxu0 0
        %2698 = vmatpush1.bf16.msra.mxu0 %v2543
        %2699 = vmatprep.subr.bf16.mxu0 0
        %2700 = vmatpush1.bf16.msra.mxu0 %v2544
        %2701 = vmatprep.subr.bf16.mxu0 0
        %2702 = vmatpush1.bf16.msra.mxu0 %v2545
        %2703 = vmatprep.subr.bf16.mxu0 0
        %2704 = vmatpush1.bf16.msra.mxu0 %v2546
        %2705 = vmatprep.subr.bf16.mxu0 0
        %2706 = vmatpush1.bf16.msra.mxu0 %v2547
        %2707 = vmatprep.subr.bf16.mxu0 0
        %2708 = vmatpush1.bf16.msra.mxu0 %v2548
        %2709 = vmatprep.mubr.bf16.mxu0 %v279
        %2710 = vmatmul.mubr.bf16.gmra.mrb[0].mxu0 %v278
        %v2711 = vpop.f32.mrb[0].mxu0
        %v2712 = vadd.f32 %v2672, %v2711
        %v2713 = vpop.f32.mrb[0].mxu0
        %v2714 = vpop.f32.mrb[0].mxu0
        %v2715 = vpop.f32.mrb[0].mxu0
        %2716 = vdwg.mxu0
        %v2717 = vmax.f32 %v2211, %v2712
        %s2718 = scalar_lea.vmem %s1, 1920
        %v2719 = vld [vmem:[%s2718] sm:$0xf]
        %v2720 = vld [vmem:[%s2718 + $0x4] sm:$0xf]
        %v2721 = vld [vmem:[%s2718 + $0x8] sm:$0xf]
        %v2722 = vld [vmem:[%s2718 + $0xc] sm:$0xf]
        %v2723 = vld [vmem:[%s2718 + $0x10] sm:$0xf]
        %v2724 = vld [vmem:[%s2718 + $0x14] sm:$0xf]
        %v2725 = vld [vmem:[%s2718 + $0x18] sm:$0xf]
        %v2726 = vld [vmem:[%s2718 + $0x1c] sm:$0xf]
        %v2727 = vld [vmem:[%s2718 + $0x20] sm:$0xf]
        %v2728 = vld [vmem:[%s2718 + $0x24] sm:$0xf]
        %v2729 = vld [vmem:[%s2718 + $0x28] sm:$0xf]
        %v2730 = vld [vmem:[%s2718 + $0x2c] sm:$0xf]
        %v2731 = vld [vmem:[%s2718 + $0x30] sm:$0xf]
        %v2732 = vld [vmem:[%s2718 + $0x34] sm:$0xf]
        %v2733 = vld [vmem:[%s2718 + $0x38] sm:$0xf]
        %v2734 = vld [vmem:[%s2718 + $0x3c] sm:$0xf]
        %v2735 = vld [vmem:[%s2718 + $0x40] sm:$0xf]
        %v2736 = vld [vmem:[%s2718 + $0x44] sm:$0xf]
        %v2737 = vld [vmem:[%s2718 + $0x48] sm:$0xf]
        %v2738 = vld [vmem:[%s2718 + $0x4c] sm:$0xf]
        %v2739 = vld [vmem:[%s2718 + $0x50] sm:$0xf]
        %v2740 = vld [vmem:[%s2718 + $0x54] sm:$0xf]
        %v2741 = vld [vmem:[%s2718 + $0x58] sm:$0xf]
        %v2742 = vld [vmem:[%s2718 + $0x5c] sm:$0xf]
        %v2743 = vld [vmem:[%s2718 + $0x60] sm:$0xf]
        %v2744 = vld [vmem:[%s2718 + $0x64] sm:$0xf]
        %v2745 = vld [vmem:[%s2718 + $0x68] sm:$0xf]
        %v2746 = vld [vmem:[%s2718 + $0x6c] sm:$0xf]
        %v2747 = vld [vmem:[%s2718 + $0x70] sm:$0xf]
        %v2748 = vld [vmem:[%s2718 + $0x74] sm:$0xf]
        %v2749 = vld [vmem:[%s2718 + $0x78] sm:$0xf]
        %v2750 = vld [vmem:[%s2718 + $0x7c] sm:$0xf]
        %v2751 = vld [vmem:[%s2718 + $0x80] sm:$0xf]
        %v2752 = vld [vmem:[%s2718 + $0x84] sm:$0xf]
        %v2753 = vld [vmem:[%s2718 + $0x88] sm:$0xf]
        %v2754 = vld [vmem:[%s2718 + $0x8c] sm:$0xf]
        %v2755 = vld [vmem:[%s2718 + $0x90] sm:$0xf]
        %v2756 = vld [vmem:[%s2718 + $0x94] sm:$0xf]
        %v2757 = vld [vmem:[%s2718 + $0x98] sm:$0xf]
        %v2758 = vld [vmem:[%s2718 + $0x9c] sm:$0xf]
        %v2759 = vld [vmem:[%s2718 + $0xa0] sm:$0xf]
        %v2760 = vld [vmem:[%s2718 + $0xa4] sm:$0xf]
        %v2761 = vld [vmem:[%s2718 + $0xa8] sm:$0xf]
        %v2762 = vld [vmem:[%s2718 + $0xac] sm:$0xf]
        %v2763 = vld [vmem:[%s2718 + $0xb0] sm:$0xf]
        %v2764 = vld [vmem:[%s2718 + $0xb4] sm:$0xf]
        %v2765 = vld [vmem:[%s2718 + $0xb8] sm:$0xf]
        %v2766 = vld [vmem:[%s2718 + $0xbc] sm:$0xf]
        %v2767 = vld [vmem:[%s2718 + $0xc0] sm:$0xf]
        %v2768 = vld [vmem:[%s2718 + $0xc4] sm:$0xf]
        %v2769 = vld [vmem:[%s2718 + $0xc8] sm:$0xf]
        %v2770 = vld [vmem:[%s2718 + $0xcc] sm:$0xf]
        %v2771 = vld [vmem:[%s2718 + $0xd0] sm:$0xf]
        %v2772 = vld [vmem:[%s2718 + $0xd4] sm:$0xf]
        %v2773 = vld [vmem:[%s2718 + $0xd8] sm:$0xf]
        %v2774 = vld [vmem:[%s2718 + $0xdc] sm:$0xf]
        %v2775 = vld [vmem:[%s2718 + $0xe0] sm:$0xf]
        %v2776 = vld [vmem:[%s2718 + $0xe4] sm:$0xf]
        %v2777 = vld [vmem:[%s2718 + $0xe8] sm:$0xf]
        %v2778 = vld [vmem:[%s2718 + $0xec] sm:$0xf]
        %v2779 = vld [vmem:[%s2718 + $0xf0] sm:$0xf]
        %v2780 = vld [vmem:[%s2718 + $0xf4] sm:$0xf]
        %v2781 = vld [vmem:[%s2718 + $0xf8] sm:$0xf]
        %v2782 = vld [vmem:[%s2718 + $0xfc] sm:$0xf]
        %v2783 = vld [vmem:[%s2718 + $0x100] sm:$0xf]
        %v2784 = vld [vmem:[%s2718 + $0x104] sm:$0xf]
        %v2785 = vld [vmem:[%s2718 + $0x108] sm:$0xf]
        %v2786 = vld [vmem:[%s2718 + $0x10c] sm:$0xf]
        %v2787 = vld [vmem:[%s2718 + $0x110] sm:$0xf]
        %v2788 = vld [vmem:[%s2718 + $0x114] sm:$0xf]
        %v2789 = vld [vmem:[%s2718 + $0x118] sm:$0xf]
        %v2790 = vld [vmem:[%s2718 + $0x11c] sm:$0xf]
        %v2791 = vld [vmem:[%s2718 + $0x120] sm:$0xf]
        %v2792 = vld [vmem:[%s2718 + $0x124] sm:$0xf]
        %v2793 = vld [vmem:[%s2718 + $0x128] sm:$0xf]
        %v2794 = vld [vmem:[%s2718 + $0x12c] sm:$0xf]
        %v2795 = vld [vmem:[%s2718 + $0x130] sm:$0xf]
        %v2796 = vld [vmem:[%s2718 + $0x134] sm:$0xf]
        %v2797 = vld [vmem:[%s2718 + $0x138] sm:$0xf]
        %v2798 = vld [vmem:[%s2718 + $0x13c] sm:$0xf]
        %v2799 = vld [vmem:[%s2718 + $0x140] sm:$0xf]
        %v2800 = vld [vmem:[%s2718 + $0x144] sm:$0xf]
        %v2801 = vld [vmem:[%s2718 + $0x148] sm:$0xf]
        %v2802 = vld [vmem:[%s2718 + $0x14c] sm:$0xf]
        %v2803 = vld [vmem:[%s2718 + $0x150] sm:$0xf]
        %v2804 = vld [vmem:[%s2718 + $0x154] sm:$0xf]
        %v2805 = vld [vmem:[%s2718 + $0x158] sm:$0xf]
        %v2806 = vld [vmem:[%s2718 + $0x15c] sm:$0xf]
        %v2807 = vld [vmem:[%s2718 + $0x160] sm:$0xf]
        %v2808 = vld [vmem:[%s2718 + $0x164] sm:$0xf]
        %v2809 = vld [vmem:[%s2718 + $0x168] sm:$0xf]
        %v2810 = vld [vmem:[%s2718 + $0x16c] sm:$0xf]
        %v2811 = vld [vmem:[%s2718 + $0x170] sm:$0xf]
        %v2812 = vld [vmem:[%s2718 + $0x174] sm:$0xf]
        %v2813 = vld [vmem:[%s2718 + $0x178] sm:$0xf]
        %v2814 = vld [vmem:[%s2718 + $0x17c] sm:$0xf]
        %v2911 = vunpack.c.l.b16 %v2719
        %v2912 = vunpack.c.l.b16 %v2720
        %v2913 = vunpack.c.l.b16 %v2721
        %v2914 = vunpack.c.l.b16 %v2722
        %v2915 = vunpack.c.l.b16 %v2723
        %v2916 = vunpack.c.l.b16 %v2724
        %v2917 = vunpack.c.l.b16 %v2725
        %v2918 = vunpack.c.l.b16 %v2726
        %v2919 = vunpack.c.l.b16 %v2727
        %v2920 = vunpack.c.l.b16 %v2728
        %v2921 = vunpack.c.l.b16 %v2729
        %v2922 = vunpack.c.l.b16 %v2730
        %v2923 = vunpack.c.l.b16 %v2731
        %v2924 = vunpack.c.l.b16 %v2732
        %v2925 = vunpack.c.l.b16 %v2733
        %v2926 = vunpack.c.l.b16 %v2734
        %v2927 = vunpack.c.l.b16 %v2735
        %v2928 = vunpack.c.l.b16 %v2736
        %v2929 = vunpack.c.l.b16 %v2737
        %v2930 = vunpack.c.l.b16 %v2738
        %v2931 = vunpack.c.l.b16 %v2739
        %v2932 = vunpack.c.l.b16 %v2740
        %v2933 = vunpack.c.l.b16 %v2741
        %v2934 = vunpack.c.l.b16 %v2742
        %v2935 = vunpack.c.l.b16 %v2743
        %v2936 = vunpack.c.l.b16 %v2744
        %v2937 = vunpack.c.l.b16 %v2745
        %v2938 = vunpack.c.l.b16 %v2746
        %v2939 = vunpack.c.l.b16 %v2747
        %v2940 = vunpack.c.l.b16 %v2748
        %v2941 = vunpack.c.l.b16 %v2749
        %v2942 = vunpack.c.l.b16 %v2750
        %v2943 = vunpack.c.l.b16 %v2751
        %v2944 = vunpack.c.l.b16 %v2752
        %v2945 = vunpack.c.l.b16 %v2753
        %v2946 = vunpack.c.l.b16 %v2754
        %v2947 = vunpack.c.l.b16 %v2755
        %v2948 = vunpack.c.l.b16 %v2756
        %v2949 = vunpack.c.l.b16 %v2757
        %v2950 = vunpack.c.l.b16 %v2758
        %v2951 = vunpack.c.l.b16 %v2759
        %v2952 = vunpack.c.l.b16 %v2760
        %v2953 = vunpack.c.l.b16 %v2761
        %v2954 = vunpack.c.l.b16 %v2762
        %v2955 = vunpack.c.l.b16 %v2763
        %v2956 = vunpack.c.l.b16 %v2764
        %v2957 = vunpack.c.l.b16 %v2765
        %v2958 = vunpack.c.l.b16 %v2766
        %v2959 = vunpack.c.l.b16 %v2767
        %v2960 = vunpack.c.l.b16 %v2768
        %v2961 = vunpack.c.l.b16 %v2769
        %v2962 = vunpack.c.l.b16 %v2770
        %v2963 = vunpack.c.l.b16 %v2771
        %v2964 = vunpack.c.l.b16 %v2772
        %v2965 = vunpack.c.l.b16 %v2773
        %v2966 = vunpack.c.l.b16 %v2774
        %v2967 = vunpack.c.l.b16 %v2775
        %v2968 = vunpack.c.l.b16 %v2776
        %v2969 = vunpack.c.l.b16 %v2777
        %v2970 = vunpack.c.l.b16 %v2778
        %v2971 = vunpack.c.l.b16 %v2779
        %v2972 = vunpack.c.l.b16 %v2780
        %v2973 = vunpack.c.l.b16 %v2781
        %v2974 = vunpack.c.l.b16 %v2782
        %v2975 = vunpack.c.l.b16 %v2783
        %v2976 = vunpack.c.l.b16 %v2784
        %v2977 = vunpack.c.l.b16 %v2785
        %v2978 = vunpack.c.l.b16 %v2786
        %v2979 = vunpack.c.l.b16 %v2787
        %v2980 = vunpack.c.l.b16 %v2788
        %v2981 = vunpack.c.l.b16 %v2789
        %v2982 = vunpack.c.l.b16 %v2790
        %v2983 = vunpack.c.l.b16 %v2791
        %v2984 = vunpack.c.l.b16 %v2792
        %v2985 = vunpack.c.l.b16 %v2793
        %v2986 = vunpack.c.l.b16 %v2794
        %v2987 = vunpack.c.l.b16 %v2795
        %v2988 = vunpack.c.l.b16 %v2796
        %v2989 = vunpack.c.l.b16 %v2797
        %v2990 = vunpack.c.l.b16 %v2798
        %v2991 = vunpack.c.l.b16 %v2799
        %v2992 = vunpack.c.l.b16 %v2800
        %v2993 = vunpack.c.l.b16 %v2801
        %v2994 = vunpack.c.l.b16 %v2802
        %v2995 = vunpack.c.l.b16 %v2803
        %v2996 = vunpack.c.l.b16 %v2804
        %v2997 = vunpack.c.l.b16 %v2805
        %v2998 = vunpack.c.l.b16 %v2806
        %v2999 = vunpack.c.l.b16 %v2807
        %v3000 = vunpack.c.l.b16 %v2808
        %v3001 = vunpack.c.l.b16 %v2809
        %v3002 = vunpack.c.l.b16 %v2810
        %v3003 = vunpack.c.l.b16 %v2811
        %v3004 = vunpack.c.l.b16 %v2812
        %v3005 = vunpack.c.l.b16 %v2813
        %v3006 = vunpack.c.l.b16 %v2814
        %v3007 = vpack.c.b16 %v2912, %v2911
        %v3008 = vpack.c.b16 %v2914, %v2913
        %v3009 = vpack.c.b16 %v2916, %v2915
        %v3010 = vpack.c.b16 %v2918, %v2917
        %v3011 = vpack.c.b16 %v2920, %v2919
        %v3012 = vpack.c.b16 %v2922, %v2921
        %v3013 = vpack.c.b16 %v2924, %v2923
        %v3014 = vpack.c.b16 %v2926, %v2925
        %v3015 = vpack.c.b16 %v2928, %v2927
        %v3016 = vpack.c.b16 %v2930, %v2929
        %v3017 = vpack.c.b16 %v2932, %v2931
        %v3018 = vpack.c.b16 %v2934, %v2933
        %v3019 = vpack.c.b16 %v2936, %v2935
        %v3020 = vpack.c.b16 %v2938, %v2937
        %v3021 = vpack.c.b16 %v2940, %v2939
        %v3022 = vpack.c.b16 %v2942, %v2941
        %v3023 = vpack.c.b16 %v2944, %v2943
        %v3024 = vpack.c.b16 %v2946, %v2945
        %v3025 = vpack.c.b16 %v2948, %v2947
        %v3026 = vpack.c.b16 %v2950, %v2949
        %v3027 = vpack.c.b16 %v2952, %v2951
        %v3028 = vpack.c.b16 %v2954, %v2953
        %v3029 = vpack.c.b16 %v2956, %v2955
        %v3030 = vpack.c.b16 %v2958, %v2957
        %v3031 = vpack.c.b16 %v2960, %v2959
        %v3032 = vpack.c.b16 %v2962, %v2961
        %v3033 = vpack.c.b16 %v2964, %v2963
        %v3034 = vpack.c.b16 %v2966, %v2965
        %v3035 = vpack.c.b16 %v2968, %v2967
        %v3036 = vpack.c.b16 %v2970, %v2969
        %v3037 = vpack.c.b16 %v2972, %v2971
        %v3038 = vpack.c.b16 %v2974, %v2973
        %v3039 = vpack.c.b16 %v2976, %v2975
        %v3040 = vpack.c.b16 %v2978, %v2977
        %v3041 = vpack.c.b16 %v2980, %v2979
        %v3042 = vpack.c.b16 %v2982, %v2981
        %v3043 = vpack.c.b16 %v2984, %v2983
        %v3044 = vpack.c.b16 %v2986, %v2985
        %v3045 = vpack.c.b16 %v2988, %v2987
        %v3046 = vpack.c.b16 %v2990, %v2989
        %v3047 = vpack.c.b16 %v2992, %v2991
        %v3048 = vpack.c.b16 %v2994, %v2993
        %v3049 = vpack.c.b16 %v2996, %v2995
        %v3050 = vpack.c.b16 %v2998, %v2997
        %v3051 = vpack.c.b16 %v3000, %v2999
        %v3052 = vpack.c.b16 %v3002, %v3001
        %v3053 = vpack.c.b16 %v3004, %v3003
        %v3054 = vpack.c.b16 %v3006, %v3005
        %3103 = vmatprep.subr.bf16.mxu0 0
        %3104 = vmatpush1.bf16.msra.mxu0 %v3007
        %3105 = vmatprep.subr.bf16.mxu0 0
        %3106 = vmatpush1.bf16.msra.mxu0 %v3008
        %3107 = vmatprep.subr.bf16.mxu0 0
        %3108 = vmatpush1.bf16.msra.mxu0 %v3009
        %3109 = vmatprep.subr.bf16.mxu0 0
        %3110 = vmatpush1.bf16.msra.mxu0 %v3010
        %3111 = vmatprep.subr.bf16.mxu0 0
        %3112 = vmatpush1.bf16.msra.mxu0 %v3011
        %3113 = vmatprep.subr.bf16.mxu0 0
        %3114 = vmatpush1.bf16.msra.mxu0 %v3012
        %3115 = vmatprep.subr.bf16.mxu0 0
        %3116 = vmatpush1.bf16.msra.mxu0 %v3013
        %3117 = vmatprep.subr.bf16.mxu0 0
        %3118 = vmatpush1.bf16.msra.mxu0 %v3014
        %3119 = vmatprep.subr.bf16.mxu0 0
        %3120 = vmatpush1.bf16.msra.mxu0 %v3015
        %3121 = vmatprep.subr.bf16.mxu0 0
        %3122 = vmatpush1.bf16.msra.mxu0 %v3016
        %3123 = vmatprep.subr.bf16.mxu0 0
        %3124 = vmatpush1.bf16.msra.mxu0 %v3017
        %3125 = vmatprep.subr.bf16.mxu0 0
        %3126 = vmatpush1.bf16.msra.mxu0 %v3018
        %3127 = vmatprep.subr.bf16.mxu0 0
        %3128 = vmatpush1.bf16.msra.mxu0 %v3019
        %3129 = vmatprep.subr.bf16.mxu0 0
        %3130 = vmatpush1.bf16.msra.mxu0 %v3020
        %3131 = vmatprep.subr.bf16.mxu0 0
        %3132 = vmatpush1.bf16.msra.mxu0 %v3021
        %3133 = vmatprep.subr.bf16.mxu0 0
        %3134 = vmatpush1.bf16.msra.mxu0 %v3022
        %3135 = vmatprep.mubr.bf16.mxu0 %v275
        %3136 = vmatmul.mubr.bf16.gmra.mrb[0].mxu0 %v274
        %v3137 = vpop.f32.mrb[0].mxu0
        %v3138 = vadd.f32 0.0, %v3137
        %v3139 = vpop.f32.mrb[0].mxu0
        %v3140 = vpop.f32.mrb[0].mxu0
        %v3141 = vpop.f32.mrb[0].mxu0
        %3142 = vdwg.mxu0
        %3143 = vmatprep.subr.bf16.mxu0 0
        %3144 = vmatpush1.bf16.msra.mxu0 %v3023
        %3145 = vmatprep.subr.bf16.mxu0 0
        %3146 = vmatpush1.bf16.msra.mxu0 %v3024
        %3147 = vmatprep.subr.bf16.mxu0 0
        %3148 = vmatpush1.bf16.msra.mxu0 %v3025
        %3149 = vmatprep.subr.bf16.mxu0 0
        %3150 = vmatpush1.bf16.msra.mxu0 %v3026
        %3151 = vmatprep.subr.bf16.mxu0 0
        %3152 = vmatpush1.bf16.msra.mxu0 %v3027
        %3153 = vmatprep.subr.bf16.mxu0 0
        %3154 = vmatpush1.bf16.msra.mxu0 %v3028
        %3155 = vmatprep.subr.bf16.mxu0 0
        %3156 = vmatpush1.bf16.msra.mxu0 %v3029
        %3157 = vmatprep.subr.bf16.mxu0 0
        %3158 = vmatpush1.bf16.msra.mxu0 %v3030
        %3159 = vmatprep.subr.bf16.mxu0 0
        %3160 = vmatpush1.bf16.msra.mxu0 %v3031
        %3161 = vmatprep.subr.bf16.mxu0 0
        %3162 = vmatpush1.bf16.msra.mxu0 %v3032
        %3163 = vmatprep.subr.bf16.mxu0 0
        %3164 = vmatpush1.bf16.msra.mxu0 %v3033
        %3165 = vmatprep.subr.bf16.mxu0 0
        %3166 = vmatpush1.bf16.msra.mxu0 %v3034
        %3167 = vmatprep.subr.bf16.mxu0 0
        %3168 = vmatpush1.bf16.msra.mxu0 %v3035
        %3169 = vmatprep.subr.bf16.mxu0 0
        %3170 = vmatpush1.bf16.msra.mxu0 %v3036
        %3171 = vmatprep.subr.bf16.mxu0 0
        %3172 = vmatpush1.bf16.msra.mxu0 %v3037
        %3173 = vmatprep.subr.bf16.mxu0 0
        %3174 = vmatpush1.bf16.msra.mxu0 %v3038
        %3175 = vmatprep.mubr.bf16.mxu0 %v277
        %3176 = vmatmul.mubr.bf16.gmra.mrb[0].mxu0 %v276
        %v3177 = vpop.f32.mrb[0].mxu0
        %v3178 = vadd.f32 %v3138, %v3177
        %v3179 = vpop.f32.mrb[0].mxu0
        %v3180 = vpop.f32.mrb[0].mxu0
        %v3181 = vpop.f32.mrb[0].mxu0
        %3182 = vdwg.mxu0
        %3183 = vmatprep.subr.bf16.mxu0 0
        %3184 = vmatpush1.bf16.msra.mxu0 %v3039
        %3185 = vmatprep.subr.bf16.mxu0 0
        %3186 = vmatpush1.bf16.msra.mxu0 %v3040
        %3187 = vmatprep.subr.bf16.mxu0 0
        %3188 = vmatpush1.bf16.msra.mxu0 %v3041
        %3189 = vmatprep.subr.bf16.mxu0 0
        %3190 = vmatpush1.bf16.msra.mxu0 %v3042
        %3191 = vmatprep.subr.bf16.mxu0 0
        %3192 = vmatpush1.bf16.msra.mxu0 %v3043
        %3193 = vmatprep.subr.bf16.mxu0 0
        %3194 = vmatpush1.bf16.msra.mxu0 %v3044
        %3195 = vmatprep.subr.bf16.mxu0 0
        %3196 = vmatpush1.bf16.msra.mxu0 %v3045
        %3197 = vmatprep.subr.bf16.mxu0 0
        %3198 = vmatpush1.bf16.msra.mxu0 %v3046
        %3199 = vmatprep.subr.bf16.mxu0 0
        %3200 = vmatpush1.bf16.msra.mxu0 %v3047
        %3201 = vmatprep.subr.bf16.mxu0 0
        %3202 = vmatpush1.bf16.msra.mxu0 %v3048
        %3203 = vmatprep.subr.bf16.mxu0 0
        %3204 = vmatpush1.bf16.msra.mxu0 %v3049
        %3205 = vmatprep.subr.bf16.mxu0 0
        %3206 = vmatpush1.bf16.msra.mxu0 %v3050
        %3207 = vmatprep.subr.bf16.mxu0 0
        %3208 = vmatpush1.bf16.msra.mxu0 %v3051
        %3209 = vmatprep.subr.bf16.mxu0 0
        %3210 = vmatpush1.bf16.msra.mxu0 %v3052
        %3211 = vmatprep.subr.bf16.mxu0 0
        %3212 = vmatpush1.bf16.msra.mxu0 %v3053
        %3213 = vmatprep.subr.bf16.mxu0 0
        %3214 = vmatpush1.bf16.msra.mxu0 %v3054
        %3215 = vmatprep.mubr.bf16.mxu0 %v279
        %3216 = vmatmul.mubr.bf16.gmra.mrb[0].mxu0 %v278
        %v3217 = vpop.f32.mrb[0].mxu0
        %v3218 = vadd.f32 %v3178, %v3217
        %v3219 = vpop.f32.mrb[0].mxu0
        %v3220 = vpop.f32.mrb[0].mxu0
        %v3221 = vpop.f32.mrb[0].mxu0
        %3222 = vdwg.mxu0
        %v3223 = vmax.f32 %v2717, %v3218
        %v3224 = vld [vmem:[%s2] sm:$0x1]
        %v3226 = vlaneseq
        %v3227 = vshrl.u32 %v3226, 7
        %v3228 = vsub.s32 0, %v3227
        %v3229 = vrot.slane %v3224, %v3228
        %v3231 = vadd.f32 %v3223, %v3229
        %v3232 = vmax.f32 %v3231, 0.0
        %vm3233 = vcmask 588800
        %3234 = vst.msk [vmem:[%s159] sm:$0xff] %vm3233, %v3232
        %s3235 = scalar_lea.vmem %s1, 2304
        %v3236 = vld [vmem:[%s3235] sm:$0xf]
        %v3237 = vld [vmem:[%s3235 + $0x4] sm:$0xf]
        %v3238 = vld [vmem:[%s3235 + $0x8] sm:$0xf]
        %v3239 = vld [vmem:[%s3235 + $0xc] sm:$0xf]
        %v3240 = vld [vmem:[%s3235 + $0x10] sm:$0xf]
        %v3241 = vld [vmem:[%s3235 + $0x14] sm:$0xf]
        %v3242 = vld [vmem:[%s3235 + $0x18] sm:$0xf]
        %v3243 = vld [vmem:[%s3235 + $0x1c] sm:$0xf]
        %v3244 = vld [vmem:[%s3235 + $0x20] sm:$0xf]
        %v3245 = vld [vmem:[%s3235 + $0x24] sm:$0xf]
        %v3246 = vld [vmem:[%s3235 + $0x28] sm:$0xf]
        %v3247 = vld [vmem:[%s3235 + $0x2c] sm:$0xf]
        %v3248 = vld [vmem:[%s3235 + $0x30] sm:$0xf]
        %v3249 = vld [vmem:[%s3235 + $0x34] sm:$0xf]
        %v3250 = vld [vmem:[%s3235 + $0x38] sm:$0xf]
        %v3251 = vld [vmem:[%s3235 + $0x3c] sm:$0xf]
        %v3252 = vld [vmem:[%s3235 + $0x40] sm:$0xf]
        %v3253 = vld [vmem:[%s3235 + $0x44] sm:$0xf]
        %v3254 = vld [vmem:[%s3235 + $0x48] sm:$0xf]
        %v3255 = vld [vmem:[%s3235 + $0x4c] sm:$0xf]
        %v3256 = vld [vmem:[%s3235 + $0x50] sm:$0xf]
        %v3257 = vld [vmem:[%s3235 + $0x54] sm:$0xf]
        %v3258 = vld [vmem:[%s3235 + $0x58] sm:$0xf]
        %v3259 = vld [vmem:[%s3235 + $0x5c] sm:$0xf]
        %v3260 = vld [vmem:[%s3235 + $0x60] sm:$0xf]
        %v3261 = vld [vmem:[%s3235 + $0x64] sm:$0xf]
        %v3262 = vld [vmem:[%s3235 + $0x68] sm:$0xf]
        %v3263 = vld [vmem:[%s3235 + $0x6c] sm:$0xf]
        %v3264 = vld [vmem:[%s3235 + $0x70] sm:$0xf]
        %v3265 = vld [vmem:[%s3235 + $0x74] sm:$0xf]
        %v3266 = vld [vmem:[%s3235 + $0x78] sm:$0xf]
        %v3267 = vld [vmem:[%s3235 + $0x7c] sm:$0xf]
        %v3268 = vld [vmem:[%s3235 + $0x80] sm:$0xf]
        %v3269 = vld [vmem:[%s3235 + $0x84] sm:$0xf]
        %v3270 = vld [vmem:[%s3235 + $0x88] sm:$0xf]
        %v3271 = vld [vmem:[%s3235 + $0x8c] sm:$0xf]
        %v3272 = vld [vmem:[%s3235 + $0x90] sm:$0xf]
        %v3273 = vld [vmem:[%s3235 + $0x94] sm:$0xf]
        %v3274 = vld [vmem:[%s3235 + $0x98] sm:$0xf]
        %v3275 = vld [vmem:[%s3235 + $0x9c] sm:$0xf]
        %v3276 = vld [vmem:[%s3235 + $0xa0] sm:$0xf]
        %v3277 = vld [vmem:[%s3235 + $0xa4] sm:$0xf]
        %v3278 = vld [vmem:[%s3235 + $0xa8] sm:$0xf]
        %v3279 = vld [vmem:[%s3235 + $0xac] sm:$0xf]
        %v3280 = vld [vmem:[%s3235 + $0xb0] sm:$0xf]
        %v3281 = vld [vmem:[%s3235 + $0xb4] sm:$0xf]
        %v3282 = vld [vmem:[%s3235 + $0xb8] sm:$0xf]
        %v3283 = vld [vmem:[%s3235 + $0xbc] sm:$0xf]
        %v3284 = vld [vmem:[%s3235 + $0xc0] sm:$0xf]
        %v3285 = vld [vmem:[%s3235 + $0xc4] sm:$0xf]
        %v3286 = vld [vmem:[%s3235 + $0xc8] sm:$0xf]
        %v3287 = vld [vmem:[%s3235 + $0xcc] sm:$0xf]
        %v3288 = vld [vmem:[%s3235 + $0xd0] sm:$0xf]
        %v3289 = vld [vmem:[%s3235 + $0xd4] sm:$0xf]
        %v3290 = vld [vmem:[%s3235 + $0xd8] sm:$0xf]
        %v3291 = vld [vmem:[%s3235 + $0xdc] sm:$0xf]
        %v3292 = vld [vmem:[%s3235 + $0xe0] sm:$0xf]
        %v3293 = vld [vmem:[%s3235 + $0xe4] sm:$0xf]
        %v3294 = vld [vmem:[%s3235 + $0xe8] sm:$0xf]
        %v3295 = vld [vmem:[%s3235 + $0xec] sm:$0xf]
        %v3296 = vld [vmem:[%s3235 + $0xf0] sm:$0xf]
        %v3297 = vld [vmem:[%s3235 + $0xf4] sm:$0xf]
        %v3298 = vld [vmem:[%s3235 + $0xf8] sm:$0xf]
        %v3299 = vld [vmem:[%s3235 + $0xfc] sm:$0xf]
        %v3300 = vld [vmem:[%s3235 + $0x100] sm:$0xf]
        %v3301 = vld [vmem:[%s3235 + $0x104] sm:$0xf]
        %v3302 = vld [vmem:[%s3235 + $0x108] sm:$0xf]
        %v3303 = vld [vmem:[%s3235 + $0x10c] sm:$0xf]
        %v3304 = vld [vmem:[%s3235 + $0x110] sm:$0xf]
        %v3305 = vld [vmem:[%s3235 + $0x114] sm:$0xf]
        %v3306 = vld [vmem:[%s3235 + $0x118] sm:$0xf]
        %v3307 = vld [vmem:[%s3235 + $0x11c] sm:$0xf]
        %v3308 = vld [vmem:[%s3235 + $0x120] sm:$0xf]
        %v3309 = vld [vmem:[%s3235 + $0x124] sm:$0xf]
        %v3310 = vld [vmem:[%s3235 + $0x128] sm:$0xf]
        %v3311 = vld [vmem:[%s3235 + $0x12c] sm:$0xf]
        %v3312 = vld [vmem:[%s3235 + $0x130] sm:$0xf]
        %v3313 = vld [vmem:[%s3235 + $0x134] sm:$0xf]
        %v3314 = vld [vmem:[%s3235 + $0x138] sm:$0xf]
        %v3315 = vld [vmem:[%s3235 + $0x13c] sm:$0xf]
        %v3316 = vld [vmem:[%s3235 + $0x140] sm:$0xf]
        %v3317 = vld [vmem:[%s3235 + $0x144] sm:$0xf]
        %v3318 = vld [vmem:[%s3235 + $0x148] sm:$0xf]
        %v3319 = vld [vmem:[%s3235 + $0x14c] sm:$0xf]
        %v3320 = vld [vmem:[%s3235 + $0x150] sm:$0xf]
        %v3321 = vld [vmem:[%s3235 + $0x154] sm:$0xf]
        %v3322 = vld [vmem:[%s3235 + $0x158] sm:$0xf]
        %v3323 = vld [vmem:[%s3235 + $0x15c] sm:$0xf]
        %v3324 = vld [vmem:[%s3235 + $0x160] sm:$0xf]
        %v3325 = vld [vmem:[%s3235 + $0x164] sm:$0xf]
        %v3326 = vld [vmem:[%s3235 + $0x168] sm:$0xf]
        %v3327 = vld [vmem:[%s3235 + $0x16c] sm:$0xf]
        %v3328 = vld [vmem:[%s3235 + $0x170] sm:$0xf]
        %v3329 = vld [vmem:[%s3235 + $0x174] sm:$0xf]
        %v3330 = vld [vmem:[%s3235 + $0x178] sm:$0xf]
        %v3331 = vld [vmem:[%s3235 + $0x17c] sm:$0xf]
        %v3428 = vunpack.c.l.b16 %v3236
        %v3429 = vunpack.c.l.b16 %v3237
        %v3430 = vunpack.c.l.b16 %v3238
        %v3431 = vunpack.c.l.b16 %v3239
        %v3432 = vunpack.c.l.b16 %v3240
        %v3433 = vunpack.c.l.b16 %v3241
        %v3434 = vunpack.c.l.b16 %v3242
        %v3435 = vunpack.c.l.b16 %v3243
        %v3436 = vunpack.c.l.b16 %v3244
        %v3437 = vunpack.c.l.b16 %v3245
        %v3438 = vunpack.c.l.b16 %v3246
        %v3439 = vunpack.c.l.b16 %v3247
        %v3440 = vunpack.c.l.b16 %v3248
        %v3441 = vunpack.c.l.b16 %v3249
        %v3442 = vunpack.c.l.b16 %v3250
        %v3443 = vunpack.c.l.b16 %v3251
        %v3444 = vunpack.c.l.b16 %v3252
        %v3445 = vunpack.c.l.b16 %v3253
        %v3446 = vunpack.c.l.b16 %v3254
        %v3447 = vunpack.c.l.b16 %v3255
        %v3448 = vunpack.c.l.b16 %v3256
        %v3449 = vunpack.c.l.b16 %v3257
        %v3450 = vunpack.c.l.b16 %v3258
        %v3451 = vunpack.c.l.b16 %v3259
        %v3452 = vunpack.c.l.b16 %v3260
        %v3453 = vunpack.c.l.b16 %v3261
        %v3454 = vunpack.c.l.b16 %v3262
        %v3455 = vunpack.c.l.b16 %v3263
        %v3456 = vunpack.c.l.b16 %v3264
        %v3457 = vunpack.c.l.b16 %v3265
        %v3458 = vunpack.c.l.b16 %v3266
        %v3459 = vunpack.c.l.b16 %v3267
        %v3460 = vunpack.c.l.b16 %v3268
        %v3461 = vunpack.c.l.b16 %v3269
        %v3462 = vunpack.c.l.b16 %v3270
        %v3463 = vunpack.c.l.b16 %v3271
        %v3464 = vunpack.c.l.b16 %v3272
        %v3465 = vunpack.c.l.b16 %v3273
        %v3466 = vunpack.c.l.b16 %v3274
        %v3467 = vunpack.c.l.b16 %v3275
        %v3468 = vunpack.c.l.b16 %v3276
        %v3469 = vunpack.c.l.b16 %v3277
        %v3470 = vunpack.c.l.b16 %v3278
        %v3471 = vunpack.c.l.b16 %v3279
        %v3472 = vunpack.c.l.b16 %v3280
        %v3473 = vunpack.c.l.b16 %v3281
        %v3474 = vunpack.c.l.b16 %v3282
        %v3475 = vunpack.c.l.b16 %v3283
        %v3476 = vunpack.c.l.b16 %v3284
        %v3477 = vunpack.c.l.b16 %v3285
        %v3478 = vunpack.c.l.b16 %v3286
        %v3479 = vunpack.c.l.b16 %v3287
        %v3480 = vunpack.c.l.b16 %v3288
        %v3481 = vunpack.c.l.b16 %v3289
        %v3482 = vunpack.c.l.b16 %v3290
        %v3483 = vunpack.c.l.b16 %v3291
        %v3484 = vunpack.c.l.b16 %v3292
        %v3485 = vunpack.c.l.b16 %v3293
        %v3486 = vunpack.c.l.b16 %v3294
        %v3487 = vunpack.c.l.b16 %v3295
        %v3488 = vunpack.c.l.b16 %v3296
        %v3489 = vunpack.c.l.b16 %v3297
        %v3490 = vunpack.c.l.b16 %v3298
        %v3491 = vunpack.c.l.b16 %v3299
        %v3492 = vunpack.c.l.b16 %v3300
        %v3493 = vunpack.c.l.b16 %v3301
        %v3494 = vunpack.c.l.b16 %v3302
        %v3495 = vunpack.c.l.b16 %v3303
        %v3496 = vunpack.c.l.b16 %v3304
        %v3497 = vunpack.c.l.b16 %v3305
        %v3498 = vunpack.c.l.b16 %v3306
        %v3499 = vunpack.c.l.b16 %v3307
        %v3500 = vunpack.c.l.b16 %v3308
        %v3501 = vunpack.c.l.b16 %v3309
        %v3502 = vunpack.c.l.b16 %v3310
        %v3503 = vunpack.c.l.b16 %v3311
        %v3504 = vunpack.c.l.b16 %v3312
        %v3505 = vunpack.c.l.b16 %v3313
        %v3506 = vunpack.c.l.b16 %v3314
        %v3507 = vunpack.c.l.b16 %v3315
        %v3508 = vunpack.c.l.b16 %v3316
        %v3509 = vunpack.c.l.b16 %v3317
        %v3510 = vunpack.c.l.b16 %v3318
        %v3511 = vunpack.c.l.b16 %v3319
        %v3512 = vunpack.c.l.b16 %v3320
        %v3513 = vunpack.c.l.b16 %v3321
        %v3514 = vunpack.c.l.b16 %v3322
        %v3515 = vunpack.c.l.b16 %v3323
        %v3516 = vunpack.c.l.b16 %v3324
        %v3517 = vunpack.c.l.b16 %v3325
        %v3518 = vunpack.c.l.b16 %v3326
        %v3519 = vunpack.c.l.b16 %v3327
        %v3520 = vunpack.c.l.b16 %v3328
        %v3521 = vunpack.c.l.b16 %v3329
        %v3522 = vunpack.c.l.b16 %v3330
        %v3523 = vunpack.c.l.b16 %v3331
        %v3524 = vpack.c.b16 %v3429, %v3428
        %v3525 = vpack.c.b16 %v3431, %v3430
        %v3526 = vpack.c.b16 %v3433, %v3432
        %v3527 = vpack.c.b16 %v3435, %v3434
        %v3528 = vpack.c.b16 %v3437, %v3436
        %v3529 = vpack.c.b16 %v3439, %v3438
        %v3530 = vpack.c.b16 %v3441, %v3440
        %v3531 = vpack.c.b16 %v3443, %v3442
        %v3532 = vpack.c.b16 %v3445, %v3444
        %v3533 = vpack.c.b16 %v3447, %v3446
        %v3534 = vpack.c.b16 %v3449, %v3448
        %v3535 = vpack.c.b16 %v3451, %v3450
        %v3536 = vpack.c.b16 %v3453, %v3452
        %v3537 = vpack.c.b16 %v3455, %v3454
        %v3538 = vpack.c.b16 %v3457, %v3456
        %v3539 = vpack.c.b16 %v3459, %v3458
        %v3540 = vpack.c.b16 %v3461, %v3460
        %v3541 = vpack.c.b16 %v3463, %v3462
        %v3542 = vpack.c.b16 %v3465, %v3464
        %v3543 = vpack.c.b16 %v3467, %v3466
        %v3544 = vpack.c.b16 %v3469, %v3468
        %v3545 = vpack.c.b16 %v3471, %v3470
        %v3546 = vpack.c.b16 %v3473, %v3472
        %v3547 = vpack.c.b16 %v3475, %v3474
        %v3548 = vpack.c.b16 %v3477, %v3476
        %v3549 = vpack.c.b16 %v3479, %v3478
        %v3550 = vpack.c.b16 %v3481, %v3480
        %v3551 = vpack.c.b16 %v3483, %v3482
        %v3552 = vpack.c.b16 %v3485, %v3484
        %v3553 = vpack.c.b16 %v3487, %v3486
        %v3554 = vpack.c.b16 %v3489, %v3488
        %v3555 = vpack.c.b16 %v3491, %v3490
        %v3556 = vpack.c.b16 %v3493, %v3492
        %v3557 = vpack.c.b16 %v3495, %v3494
        %v3558 = vpack.c.b16 %v3497, %v3496
        %v3559 = vpack.c.b16 %v3499, %v3498
        %v3560 = vpack.c.b16 %v3501, %v3500
        %v3561 = vpack.c.b16 %v3503, %v3502
        %v3562 = vpack.c.b16 %v3505, %v3504
        %v3563 = vpack.c.b16 %v3507, %v3506
        %v3564 = vpack.c.b16 %v3509, %v3508
        %v3565 = vpack.c.b16 %v3511, %v3510
        %v3566 = vpack.c.b16 %v3513, %v3512
        %v3567 = vpack.c.b16 %v3515, %v3514
        %v3568 = vpack.c.b16 %v3517, %v3516
        %v3569 = vpack.c.b16 %v3519, %v3518
        %v3570 = vpack.c.b16 %v3521, %v3520
        %v3571 = vpack.c.b16 %v3523, %v3522
        %3620 = vmatprep.subr.bf16.mxu0 0
        %3621 = vmatpush1.bf16.msra.mxu0 %v3524
        %3622 = vmatprep.subr.bf16.mxu0 0
        %3623 = vmatpush1.bf16.msra.mxu0 %v3525
        %3624 = vmatprep.subr.bf16.mxu0 0
        %3625 = vmatpush1.bf16.msra.mxu0 %v3526
        %3626 = vmatprep.subr.bf16.mxu0 0
        %3627 = vmatpush1.bf16.msra.mxu0 %v3527
        %3628 = vmatprep.subr.bf16.mxu0 0
        %3629 = vmatpush1.bf16.msra.mxu0 %v3528
        %3630 = vmatprep.subr.bf16.mxu0 0
        %3631 = vmatpush1.bf16.msra.mxu0 %v3529
        %3632 = vmatprep.subr.bf16.mxu0 0
        %3633 = vmatpush1.bf16.msra.mxu0 %v3530
        %3634 = vmatprep.subr.bf16.mxu0 0
        %3635 = vmatpush1.bf16.msra.mxu0 %v3531
        %3636 = vmatprep.subr.bf16.mxu0 0
        %3637 = vmatpush1.bf16.msra.mxu0 %v3532
        %3638 = vmatprep.subr.bf16.mxu0 0
        %3639 = vmatpush1.bf16.msra.mxu0 %v3533
        %3640 = vmatprep.subr.bf16.mxu0 0
        %3641 = vmatpush1.bf16.msra.mxu0 %v3534
        %3642 = vmatprep.subr.bf16.mxu0 0
        %3643 = vmatpush1.bf16.msra.mxu0 %v3535
        %3644 = vmatprep.subr.bf16.mxu0 0
        %3645 = vmatpush1.bf16.msra.mxu0 %v3536
        %3646 = vmatprep.subr.bf16.mxu0 0
        %3647 = vmatpush1.bf16.msra.mxu0 %v3537
        %3648 = vmatprep.subr.bf16.mxu0 0
        %3649 = vmatpush1.bf16.msra.mxu0 %v3538
        %3650 = vmatprep.subr.bf16.mxu0 0
        %3651 = vmatpush1.bf16.msra.mxu0 %v3539
        %3652 = vmatprep.mubr.bf16.mxu0 %v275
        %3653 = vmatmul.mubr.bf16.gmra.mrb[0].mxu0 %v274
        %v3654 = vpop.f32.mrb[0].mxu0
        %v3655 = vadd.f32 0.0, %v3654
        %v3656 = vpop.f32.mrb[0].mxu0
        %v3657 = vpop.f32.mrb[0].mxu0
        %v3658 = vpop.f32.mrb[0].mxu0
        %3659 = vdwg.mxu0
        %3660 = vmatprep.subr.bf16.mxu0 0
        %3661 = vmatpush1.bf16.msra.mxu0 %v3540
        %3662 = vmatprep.subr.bf16.mxu0 0
        %3663 = vmatpush1.bf16.msra.mxu0 %v3541
        %3664 = vmatprep.subr.bf16.mxu0 0
        %3665 = vmatpush1.bf16.msra.mxu0 %v3542
        %3666 = vmatprep.subr.bf16.mxu0 0
        %3667 = vmatpush1.bf16.msra.mxu0 %v3543
        %3668 = vmatprep.subr.bf16.mxu0 0
        %3669 = vmatpush1.bf16.msra.mxu0 %v3544
        %3670 = vmatprep.subr.bf16.mxu0 0
        %3671 = vmatpush1.bf16.msra.mxu0 %v3545
        %3672 = vmatprep.subr.bf16.mxu0 0
        %3673 = vmatpush1.bf16.msra.mxu0 %v3546
        %3674 = vmatprep.subr.bf16.mxu0 0
        %3675 = vmatpush1.bf16.msra.mxu0 %v3547
        %3676 = vmatprep.subr.bf16.mxu0 0
        %3677 = vmatpush1.bf16.msra.mxu0 %v3548
        %3678 = vmatprep.subr.bf16.mxu0 0
        %3679 = vmatpush1.bf16.msra.mxu0 %v3549
        %3680 = vmatprep.subr.bf16.mxu0 0
        %3681 = vmatpush1.bf16.msra.mxu0 %v3550
        %3682 = vmatprep.subr.bf16.mxu0 0
        %3683 = vmatpush1.bf16.msra.mxu0 %v3551
        %3684 = vmatprep.subr.bf16.mxu0 0
        %3685 = vmatpush1.bf16.msra.mxu0 %v3552
        %3686 = vmatprep.subr.bf16.mxu0 0
        %3687 = vmatpush1.bf16.msra.mxu0 %v3553
        %3688 = vmatprep.subr.bf16.mxu0 0
        %3689 = vmatpush1.bf16.msra.mxu0 %v3554
        %3690 = vmatprep.subr.bf16.mxu0 0
        %3691 = vmatpush1.bf16.msra.mxu0 %v3555
        %3692 = vmatprep.mubr.bf16.mxu0 %v277
        %3693 = vmatmul.mubr.bf16.gmra.mrb[0].mxu0 %v276
        %v3694 = vpop.f32.mrb[0].mxu0
        %v3695 = vadd.f32 %v3655, %v3694
        %v3696 = vpop.f32.mrb[0].mxu0
        %v3697 = vpop.f32.mrb[0].mxu0
        %v3698 = vpop.f32.mrb[0].mxu0
        %3699 = vdwg.mxu0
        %3700 = vmatprep.subr.bf16.mxu0 0
        %3701 = vmatpush1.bf16.msra.mxu0 %v3556
        %3702 = vmatprep.subr.bf16.mxu0 0
        %3703 = vmatpush1.bf16.msra.mxu0 %v3557
        %3704 = vmatprep.subr.bf16.mxu0 0
        %3705 = vmatpush1.bf16.msra.mxu0 %v3558
        %3706 = vmatprep.subr.bf16.mxu0 0
        %3707 = vmatpush1.bf16.msra.mxu0 %v3559
        %3708 = vmatprep.subr.bf16.mxu0 0
        %3709 = vmatpush1.bf16.msra.mxu0 %v3560
        %3710 = vmatprep.subr.bf16.mxu0 0
        %3711 = vmatpush1.bf16.msra.mxu0 %v3561
        %3712 = vmatprep.subr.bf16.mxu0 0
        %3713 = vmatpush1.bf16.msra.mxu0 %v3562
        %3714 = vmatprep.subr.bf16.mxu0 0
        %3715 = vmatpush1.bf16.msra.mxu0 %v3563
        %3716 = vmatprep.subr.bf16.mxu0 0
        %3717 = vmatpush1.bf16.msra.mxu0 %v3564
        %3718 = vmatprep.subr.bf16.mxu0 0
        %3719 = vmatpush1.bf16.msra.mxu0 %v3565
        %3720 = vmatprep.subr.bf16.mxu0 0
        %3721 = vmatpush1.bf16.msra.mxu0 %v3566
        %3722 = vmatprep.subr.bf16.mxu0 0
        %3723 = vmatpush1.bf16.msra.mxu0 %v3567
        %3724 = vmatprep.subr.bf16.mxu0 0
        %3725 = vmatpush1.bf16.msra.mxu0 %v3568
        %3726 = vmatprep.subr.bf16.mxu0 0
        %3727 = vmatpush1.bf16.msra.mxu0 %v3569
        %3728 = vmatprep.subr.bf16.mxu0 0
        %3729 = vmatpush1.bf16.msra.mxu0 %v3570
        %3730 = vmatprep.subr.bf16.mxu0 0
        %3731 = vmatpush1.bf16.msra.mxu0 %v3571
        %3732 = vmatprep.mubr.bf16.mxu0 %v279
        %3733 = vmatmul.mubr.bf16.gmra.mrb[0].mxu0 %v278
        %v3734 = vpop.f32.mrb[0].mxu0
        %v3735 = vadd.f32 %v3695, %v3734
        %v3736 = vpop.f32.mrb[0].mxu0
        %v3737 = vpop.f32.mrb[0].mxu0
        %v3738 = vpop.f32.mrb[0].mxu0
        %3739 = vdwg.mxu0
        %s3740 = scalar_lea.vmem %s1, 2688
        %v3741 = vld [vmem:[%s3740] sm:$0xf]
        %v3742 = vld [vmem:[%s3740 + $0x4] sm:$0xf]
        %v3743 = vld [vmem:[%s3740 + $0x8] sm:$0xf]
        %v3744 = vld [vmem:[%s3740 + $0xc] sm:$0xf]
        %v3745 = vld [vmem:[%s3740 + $0x10] sm:$0xf]
        %v3746 = vld [vmem:[%s3740 + $0x14] sm:$0xf]
        %v3747 = vld [vmem:[%s3740 + $0x18] sm:$0xf]
        %v3748 = vld [vmem:[%s3740 + $0x1c] sm:$0xf]
        %v3749 = vld [vmem:[%s3740 + $0x20] sm:$0xf]
        %v3750 = vld [vmem:[%s3740 + $0x24] sm:$0xf]
        %v3751 = vld [vmem:[%s3740 + $0x28] sm:$0xf]
        %v3752 = vld [vmem:[%s3740 + $0x2c] sm:$0xf]
        %v3753 = vld [vmem:[%s3740 + $0x30] sm:$0xf]
        %v3754 = vld [vmem:[%s3740 + $0x34] sm:$0xf]
        %v3755 = vld [vmem:[%s3740 + $0x38] sm:$0xf]
        %v3756 = vld [vmem:[%s3740 + $0x3c] sm:$0xf]
        %v3757 = vld [vmem:[%s3740 + $0x40] sm:$0xf]
        %v3758 = vld [vmem:[%s3740 + $0x44] sm:$0xf]
        %v3759 = vld [vmem:[%s3740 + $0x48] sm:$0xf]
        %v3760 = vld [vmem:[%s3740 + $0x4c] sm:$0xf]
        %v3761 = vld [vmem:[%s3740 + $0x50] sm:$0xf]
        %v3762 = vld [vmem:[%s3740 + $0x54] sm:$0xf]
        %v3763 = vld [vmem:[%s3740 + $0x58] sm:$0xf]
        %v3764 = vld [vmem:[%s3740 + $0x5c] sm:$0xf]
        %v3765 = vld [vmem:[%s3740 + $0x60] sm:$0xf]
        %v3766 = vld [vmem:[%s3740 + $0x64] sm:$0xf]
        %v3767 = vld [vmem:[%s3740 + $0x68] sm:$0xf]
        %v3768 = vld [vmem:[%s3740 + $0x6c] sm:$0xf]
        %v3769 = vld [vmem:[%s3740 + $0x70] sm:$0xf]
        %v3770 = vld [vmem:[%s3740 + $0x74] sm:$0xf]
        %v3771 = vld [vmem:[%s3740 + $0x78] sm:$0xf]
        %v3772 = vld [vmem:[%s3740 + $0x7c] sm:$0xf]
        %v3773 = vld [vmem:[%s3740 + $0x80] sm:$0xf]
        %v3774 = vld [vmem:[%s3740 + $0x84] sm:$0xf]
        %v3775 = vld [vmem:[%s3740 + $0x88] sm:$0xf]
        %v3776 = vld [vmem:[%s3740 + $0x8c] sm:$0xf]
        %v3777 = vld [vmem:[%s3740 + $0x90] sm:$0xf]
        %v3778 = vld [vmem:[%s3740 + $0x94] sm:$0xf]
        %v3779 = vld [vmem:[%s3740 + $0x98] sm:$0xf]
        %v3780 = vld [vmem:[%s3740 + $0x9c] sm:$0xf]
        %v3781 = vld [vmem:[%s3740 + $0xa0] sm:$0xf]
        %v3782 = vld [vmem:[%s3740 + $0xa4] sm:$0xf]
        %v3783 = vld [vmem:[%s3740 + $0xa8] sm:$0xf]
        %v3784 = vld [vmem:[%s3740 + $0xac] sm:$0xf]
        %v3785 = vld [vmem:[%s3740 + $0xb0] sm:$0xf]
        %v3786 = vld [vmem:[%s3740 + $0xb4] sm:$0xf]
        %v3787 = vld [vmem:[%s3740 + $0xb8] sm:$0xf]
        %v3788 = vld [vmem:[%s3740 + $0xbc] sm:$0xf]
        %v3789 = vld [vmem:[%s3740 + $0xc0] sm:$0xf]
        %v3790 = vld [vmem:[%s3740 + $0xc4] sm:$0xf]
        %v3791 = vld [vmem:[%s3740 + $0xc8] sm:$0xf]
        %v3792 = vld [vmem:[%s3740 + $0xcc] sm:$0xf]
        %v3793 = vld [vmem:[%s3740 + $0xd0] sm:$0xf]
        %v3794 = vld [vmem:[%s3740 + $0xd4] sm:$0xf]
        %v3795 = vld [vmem:[%s3740 + $0xd8] sm:$0xf]
        %v3796 = vld [vmem:[%s3740 + $0xdc] sm:$0xf]
        %v3797 = vld [vmem:[%s3740 + $0xe0] sm:$0xf]
        %v3798 = vld [vmem:[%s3740 + $0xe4] sm:$0xf]
        %v3799 = vld [vmem:[%s3740 + $0xe8] sm:$0xf]
        %v3800 = vld [vmem:[%s3740 + $0xec] sm:$0xf]
        %v3801 = vld [vmem:[%s3740 + $0xf0] sm:$0xf]
        %v3802 = vld [vmem:[%s3740 + $0xf4] sm:$0xf]
        %v3803 = vld [vmem:[%s3740 + $0xf8] sm:$0xf]
        %v3804 = vld [vmem:[%s3740 + $0xfc] sm:$0xf]
        %v3805 = vld [vmem:[%s3740 + $0x100] sm:$0xf]
        %v3806 = vld [vmem:[%s3740 + $0x104] sm:$0xf]
        %v3807 = vld [vmem:[%s3740 + $0x108] sm:$0xf]
        %v3808 = vld [vmem:[%s3740 + $0x10c] sm:$0xf]
        %v3809 = vld [vmem:[%s3740 + $0x110] sm:$0xf]
        %v3810 = vld [vmem:[%s3740 + $0x114] sm:$0xf]
        %v3811 = vld [vmem:[%s3740 + $0x118] sm:$0xf]
        %v3812 = vld [vmem:[%s3740 + $0x11c] sm:$0xf]
        %v3813 = vld [vmem:[%s3740 + $0x120] sm:$0xf]
        %v3814 = vld [vmem:[%s3740 + $0x124] sm:$0xf]
        %v3815 = vld [vmem:[%s3740 + $0x128] sm:$0xf]
        %v3816 = vld [vmem:[%s3740 + $0x12c] sm:$0xf]
        %v3817 = vld [vmem:[%s3740 + $0x130] sm:$0xf]
        %v3818 = vld [vmem:[%s3740 + $0x134] sm:$0xf]
        %v3819 = vld [vmem:[%s3740 + $0x138] sm:$0xf]
        %v3820 = vld [vmem:[%s3740 + $0x13c] sm:$0xf]
        %v3821 = vld [vmem:[%s3740 + $0x140] sm:$0xf]
        %v3822 = vld [vmem:[%s3740 + $0x144] sm:$0xf]
        %v3823 = vld [vmem:[%s3740 + $0x148] sm:$0xf]
        %v3824 = vld [vmem:[%s3740 + $0x14c] sm:$0xf]
        %v3825 = vld [vmem:[%s3740 + $0x150] sm:$0xf]
        %v3826 = vld [vmem:[%s3740 + $0x154] sm:$0xf]
        %v3827 = vld [vmem:[%s3740 + $0x158] sm:$0xf]
        %v3828 = vld [vmem:[%s3740 + $0x15c] sm:$0xf]
        %v3829 = vld [vmem:[%s3740 + $0x160] sm:$0xf]
        %v3830 = vld [vmem:[%s3740 + $0x164] sm:$0xf]
        %v3831 = vld [vmem:[%s3740 + $0x168] sm:$0xf]
        %v3832 = vld [vmem:[%s3740 + $0x16c] sm:$0xf]
        %v3833 = vld [vmem:[%s3740 + $0x170] sm:$0xf]
        %v3834 = vld [vmem:[%s3740 + $0x174] sm:$0xf]
        %v3835 = vld [vmem:[%s3740 + $0x178] sm:$0xf]
        %v3836 = vld [vmem:[%s3740 + $0x17c] sm:$0xf]
        %v3933 = vunpack.c.l.b16 %v3741
        %v3934 = vunpack.c.l.b16 %v3742
        %v3935 = vunpack.c.l.b16 %v3743
        %v3936 = vunpack.c.l.b16 %v3744
        %v3937 = vunpack.c.l.b16 %v3745
        %v3938 = vunpack.c.l.b16 %v3746
        %v3939 = vunpack.c.l.b16 %v3747
        %v3940 = vunpack.c.l.b16 %v3748
        %v3941 = vunpack.c.l.b16 %v3749
        %v3942 = vunpack.c.l.b16 %v3750
        %v3943 = vunpack.c.l.b16 %v3751
        %v3944 = vunpack.c.l.b16 %v3752
        %v3945 = vunpack.c.l.b16 %v3753
        %v3946 = vunpack.c.l.b16 %v3754
        %v3947 = vunpack.c.l.b16 %v3755
        %v3948 = vunpack.c.l.b16 %v3756
        %v3949 = vunpack.c.l.b16 %v3757
        %v3950 = vunpack.c.l.b16 %v3758
        %v3951 = vunpack.c.l.b16 %v3759
        %v3952 = vunpack.c.l.b16 %v3760
        %v3953 = vunpack.c.l.b16 %v3761
        %v3954 = vunpack.c.l.b16 %v3762
        %v3955 = vunpack.c.l.b16 %v3763
        %v3956 = vunpack.c.l.b16 %v3764
        %v3957 = vunpack.c.l.b16 %v3765
        %v3958 = vunpack.c.l.b16 %v3766
        %v3959 = vunpack.c.l.b16 %v3767
        %v3960 = vunpack.c.l.b16 %v3768
        %v3961 = vunpack.c.l.b16 %v3769
        %v3962 = vunpack.c.l.b16 %v3770
        %v3963 = vunpack.c.l.b16 %v3771
        %v3964 = vunpack.c.l.b16 %v3772
        %v3965 = vunpack.c.l.b16 %v3773
        %v3966 = vunpack.c.l.b16 %v3774
        %v3967 = vunpack.c.l.b16 %v3775
        %v3968 = vunpack.c.l.b16 %v3776
        %v3969 = vunpack.c.l.b16 %v3777
        %v3970 = vunpack.c.l.b16 %v3778
        %v3971 = vunpack.c.l.b16 %v3779
        %v3972 = vunpack.c.l.b16 %v3780
        %v3973 = vunpack.c.l.b16 %v3781
        %v3974 = vunpack.c.l.b16 %v3782
        %v3975 = vunpack.c.l.b16 %v3783
        %v3976 = vunpack.c.l.b16 %v3784
        %v3977 = vunpack.c.l.b16 %v3785
        %v3978 = vunpack.c.l.b16 %v3786
        %v3979 = vunpack.c.l.b16 %v3787
        %v3980 = vunpack.c.l.b16 %v3788
        %v3981 = vunpack.c.l.b16 %v3789
        %v3982 = vunpack.c.l.b16 %v3790
        %v3983 = vunpack.c.l.b16 %v3791
        %v3984 = vunpack.c.l.b16 %v3792
        %v3985 = vunpack.c.l.b16 %v3793
        %v3986 = vunpack.c.l.b16 %v3794
        %v3987 = vunpack.c.l.b16 %v3795
        %v3988 = vunpack.c.l.b16 %v3796
        %v3989 = vunpack.c.l.b16 %v3797
        %v3990 = vunpack.c.l.b16 %v3798
        %v3991 = vunpack.c.l.b16 %v3799
        %v3992 = vunpack.c.l.b16 %v3800
        %v3993 = vunpack.c.l.b16 %v3801
        %v3994 = vunpack.c.l.b16 %v3802
        %v3995 = vunpack.c.l.b16 %v3803
        %v3996 = vunpack.c.l.b16 %v3804
        %v3997 = vunpack.c.l.b16 %v3805
        %v3998 = vunpack.c.l.b16 %v3806
        %v3999 = vunpack.c.l.b16 %v3807
        %v4000 = vunpack.c.l.b16 %v3808
        %v4001 = vunpack.c.l.b16 %v3809
        %v4002 = vunpack.c.l.b16 %v3810
        %v4003 = vunpack.c.l.b16 %v3811
        %v4004 = vunpack.c.l.b16 %v3812
        %v4005 = vunpack.c.l.b16 %v3813
        %v4006 = vunpack.c.l.b16 %v3814
        %v4007 = vunpack.c.l.b16 %v3815
        %v4008 = vunpack.c.l.b16 %v3816
        %v4009 = vunpack.c.l.b16 %v3817
        %v4010 = vunpack.c.l.b16 %v3818
        %v4011 = vunpack.c.l.b16 %v3819
        %v4012 = vunpack.c.l.b16 %v3820
        %v4013 = vunpack.c.l.b16 %v3821
        %v4014 = vunpack.c.l.b16 %v3822
        %v4015 = vunpack.c.l.b16 %v3823
        %v4016 = vunpack.c.l.b16 %v3824
        %v4017 = vunpack.c.l.b16 %v3825
        %v4018 = vunpack.c.l.b16 %v3826
        %v4019 = vunpack.c.l.b16 %v3827
        %v4020 = vunpack.c.l.b16 %v3828
        %v4021 = vunpack.c.l.b16 %v3829
        %v4022 = vunpack.c.l.b16 %v3830
        %v4023 = vunpack.c.l.b16 %v3831
        %v4024 = vunpack.c.l.b16 %v3832
        %v4025 = vunpack.c.l.b16 %v3833
        %v4026 = vunpack.c.l.b16 %v3834
        %v4027 = vunpack.c.l.b16 %v3835
        %v4028 = vunpack.c.l.b16 %v3836
        %v4029 = vpack.c.b16 %v3934, %v3933
        %v4030 = vpack.c.b16 %v3936, %v3935
        %v4031 = vpack.c.b16 %v3938, %v3937
        %v4032 = vpack.c.b16 %v3940, %v3939
        %v4033 = vpack.c.b16 %v3942, %v3941
        %v4034 = vpack.c.b16 %v3944, %v3943
        %v4035 = vpack.c.b16 %v3946, %v3945
        %v4036 = vpack.c.b16 %v3948, %v3947
        %v4037 = vpack.c.b16 %v3950, %v3949
        %v4038 = vpack.c.b16 %v3952, %v3951
        %v4039 = vpack.c.b16 %v3954, %v3953
        %v4040 = vpack.c.b16 %v3956, %v3955
        %v4041 = vpack.c.b16 %v3958, %v3957
        %v4042 = vpack.c.b16 %v3960, %v3959
        %v4043 = vpack.c.b16 %v3962, %v3961
        %v4044 = vpack.c.b16 %v3964, %v3963
        %v4045 = vpack.c.b16 %v3966, %v3965
        %v4046 = vpack.c.b16 %v3968, %v3967
        %v4047 = vpack.c.b16 %v3970, %v3969
        %v4048 = vpack.c.b16 %v3972, %v3971
        %v4049 = vpack.c.b16 %v3974, %v3973
        %v4050 = vpack.c.b16 %v3976, %v3975
        %v4051 = vpack.c.b16 %v3978, %v3977
        %v4052 = vpack.c.b16 %v3980, %v3979
        %v4053 = vpack.c.b16 %v3982, %v3981
        %v4054 = vpack.c.b16 %v3984, %v3983
        %v4055 = vpack.c.b16 %v3986, %v3985
        %v4056 = vpack.c.b16 %v3988, %v3987
        %v4057 = vpack.c.b16 %v3990, %v3989
        %v4058 = vpack.c.b16 %v3992, %v3991
        %v4059 = vpack.c.b16 %v3994, %v3993
        %v4060 = vpack.c.b16 %v3996, %v3995
        %v4061 = vpack.c.b16 %v3998, %v3997
        %v4062 = vpack.c.b16 %v4000, %v3999
        %v4063 = vpack.c.b16 %v4002, %v4001
        %v4064 = vpack.c.b16 %v4004, %v4003
        %v4065 = vpack.c.b16 %v4006, %v4005
        %v4066 = vpack.c.b16 %v4008, %v4007
        %v4067 = vpack.c.b16 %v4010, %v4009
        %v4068 = vpack.c.b16 %v4012, %v4011
        %v4069 = vpack.c.b16 %v4014, %v4013
        %v4070 = vpack.c.b16 %v4016, %v4015
        %v4071 = vpack.c.b16 %v4018, %v4017
        %v4072 = vpack.c.b16 %v4020, %v4019
        %v4073 = vpack.c.b16 %v4022, %v4021
        %v4074 = vpack.c.b16 %v4024, %v4023
        %v4075 = vpack.c.b16 %v4026, %v4025
        %v4076 = vpack.c.b16 %v4028, %v4027
        %4125 = vmatprep.subr.bf16.mxu0 0
        %4126 = vmatpush1.bf16.msra.mxu0 %v4029
        %4127 = vmatprep.subr.bf16.mxu0 0
        %4128 = vmatpush1.bf16.msra.mxu0 %v4030
        %4129 = vmatprep.subr.bf16.mxu0 0
        %4130 = vmatpush1.bf16.msra.mxu0 %v4031
        %4131 = vmatprep.subr.bf16.mxu0 0
        %4132 = vmatpush1.bf16.msra.mxu0 %v4032
        %4133 = vmatprep.subr.bf16.mxu0 0
        %4134 = vmatpush1.bf16.msra.mxu0 %v4033
        %4135 = vmatprep.subr.bf16.mxu0 0
        %4136 = vmatpush1.bf16.msra.mxu0 %v4034
        %4137 = vmatprep.subr.bf16.mxu0 0
        %4138 = vmatpush1.bf16.msra.mxu0 %v4035
        %4139 = vmatprep.subr.bf16.mxu0 0
        %4140 = vmatpush1.bf16.msra.mxu0 %v4036
        %4141 = vmatprep.subr.bf16.mxu0 0
        %4142 = vmatpush1.bf16.msra.mxu0 %v4037
        %4143 = vmatprep.subr.bf16.mxu0 0
        %4144 = vmatpush1.bf16.msra.mxu0 %v4038
        %4145 = vmatprep.subr.bf16.mxu0 0
        %4146 = vmatpush1.bf16.msra.mxu0 %v4039
        %4147 = vmatprep.subr.bf16.mxu0 0
        %4148 = vmatpush1.bf16.msra.mxu0 %v4040
        %4149 = vmatprep.subr.bf16.mxu0 0
        %4150 = vmatpush1.bf16.msra.mxu0 %v4041
        %4151 = vmatprep.subr.bf16.mxu0 0
        %4152 = vmatpush1.bf16.msra.mxu0 %v4042
        %4153 = vmatprep.subr.bf16.mxu0 0
        %4154 = vmatpush1.bf16.msra.mxu0 %v4043
        %4155 = vmatprep.subr.bf16.mxu0 0
        %4156 = vmatpush1.bf16.msra.mxu0 %v4044
        %4157 = vmatprep.mubr.bf16.mxu0 %v275
        %4158 = vmatmul.mubr.bf16.gmra.mrb[0].mxu0 %v274
        %v4159 = vpop.f32.mrb[0].mxu0
        %v4160 = vadd.f32 0.0, %v4159
        %v4161 = vpop.f32.mrb[0].mxu0
        %v4162 = vpop.f32.mrb[0].mxu0
        %v4163 = vpop.f32.mrb[0].mxu0
        %4164 = vdwg.mxu0
        %4165 = vmatprep.subr.bf16.mxu0 0
        %4166 = vmatpush1.bf16.msra.mxu0 %v4045
        %4167 = vmatprep.subr.bf16.mxu0 0
        %4168 = vmatpush1.bf16.msra.mxu0 %v4046
        %4169 = vmatprep.subr.bf16.mxu0 0
        %4170 = vmatpush1.bf16.msra.mxu0 %v4047
        %4171 = vmatprep.subr.bf16.mxu0 0
        %4172 = vmatpush1.bf16.msra.mxu0 %v4048
        %4173 = vmatprep.subr.bf16.mxu0 0
        %4174 = vmatpush1.bf16.msra.mxu0 %v4049
        %4175 = vmatprep.subr.bf16.mxu0 0
        %4176 = vmatpush1.bf16.msra.mxu0 %v4050
        %4177 = vmatprep.subr.bf16.mxu0 0
        %4178 = vmatpush1.bf16.msra.mxu0 %v4051
        %4179 = vmatprep.subr.bf16.mxu0 0
        %4180 = vmatpush1.bf16.msra.mxu0 %v4052
        %4181 = vmatprep.subr.bf16.mxu0 0
        %4182 = vmatpush1.bf16.msra.mxu0 %v4053
        %4183 = vmatprep.subr.bf16.mxu0 0
        %4184 = vmatpush1.bf16.msra.mxu0 %v4054
        %4185 = vmatprep.subr.bf16.mxu0 0
        %4186 = vmatpush1.bf16.msra.mxu0 %v4055
        %4187 = vmatprep.subr.bf16.mxu0 0
        %4188 = vmatpush1.bf16.msra.mxu0 %v4056
        %4189 = vmatprep.subr.bf16.mxu0 0
        %4190 = vmatpush1.bf16.msra.mxu0 %v4057
        %4191 = vmatprep.subr.bf16.mxu0 0
        %4192 = vmatpush1.bf16.msra.mxu0 %v4058
        %4193 = vmatprep.subr.bf16.mxu0 0
        %4194 = vmatpush1.bf16.msra.mxu0 %v4059
        %4195 = vmatprep.subr.bf16.mxu0 0
        %4196 = vmatpush1.bf16.msra.mxu0 %v4060
        %4197 = vmatprep.mubr.bf16.mxu0 %v277
        %4198 = vmatmul.mubr.bf16.gmra.mrb[0].mxu0 %v276
        %v4199 = vpop.f32.mrb[0].mxu0
        %v4200 = vadd.f32 %v4160, %v4199
        %v4201 = vpop.f32.mrb[0].mxu0
        %v4202 = vpop.f32.mrb[0].mxu0
        %v4203 = vpop.f32.mrb[0].mxu0
        %4204 = vdwg.mxu0
        %4205 = vmatprep.subr.bf16.mxu0 0
        %4206 = vmatpush1.bf16.msra.mxu0 %v4061
        %4207 = vmatprep.subr.bf16.mxu0 0
        %4208 = vmatpush1.bf16.msra.mxu0 %v4062
        %4209 = vmatprep.subr.bf16.mxu0 0
        %4210 = vmatpush1.bf16.msra.mxu0 %v4063
        %4211 = vmatprep.subr.bf16.mxu0 0
        %4212 = vmatpush1.bf16.msra.mxu0 %v4064
        %4213 = vmatprep.subr.bf16.mxu0 0
        %4214 = vmatpush1.bf16.msra.mxu0 %v4065
        %4215 = vmatprep.subr.bf16.mxu0 0
        %4216 = vmatpush1.bf16.msra.mxu0 %v4066
        %4217 = vmatprep.subr.bf16.mxu0 0
        %4218 = vmatpush1.bf16.msra.mxu0 %v4067
        %4219 = vmatprep.subr.bf16.mxu0 0
        %4220 = vmatpush1.bf16.msra.mxu0 %v4068
        %4221 = vmatprep.subr.bf16.mxu0 0
        %4222 = vmatpush1.bf16.msra.mxu0 %v4069
        %4223 = vmatprep.subr.bf16.mxu0 0
        %4224 = vmatpush1.bf16.msra.mxu0 %v4070
        %4225 = vmatprep.subr.bf16.mxu0 0
        %4226 = vmatpush1.bf16.msra.mxu0 %v4071
        %4227 = vmatprep.subr.bf16.mxu0 0
        %4228 = vmatpush1.bf16.msra.mxu0 %v4072
        %4229 = vmatprep.subr.bf16.mxu0 0
        %4230 = vmatpush1.bf16.msra.mxu0 %v4073
        %4231 = vmatprep.subr.bf16.mxu0 0
        %4232 = vmatpush1.bf16.msra.mxu0 %v4074
        %4233 = vmatprep.subr.bf16.mxu0 0
        %4234 = vmatpush1.bf16.msra.mxu0 %v4075
        %4235 = vmatprep.subr.bf16.mxu0 0
        %4236 = vmatpush1.bf16.msra.mxu0 %v4076
        %4237 = vmatprep.mubr.bf16.mxu0 %v279
        %4238 = vmatmul.mubr.bf16.gmra.mrb[0].mxu0 %v278
        %v4239 = vpop.f32.mrb[0].mxu0
        %v4240 = vadd.f32 %v4200, %v4239
        %v4241 = vpop.f32.mrb[0].mxu0
        %v4242 = vpop.f32.mrb[0].mxu0
        %v4243 = vpop.f32.mrb[0].mxu0
        %4244 = vdwg.mxu0
        %v4245 = vmax.f32 %v3735, %v4240
        %s4246 = scalar_lea.vmem %s2, 1
        %v4247 = vld [vmem:[%s4246] sm:$0x1]
        %v4249 = vlaneseq
        %v4250 = vshrl.u32 %v4249, 7
        %v4251 = vsub.s32 0, %v4250
        %v4252 = vrot.slane %v4247, %v4251
        %v4254 = vadd.f32 %v4245, %v4252
        %v4255 = vmax.f32 %v4254, 0.0
        %s4256 = scalar_lea.vmem %s159, 8 [#allocation2]
        %4257 = vst.msk [vmem:[%s4256] sm:$0xff] %vm3233, %v4255
        %s4258 = scalar_lea.vmem %s1, 3072
        %v4259 = vld [vmem:[%s4258] sm:$0xf]
        %v4260 = vld [vmem:[%s4258 + $0x4] sm:$0xf]
        %v4261 = vld [vmem:[%s4258 + $0x8] sm:$0xf]
        %v4262 = vld [vmem:[%s4258 + $0xc] sm:$0xf]
        %v4263 = vld [vmem:[%s4258 + $0x10] sm:$0xf]
        %v4264 = vld [vmem:[%s4258 + $0x14] sm:$0xf]
        %v4265 = vld [vmem:[%s4258 + $0x18] sm:$0xf]
        %v4266 = vld [vmem:[%s4258 + $0x1c] sm:$0xf]
        %v4267 = vld [vmem:[%s4258 + $0x20] sm:$0xf]
        %v4268 = vld [vmem:[%s4258 + $0x24] sm:$0xf]
        %v4269 = vld [vmem:[%s4258 + $0x28] sm:$0xf]
        %v4270 = vld [vmem:[%s4258 + $0x2c] sm:$0xf]
        %v4271 = vld [vmem:[%s4258 + $0x30] sm:$0xf]
        %v4272 = vld [vmem:[%s4258 + $0x34] sm:$0xf]
        %v4273 = vld [vmem:[%s4258 + $0x38] sm:$0xf]
        %v4274 = vld [vmem:[%s4258 + $0x3c] sm:$0xf]
        %v4275 = vld [vmem:[%s4258 + $0x40] sm:$0xf]
        %v4276 = vld [vmem:[%s4258 + $0x44] sm:$0xf]
        %v4277 = vld [vmem:[%s4258 + $0x48] sm:$0xf]
        %v4278 = vld [vmem:[%s4258 + $0x4c] sm:$0xf]
        %v4279 = vld [vmem:[%s4258 + $0x50] sm:$0xf]
        %v4280 = vld [vmem:[%s4258 + $0x54] sm:$0xf]
        %v4281 = vld [vmem:[%s4258 + $0x58] sm:$0xf]
        %v4282 = vld [vmem:[%s4258 + $0x5c] sm:$0xf]
        %v4283 = vld [vmem:[%s4258 + $0x60] sm:$0xf]
        %v4284 = vld [vmem:[%s4258 + $0x64] sm:$0xf]
        %v4285 = vld [vmem:[%s4258 + $0x68] sm:$0xf]
        %v4286 = vld [vmem:[%s4258 + $0x6c] sm:$0xf]
        %v4287 = vld [vmem:[%s4258 + $0x70] sm:$0xf]
        %v4288 = vld [vmem:[%s4258 + $0x74] sm:$0xf]
        %v4289 = vld [vmem:[%s4258 + $0x78] sm:$0xf]
        %v4290 = vld [vmem:[%s4258 + $0x7c] sm:$0xf]
        %v4291 = vld [vmem:[%s4258 + $0x80] sm:$0xf]
        %v4292 = vld [vmem:[%s4258 + $0x84] sm:$0xf]
        %v4293 = vld [vmem:[%s4258 + $0x88] sm:$0xf]
        %v4294 = vld [vmem:[%s4258 + $0x8c] sm:$0xf]
        %v4295 = vld [vmem:[%s4258 + $0x90] sm:$0xf]
        %v4296 = vld [vmem:[%s4258 + $0x94] sm:$0xf]
        %v4297 = vld [vmem:[%s4258 + $0x98] sm:$0xf]
        %v4298 = vld [vmem:[%s4258 + $0x9c] sm:$0xf]
        %v4299 = vld [vmem:[%s4258 + $0xa0] sm:$0xf]
        %v4300 = vld [vmem:[%s4258 + $0xa4] sm:$0xf]
        %v4301 = vld [vmem:[%s4258 + $0xa8] sm:$0xf]
        %v4302 = vld [vmem:[%s4258 + $0xac] sm:$0xf]
        %v4303 = vld [vmem:[%s4258 + $0xb0] sm:$0xf]
        %v4304 = vld [vmem:[%s4258 + $0xb4] sm:$0xf]
        %v4305 = vld [vmem:[%s4258 + $0xb8] sm:$0xf]
        %v4306 = vld [vmem:[%s4258 + $0xbc] sm:$0xf]
        %v4307 = vld [vmem:[%s4258 + $0xc0] sm:$0xf]
        %v4308 = vld [vmem:[%s4258 + $0xc4] sm:$0xf]
        %v4309 = vld [vmem:[%s4258 + $0xc8] sm:$0xf]
        %v4310 = vld [vmem:[%s4258 + $0xcc] sm:$0xf]
        %v4311 = vld [vmem:[%s4258 + $0xd0] sm:$0xf]
        %v4312 = vld [vmem:[%s4258 + $0xd4] sm:$0xf]
        %v4313 = vld [vmem:[%s4258 + $0xd8] sm:$0xf]
        %v4314 = vld [vmem:[%s4258 + $0xdc] sm:$0xf]
        %v4315 = vld [vmem:[%s4258 + $0xe0] sm:$0xf]
        %v4316 = vld [vmem:[%s4258 + $0xe4] sm:$0xf]
        %v4317 = vld [vmem:[%s4258 + $0xe8] sm:$0xf]
        %v4318 = vld [vmem:[%s4258 + $0xec] sm:$0xf]
        %v4319 = vld [vmem:[%s4258 + $0xf0] sm:$0xf]
        %v4320 = vld [vmem:[%s4258 + $0xf4] sm:$0xf]
        %v4321 = vld [vmem:[%s4258 + $0xf8] sm:$0xf]
        %v4322 = vld [vmem:[%s4258 + $0xfc] sm:$0xf]
        %v4323 = vld [vmem:[%s4258 + $0x100] sm:$0xf]
        %v4324 = vld [vmem:[%s4258 + $0x104] sm:$0xf]
        %v4325 = vld [vmem:[%s4258 + $0x108] sm:$0xf]
        %v4326 = vld [vmem:[%s4258 + $0x10c] sm:$0xf]
        %v4327 = vld [vmem:[%s4258 + $0x110] sm:$0xf]
        %v4328 = vld [vmem:[%s4258 + $0x114] sm:$0xf]
        %v4329 = vld [vmem:[%s4258 + $0x118] sm:$0xf]
        %v4330 = vld [vmem:[%s4258 + $0x11c] sm:$0xf]
        %v4331 = vld [vmem:[%s4258 + $0x120] sm:$0xf]
        %v4332 = vld [vmem:[%s4258 + $0x124] sm:$0xf]
        %v4333 = vld [vmem:[%s4258 + $0x128] sm:$0xf]
        %v4334 = vld [vmem:[%s4258 + $0x12c] sm:$0xf]
        %v4335 = vld [vmem:[%s4258 + $0x130] sm:$0xf]
        %v4336 = vld [vmem:[%s4258 + $0x134] sm:$0xf]
        %v4337 = vld [vmem:[%s4258 + $0x138] sm:$0xf]
        %v4338 = vld [vmem:[%s4258 + $0x13c] sm:$0xf]
        %v4339 = vld [vmem:[%s4258 + $0x140] sm:$0xf]
        %v4340 = vld [vmem:[%s4258 + $0x144] sm:$0xf]
        %v4341 = vld [vmem:[%s4258 + $0x148] sm:$0xf]
        %v4342 = vld [vmem:[%s4258 + $0x14c] sm:$0xf]
        %v4343 = vld [vmem:[%s4258 + $0x150] sm:$0xf]
        %v4344 = vld [vmem:[%s4258 + $0x154] sm:$0xf]
        %v4345 = vld [vmem:[%s4258 + $0x158] sm:$0xf]
        %v4346 = vld [vmem:[%s4258 + $0x15c] sm:$0xf]
        %v4347 = vld [vmem:[%s4258 + $0x160] sm:$0xf]
        %v4348 = vld [vmem:[%s4258 + $0x164] sm:$0xf]
        %v4349 = vld [vmem:[%s4258 + $0x168] sm:$0xf]
        %v4350 = vld [vmem:[%s4258 + $0x16c] sm:$0xf]
        %v4351 = vld [vmem:[%s4258 + $0x170] sm:$0xf]
        %v4352 = vld [vmem:[%s4258 + $0x174] sm:$0xf]
        %v4353 = vld [vmem:[%s4258 + $0x178] sm:$0xf]
        %v4354 = vld [vmem:[%s4258 + $0x17c] sm:$0xf]
        %s4355 = scalar_lea.vmem %s2, 2
        %v4356 = vld [vmem:[%s4355] sm:$0x1]
        %v4358 = vlaneseq
        %v4359 = vshrl.u32 %v4358, 7
        %v4360 = vsub.s32 0, %v4359
        %v4361 = vrot.slane %v4356, %v4360
        %v4459 = vunpack.c.l.b16 %v4259
        %v4460 = vunpack.c.l.b16 %v4260
        %v4461 = vunpack.c.l.b16 %v4261
        %v4462 = vunpack.c.l.b16 %v4262
        %v4463 = vunpack.c.l.b16 %v4263
        %v4464 = vunpack.c.l.b16 %v4264
        %v4465 = vunpack.c.l.b16 %v4265
        %v4466 = vunpack.c.l.b16 %v4266
        %v4467 = vunpack.c.l.b16 %v4267
        %v4468 = vunpack.c.l.b16 %v4268
        %v4469 = vunpack.c.l.b16 %v4269
        %v4470 = vunpack.c.l.b16 %v4270
        %v4471 = vunpack.c.l.b16 %v4271
        %v4472 = vunpack.c.l.b16 %v4272
        %v4473 = vunpack.c.l.b16 %v4273
        %v4474 = vunpack.c.l.b16 %v4274
        %v4475 = vunpack.c.l.b16 %v4275
        %v4476 = vunpack.c.l.b16 %v4276
        %v4477 = vunpack.c.l.b16 %v4277
        %v4478 = vunpack.c.l.b16 %v4278
        %v4479 = vunpack.c.l.b16 %v4279
        %v4480 = vunpack.c.l.b16 %v4280
        %v4481 = vunpack.c.l.b16 %v4281
        %v4482 = vunpack.c.l.b16 %v4282
        %v4483 = vunpack.c.l.b16 %v4283
        %v4484 = vunpack.c.l.b16 %v4284
        %v4485 = vunpack.c.l.b16 %v4285
        %v4486 = vunpack.c.l.b16 %v4286
        %v4487 = vunpack.c.l.b16 %v4287
        %v4488 = vunpack.c.l.b16 %v4288
        %v4489 = vunpack.c.l.b16 %v4289
        %v4490 = vunpack.c.l.b16 %v4290
        %v4491 = vunpack.c.l.b16 %v4291
        %v4492 = vunpack.c.l.b16 %v4292
        %v4493 = vunpack.c.l.b16 %v4293
        %v4494 = vunpack.c.l.b16 %v4294
        %v4495 = vunpack.c.l.b16 %v4295
        %v4496 = vunpack.c.l.b16 %v4296
        %v4497 = vunpack.c.l.b16 %v4297
        %v4498 = vunpack.c.l.b16 %v4298
        %v4499 = vunpack.c.l.b16 %v4299
        %v4500 = vunpack.c.l.b16 %v4300
        %v4501 = vunpack.c.l.b16 %v4301
        %v4502 = vunpack.c.l.b16 %v4302
        %v4503 = vunpack.c.l.b16 %v4303
        %v4504 = vunpack.c.l.b16 %v4304
        %v4505 = vunpack.c.l.b16 %v4305
        %v4506 = vunpack.c.l.b16 %v4306
        %v4507 = vunpack.c.l.b16 %v4307
        %v4508 = vunpack.c.l.b16 %v4308
        %v4509 = vunpack.c.l.b16 %v4309
        %v4510 = vunpack.c.l.b16 %v4310
        %v4511 = vunpack.c.l.b16 %v4311
        %v4512 = vunpack.c.l.b16 %v4312
        %v4513 = vunpack.c.l.b16 %v4313
        %v4514 = vunpack.c.l.b16 %v4314
        %v4515 = vunpack.c.l.b16 %v4315
        %v4516 = vunpack.c.l.b16 %v4316
        %v4517 = vunpack.c.l.b16 %v4317
        %v4518 = vunpack.c.l.b16 %v4318
        %v4519 = vunpack.c.l.b16 %v4319
        %v4520 = vunpack.c.l.b16 %v4320
        %v4521 = vunpack.c.l.b16 %v4321
        %v4522 = vunpack.c.l.b16 %v4322
        %v4523 = vunpack.c.l.b16 %v4323
        %v4524 = vunpack.c.l.b16 %v4324
        %v4525 = vunpack.c.l.b16 %v4325
        %v4526 = vunpack.c.l.b16 %v4326
        %v4527 = vunpack.c.l.b16 %v4327
        %v4528 = vunpack.c.l.b16 %v4328
        %v4529 = vunpack.c.l.b16 %v4329
        %v4530 = vunpack.c.l.b16 %v4330
        %v4531 = vunpack.c.l.b16 %v4331
        %v4532 = vunpack.c.l.b16 %v4332
        %v4533 = vunpack.c.l.b16 %v4333
        %v4534 = vunpack.c.l.b16 %v4334
        %v4535 = vunpack.c.l.b16 %v4335
        %v4536 = vunpack.c.l.b16 %v4336
        %v4537 = vunpack.c.l.b16 %v4337
        %v4538 = vunpack.c.l.b16 %v4338
        %v4539 = vunpack.c.l.b16 %v4339
        %v4540 = vunpack.c.l.b16 %v4340
        %v4541 = vunpack.c.l.b16 %v4341
        %v4542 = vunpack.c.l.b16 %v4342
        %v4543 = vunpack.c.l.b16 %v4343
        %v4544 = vunpack.c.l.b16 %v4344
        %v4545 = vunpack.c.l.b16 %v4345
        %v4546 = vunpack.c.l.b16 %v4346
        %v4547 = vunpack.c.l.b16 %v4347
        %v4548 = vunpack.c.l.b16 %v4348
        %v4549 = vunpack.c.l.b16 %v4349
        %v4550 = vunpack.c.l.b16 %v4350
        %v4551 = vunpack.c.l.b16 %v4351
        %v4552 = vunpack.c.l.b16 %v4352
        %v4553 = vunpack.c.l.b16 %v4353
        %v4554 = vunpack.c.l.b16 %v4354
        %v4555 = vpack.c.b16 %v4460, %v4459
        %v4556 = vpack.c.b16 %v4462, %v4461
        %v4557 = vpack.c.b16 %v4464, %v4463
        %v4558 = vpack.c.b16 %v4466, %v4465
        %v4559 = vpack.c.b16 %v4468, %v4467
        %v4560 = vpack.c.b16 %v4470, %v4469
        %v4561 = vpack.c.b16 %v4472, %v4471
        %v4562 = vpack.c.b16 %v4474, %v4473
        %v4563 = vpack.c.b16 %v4476, %v4475
        %v4564 = vpack.c.b16 %v4478, %v4477
        %v4565 = vpack.c.b16 %v4480, %v4479
        %v4566 = vpack.c.b16 %v4482, %v4481
        %v4567 = vpack.c.b16 %v4484, %v4483
        %v4568 = vpack.c.b16 %v4486, %v4485
        %v4569 = vpack.c.b16 %v4488, %v4487
        %v4570 = vpack.c.b16 %v4490, %v4489
        %v4571 = vpack.c.b16 %v4492, %v4491
        %v4572 = vpack.c.b16 %v4494, %v4493
        %v4573 = vpack.c.b16 %v4496, %v4495
        %v4574 = vpack.c.b16 %v4498, %v4497
        %v4575 = vpack.c.b16 %v4500, %v4499
        %v4576 = vpack.c.b16 %v4502, %v4501
        %v4577 = vpack.c.b16 %v4504, %v4503
        %v4578 = vpack.c.b16 %v4506, %v4505
        %v4579 = vpack.c.b16 %v4508, %v4507
        %v4580 = vpack.c.b16 %v4510, %v4509
        %v4581 = vpack.c.b16 %v4512, %v4511
        %v4582 = vpack.c.b16 %v4514, %v4513
        %v4583 = vpack.c.b16 %v4516, %v4515
        %v4584 = vpack.c.b16 %v4518, %v4517
        %v4585 = vpack.c.b16 %v4520, %v4519
        %v4586 = vpack.c.b16 %v4522, %v4521
        %v4587 = vpack.c.b16 %v4524, %v4523
        %v4588 = vpack.c.b16 %v4526, %v4525
        %v4589 = vpack.c.b16 %v4528, %v4527
        %v4590 = vpack.c.b16 %v4530, %v4529
        %v4591 = vpack.c.b16 %v4532, %v4531
        %v4592 = vpack.c.b16 %v4534, %v4533
        %v4593 = vpack.c.b16 %v4536, %v4535
        %v4594 = vpack.c.b16 %v4538, %v4537
        %v4595 = vpack.c.b16 %v4540, %v4539
        %v4596 = vpack.c.b16 %v4542, %v4541
        %v4597 = vpack.c.b16 %v4544, %v4543
        %v4598 = vpack.c.b16 %v4546, %v4545
        %v4599 = vpack.c.b16 %v4548, %v4547
        %v4600 = vpack.c.b16 %v4550, %v4549
        %v4601 = vpack.c.b16 %v4552, %v4551
        %v4602 = vpack.c.b16 %v4554, %v4553
        %4651 = vmatprep.subr.bf16.mxu0 0
        %4652 = vmatpush1.bf16.msra.mxu0 %v4555
        %4653 = vmatprep.subr.bf16.mxu0 0
        %4654 = vmatpush1.bf16.msra.mxu0 %v4556
        %4655 = vmatprep.subr.bf16.mxu0 0
        %4656 = vmatpush1.bf16.msra.mxu0 %v4557
        %4657 = vmatprep.subr.bf16.mxu0 0
        %4658 = vmatpush1.bf16.msra.mxu0 %v4558
        %4659 = vmatprep.subr.bf16.mxu0 0
        %4660 = vmatpush1.bf16.msra.mxu0 %v4559
        %4661 = vmatprep.subr.bf16.mxu0 0
        %4662 = vmatpush1.bf16.msra.mxu0 %v4560
        %4663 = vmatprep.subr.bf16.mxu0 0
        %4664 = vmatpush1.bf16.msra.mxu0 %v4561
        %4665 = vmatprep.subr.bf16.mxu0 0
        %4666 = vmatpush1.bf16.msra.mxu0 %v4562
        %4667 = vmatprep.subr.bf16.mxu0 0
        %4668 = vmatpush1.bf16.msra.mxu0 %v4563
        %4669 = vmatprep.subr.bf16.mxu0 0
        %4670 = vmatpush1.bf16.msra.mxu0 %v4564
        %4671 = vmatprep.subr.bf16.mxu0 0
        %4672 = vmatpush1.bf16.msra.mxu0 %v4565
        %4673 = vmatprep.subr.bf16.mxu0 0
        %4674 = vmatpush1.bf16.msra.mxu0 %v4566
        %4675 = vmatprep.subr.bf16.mxu0 0
        %4676 = vmatpush1.bf16.msra.mxu0 %v4567
        %4677 = vmatprep.subr.bf16.mxu0 0
        %4678 = vmatpush1.bf16.msra.mxu0 %v4568
        %4679 = vmatprep.subr.bf16.mxu0 0
        %4680 = vmatpush1.bf16.msra.mxu0 %v4569
        %4681 = vmatprep.subr.bf16.mxu0 0
        %4682 = vmatpush1.bf16.msra.mxu0 %v4570
        %4683 = vmatprep.mubr.bf16.mxu0 %v275
        %4684 = vmatmul.mubr.bf16.gmra.mrb[0].mxu0 %v274
        %v4685 = vpop.f32.mrb[0].mxu0
        %v4686 = vadd.f32 %v4361, %v4685
        %v4687 = vpop.f32.mrb[0].mxu0
        %v4688 = vpop.f32.mrb[0].mxu0
        %v4689 = vpop.f32.mrb[0].mxu0
        %4690 = vdwg.mxu0
        %4691 = vmatprep.subr.bf16.mxu0 0
        %4692 = vmatpush1.bf16.msra.mxu0 %v4571
        %4693 = vmatprep.subr.bf16.mxu0 0
        %4694 = vmatpush1.bf16.msra.mxu0 %v4572
        %4695 = vmatprep.subr.bf16.mxu0 0
        %4696 = vmatpush1.bf16.msra.mxu0 %v4573
        %4697 = vmatprep.subr.bf16.mxu0 0
        %4698 = vmatpush1.bf16.msra.mxu0 %v4574
        %4699 = vmatprep.subr.bf16.mxu0 0
        %4700 = vmatpush1.bf16.msra.mxu0 %v4575
        %4701 = vmatprep.subr.bf16.mxu0 0
        %4702 = vmatpush1.bf16.msra.mxu0 %v4576
        %4703 = vmatprep.subr.bf16.mxu0 0
        %4704 = vmatpush1.bf16.msra.mxu0 %v4577
        %4705 = vmatprep.subr.bf16.mxu0 0
        %4706 = vmatpush1.bf16.msra.mxu0 %v4578
        %4707 = vmatprep.subr.bf16.mxu0 0
        %4708 = vmatpush1.bf16.msra.mxu0 %v4579
        %4709 = vmatprep.subr.bf16.mxu0 0
        %4710 = vmatpush1.bf16.msra.mxu0 %v4580
        %4711 = vmatprep.subr.bf16.mxu0 0
        %4712 = vmatpush1.bf16.msra.mxu0 %v4581
        %4713 = vmatprep.subr.bf16.mxu0 0
        %4714 = vmatpush1.bf16.msra.mxu0 %v4582
        %4715 = vmatprep.subr.bf16.mxu0 0
        %4716 = vmatpush1.bf16.msra.mxu0 %v4583
        %4717 = vmatprep.subr.bf16.mxu0 0
        %4718 = vmatpush1.bf16.msra.mxu0 %v4584
        %4719 = vmatprep.subr.bf16.mxu0 0
        %4720 = vmatpush1.bf16.msra.mxu0 %v4585
        %4721 = vmatprep.subr.bf16.mxu0 0
        %4722 = vmatpush1.bf16.msra.mxu0 %v4586
        %4723 = vmatprep.mubr.bf16.mxu0 %v277
        %4724 = vmatmul.mubr.bf16.gmra.mrb[0].mxu0 %v276
        %v4725 = vpop.f32.mrb[0].mxu0
        %v4726 = vadd.f32 %v4686, %v4725
        %v4727 = vpop.f32.mrb[0].mxu0
        %v4728 = vpop.f32.mrb[0].mxu0
        %v4729 = vpop.f32.mrb[0].mxu0
        %4730 = vdwg.mxu0
        %4731 = vmatprep.subr.bf16.mxu0 0
        %4732 = vmatpush1.bf16.msra.mxu0 %v4587
        %4733 = vmatprep.subr.bf16.mxu0 0
        %4734 = vmatpush1.bf16.msra.mxu0 %v4588
        %4735 = vmatprep.subr.bf16.mxu0 0
        %4736 = vmatpush1.bf16.msra.mxu0 %v4589
        %4737 = vmatprep.subr.bf16.mxu0 0
        %4738 = vmatpush1.bf16.msra.mxu0 %v4590
        %4739 = vmatprep.subr.bf16.mxu0 0
        %4740 = vmatpush1.bf16.msra.mxu0 %v4591
        %4741 = vmatprep.subr.bf16.mxu0 0
        %4742 = vmatpush1.bf16.msra.mxu0 %v4592
        %4743 = vmatprep.subr.bf16.mxu0 0
        %4744 = vmatpush1.bf16.msra.mxu0 %v4593
        %4745 = vmatprep.subr.bf16.mxu0 0
        %4746 = vmatpush1.bf16.msra.mxu0 %v4594
        %4747 = vmatprep.subr.bf16.mxu0 0
        %4748 = vmatpush1.bf16.msra.mxu0 %v4595
        %4749 = vmatprep.subr.bf16.mxu0 0
        %4750 = vmatpush1.bf16.msra.mxu0 %v4596
        %4751 = vmatprep.subr.bf16.mxu0 0
        %4752 = vmatpush1.bf16.msra.mxu0 %v4597
        %4753 = vmatprep.subr.bf16.mxu0 0
        %4754 = vmatpush1.bf16.msra.mxu0 %v4598
        %4755 = vmatprep.subr.bf16.mxu0 0
        %4756 = vmatpush1.bf16.msra.mxu0 %v4599
        %4757 = vmatprep.subr.bf16.mxu0 0
        %4758 = vmatpush1.bf16.msra.mxu0 %v4600
        %4759 = vmatprep.subr.bf16.mxu0 0
        %4760 = vmatpush1.bf16.msra.mxu0 %v4601
        %4761 = vmatprep.subr.bf16.mxu0 0
        %4762 = vmatpush1.bf16.msra.mxu0 %v4602
        %4763 = vmatprep.mubr.bf16.mxu0 %v279
        %4764 = vmatmul.mubr.bf16.gmra.mrb[0].mxu0 %v278
        %v4765 = vpop.f32.mrb[0].mxu0
        %v4766 = vadd.f32 %v4726, %v4765
        %v4767 = vpop.f32.mrb[0].mxu0
        %v4768 = vpop.f32.mrb[0].mxu0
        %v4769 = vpop.f32.mrb[0].mxu0
        %4770 = vdwg.mxu0
        %v4771 = vmax.f32 %v4766, 0.0
        %s4772 = scalar_lea.vmem %s159, 16 [#allocation2]
        %4773 = vst.msk [vmem:[%s4772] sm:$0xff] %vm3233, %v4771
        %s4774 = sand.u32 %s90, 1
        %s4775 = sand.u32 %s90, 1
        %s4776 = smul.addr %s4775, 24
        %s4777 = scalar_lea.vmem [#allocation2], %s4776
        // Predicated region
        $region33: #{special_block_a.1} parent=31 // pred_check
          %p4778 = pneg %p100
        $region34: #{special_block_a.1} parent=31 // pred_check_branch
          %4780 = sbr.rel (%p4778) target = $region36
        $region35: #{special_block_a.1} parent=31 // pred_region
          %s4781 = smul.addr %s14, 8
          %s4782 = scalar_lea.vmem %s3, %s4781
          // Predicated region
          $region37: #{special_block_a.1} parent=35 // pred_check
            _
          $region38: #{special_block_a.1} parent=35 // pred_check_branch
            %4784 = sbr.rel (0) target = $region40
          $region39: #{special_block_a.1} parent=35 // pred_region
            // Predicated region
            $region41: #{special_block_a.1} parent=39 // pred_check
              _
            $region42: #{special_block_a.1} parent=39 // pred_check_branch
              %4786 = sbr.rel (0) target = $region44
            $region43: #{special_block_a.1} parent=39 // pred_region
              // Predicated region
              $region56: #{special_block_a.1} parent=43 // pred_check
                _
              $region57: #{special_block_a.1} parent=43 // pred_check_branch
                %4805 = sbr.rel (0) target = $region59
              $region58: #{special_block_a.1} parent=43 // pred_region
                loop: start=0, step=1, limit=1
                $region60: #{special_block_a.1} parent=58 // loop_pre_header
                  _
                $region61: #{special_block_a.1} parent=58 // loop_header
                  %s4807 = sphi 0, %s4811
                  %p4808 = scmp.ge.s32.totalorder %s4807, 1
                  %s4812 = sphi %s4777, %s4777
                  %s4813 = sphi %s4782, %s4782
                $region62: #{special_block_a.1} parent=58 // loop_header_branch
                  %4810 = sbr.rel (%p4808) target = $region66
                $region63: #{special_block_a.1} parent=58 // loop_body
                  %v4814 = vld [vmem:[%s4812] sm:$0xff]
                  %4815 = vst [vmem:[%s4813] sm:$0xff] %v4814
                  %v4816 = vld [vmem:[%s4812 + $0x8] sm:$0xff]
                  %4817 = vst [vmem:[%s4813 + $0x20] sm:$0xff] %v4816
                  %v4818 = vld [vmem:[%s4812 + $0x10] sm:$0xff]
                  %4819 = vst [vmem:[%s4813 + $0x40] sm:$0xff] %v4818
                $region64: #{special_block_a.1} parent=58 // loop_footer
                  %s4811 = sadd.s32 1, %s4807
                $region65: #{special_block_a.1} parent=58 // loop_footer_branch
                  %4806 = sbr.rel target = $region61
                $region66: #{special_block_a.1} parent=58 // loop_exit
                  _
              $region59: #{special_block_a.1} parent=43 // pred_fallthru
                _
              // Predicated region
              $region67: #{special_block_a.1} parent=43 // pred_check
                _
              $region68: #{special_block_a.1} parent=43 // pred_check_branch
                %4821 = sbr.rel target = $region70
              $region69: #{special_block_a.1} parent=43 // pred_region
                _
              $region70: #{special_block_a.1} parent=43 // pred_fallthru
                _
            $region44: #{special_block_a.1} parent=39 // pred_fallthru
              _
            // Predicated region
            $region45: #{special_block_a.1} parent=39 // pred_check
              _
            $region46: #{special_block_a.1} parent=39 // pred_check_branch
              %4788 = sbr.rel target = $region48
            $region47: #{special_block_a.1} parent=39 // pred_region
              loop: start=0, step=1, limit=1
              $region49: #{special_block_a.1} parent=47 // loop_pre_header
                _
              $region50: #{special_block_a.1} parent=47 // loop_header
                %s4791 = sphi 0, %s4795
                %p4792 = scmp.ge.s32.totalorder %s4791, 1
                %s4796 = sphi %s4777, %s4777
                %s4797 = sphi %s4782, %s4782
              $region51: #{special_block_a.1} parent=47 // loop_header_branch
                %4794 = sbr.rel (%p4792) target = $region55
              $region52: #{special_block_a.1} parent=47 // loop_body
                %v4798 = vld [vmem:[%s4796] sm:$0xff]
                %4799 = vst [vmem:[%s4797] sm:$0xff] %v4798
                %v4800 = vld [vmem:[%s4796 + $0x8] sm:$0xff]
                %4801 = vst [vmem:[%s4797 + $0x20] sm:$0xff] %v4800
                %v4802 = vld [vmem:[%s4796 + $0x10] sm:$0xff]
                %4803 = vst [vmem:[%s4797 + $0x40] sm:$0xff] %v4802
              $region53: #{special_block_a.1} parent=47 // loop_footer
                %s4795 = sadd.s32 1, %s4791
              $region54: #{special_block_a.1} parent=47 // loop_footer_branch
                %4790 = sbr.rel target = $region50
              $region55: #{special_block_a.1} parent=47 // loop_exit
                _
            $region48: #{special_block_a.1} parent=39 // pred_fallthru
              _
          $region40: #{special_block_a.1} parent=35 // pred_fallthru
            _
          %4822 = vnop
        $region36: #{special_block_a.1} parent=31 // pred_fallthru
          _
      $region32: #{special_block_a.1} parent=5 // pred_fallthru
        _
      %p4823 = scmp.le.s32.totalorder 2, %s9
      // Predicated region
      $region71: #{special_block_a.1} parent=5 // pred_check
        %p4824 = pneg %p4823
      $region72: #{special_block_a.1} parent=5 // pred_check_branch
        %4826 = sbr.rel (%p4824) target = $region74
      $region73: #{special_block_a.1} parent=5 // pred_region
        %s4827 = ssub.s32 %s9, 2
        // Predicated region
        $region75: #{special_block_a.1} parent=73 // pred_check
          %p4828 = pneg %p106
        $region76: #{special_block_a.1} parent=73 // pred_check_branch
          %4830 = sbr.rel (%p4828) target = $region78
        $region77: #{special_block_a.1} parent=73 // pred_region
          %s4831 = sand.u32 %s91, 1
          %s4832 = sand.u32 %s91, 1
          %s4833 = smul.addr %s4832, 24
          %s4834 = scalar_lea.vmem [#allocation2], %s4833
        $region78: #{special_block_a.1} parent=73 // pred_fallthru
          _
      $region74: #{special_block_a.1} parent=5 // pred_fallthru
        _
    $region6: #{special_block_a.1} parent=1 // loop_footer
      %s13 = sadd.s32 1, %s9
    $region7: #{special_block_a.1} parent=1 // loop_footer_branch
      %8 = sbr.rel target = $region3
    $region8: #{special_block_a.1} parent=1 // loop_exit
      _

</llo_original>
